<compile_context>
chip_gen: v6e
topology: v6e:2x2x1
jax: 0.10.0
libtpu: 0.0.40
codegen_flags: <defaults>
</compile_context>

<pallas_src>
import functools

import jax
import jax.numpy as jnp
from jax.experimental import pallas as pl
from jax.experimental.pallas import tpu as pltpu

# ---------------------------------------------------------------------------
# Model hyper-parameters (match the nn.Module defaults)
# ---------------------------------------------------------------------------
NODE_CLASSES = [3, 5, 4, 2]          # per-node categorical sizes
NUM_NODES = len(NODE_CLASSES)
EMBEDDING_DIM = 16
HIDDEN_DIM = 32
HEADS = 8
NUM_LAYERS = 2
HID = HIDDEN_DIM * HEADS             # 256
LN_EPS = 1e-5
OUT_PAD = 128                        # lane-padded width of fused output heads
FFN_PAD = 128                        # FFN hidden dim (32) padded to a lane tile
SMALL_W = 256                        # width of the small-parameter slab
ATTN_SCALE = 1.0 / (HIDDEN_DIM ** 0.5)

# ---- packed slab layouts (static column offsets) --------------------------
# W16  bf16 (EMBEDDING_DIM, 5*HID):   [wqkv0 | wskip0 | wres0]
# W256 bf16 (HID, W256_COLS):
#   per layer li>=1 : [wqkv | wskip | wres]      (5*HID cols each)
#   final conv      : [wqkv_f | wskip_f]         (4*HID cols)
#   fused out heads : w_head                     (OUT_PAD cols)
#   per layer       : wf1 (cols zero-padded)     (FFN_PAD cols each)
# W128 bf16 (FFN_PAD, NUM_LAYERS*HID): per-layer wf2 (rows zero-padded 32->128)
_LAYER_BLK = 5 * HID                             # 1280
_OFF_FIN = (NUM_LAYERS - 1) * _LAYER_BLK         # 1280
_OFF_HEAD = _OFF_FIN + 4 * HID                   # 2304
_OFF_WF1 = _OFF_HEAD + OUT_PAD                   # 2432
W256_COLS = _OFF_WF1 + NUM_LAYERS * FFN_PAD      # 2688

# small-parameter slab (f32, (SMALL_ROWS, SMALL_W)); one padded vector per row
_ROWS_PER_LAYER = 11   # bq bk bv bskip bres g_attn b_attn bf1 bf2 g_ffn b_ffn
SMALL_ROWS = NUM_LAYERS * _ROWS_PER_LAYER + 7    # + bq bk bv bskip g_fin b_fin b_head


# ---------------------------------------------------------------------------
# Single fused forward kernel (whole network in one pallas_call)
# ---------------------------------------------------------------------------
def _fused_forward_kernel(h_ref, bias_ref, edge_ref, small_ref,
                          w16_ref, w256_ref, w128_ref, out_ref, *, n):
    f32 = jnp.float32
    heads, ch, hid = HEADS, HIDDEN_DIM, HID

    h = h_ref[...]                         # (n, EMB) f32
    bias = bias_ref[...]                   # (heads*n, heads*n) f32 block-diag mask
    has_edge = edge_ref[...]               # (n, 1) f32
    small = small_ref[...]                 # (SMALL_ROWS, 256) f32
    # cast bf16 weight slabs to f32 once (compute stays f32; safe on v5e too)
    w16 = w16_ref[...].astype(f32)         # (EMB, 5*HID)
    w256 = w256_ref[...].astype(f32)       # (HID, W256_COLS)
    w128 = w128_ref[...].astype(f32)       # (FFN_PAD, NUM_LAYERS*HID)

    def layernorm(x, g, b):
        mu = jnp.mean(x, axis=-1, keepdims=True)
        var = jnp.mean(jnp.square(x - mu), axis=-1, keepdims=True)
        return (x - mu) * jax.lax.rsqrt(var + LN_EPS) * g + b

    def attention(x, wqkv, wskip, bq, bk, bv, bskip):
        """PyG TransformerConv(Din, ch, heads, concat=True, root_weight=True)."""
        # single lane-dense q|k|v projection (1/sqrt(ch) pre-folded into wq/bq)
        qkv = jnp.dot(x, wqkv, preferred_element_type=f32)          # (n, 3*hid)
        q = qkv[:, 0:hid] + bq
        k = qkv[:, hid:2 * hid] + bk
        v = qkv[:, 2 * hid:3 * hid] + bv

        # fold heads onto the sublane axis: (n, heads*ch) -> (heads*n, ch)
        def fold(t):
            return jnp.concatenate(
                [t[:, hh * ch:(hh + 1) * ch] for hh in range(heads)], axis=0)

        qf, kf, vf = fold(q), fold(k), fold(v)

        # one (heads*n, heads*n) score matmul; cross-head + non-edge entries are
        # masked to -1e30 by the precomputed block-diagonal bias.
        s = jnp.einsum('ic,jc->ij', qf, kf, preferred_element_type=f32) + bias
        m = jnp.max(s, axis=-1, keepdims=True)
        e = jnp.exp(s - m)                  # masked entries underflow to exactly 0
        alpha = e * pl.reciprocal(jnp.sum(e, axis=-1, keepdims=True), approx=True)
        of = jnp.dot(alpha, vf, preferred_element_type=f32)          # (heads*n, ch)

        # unfold back to (n, heads*ch) with a single lane concat (256-lane dense)
        agg = jnp.concatenate(
            [of[hh * n:(hh + 1) * n, :] for hh in range(heads)], axis=1)
        agg = agg * has_edge                # isolated nodes -> zero aggregated msg
        return agg + jnp.dot(x, wskip, preferred_element_type=f32) + bskip

    for li in range(NUM_LAYERS):
        r = li * _ROWS_PER_LAYER
        bq, bk, bv = small[r:r + 1, :], small[r + 1:r + 2, :], small[r + 2:r + 3, :]
        bskip, bres = small[r + 3:r + 4, :], small[r + 4:r + 5, :]
        g_a, b_a = small[r + 5:r + 6, :], small[r + 6:r + 7, :]
        bf1 = small[r + 7:r + 8, 0:FFN_PAD]
        bf2 = small[r + 8:r + 9, :]
        g_f, b_f = small[r + 9:r + 10, :], small[r + 10:r + 11, :]

        if li == 0:
            wqkv = w16[:, 0:3 * hid]
            wskip = w16[:, 3 * hid:4 * hid]
            wres = w16[:, 4 * hid:5 * hid]
        else:
            base = (li - 1) * _LAYER_BLK
            wqkv = w256[:, base:base + 3 * hid]
            wskip = w256[:, base + 3 * hid:base + 4 * hid]
            wres = w256[:, base + 4 * hid:base + 5 * hid]
        wf1 = w256[:, _OFF_WF1 + li * FFN_PAD:_OFF_WF1 + (li + 1) * FFN_PAD]
        wf2 = w128[:, li * hid:(li + 1) * hid]

        res = jnp.dot(h, wres, preferred_element_type=f32) + bres
        a = attention(h, wqkv, wskip, bq, bk, bv, bskip)
        # dropout p=0.0 -> identity
        h = layernorm(a + res, g_a, b_a)
        f = jnp.maximum(jnp.dot(h, wf1, preferred_element_type=f32) + bf1, 0.0)
        f = jnp.dot(f, wf2, preferred_element_type=f32) + bf2
        h = layernorm(f + h, g_f, b_f)

    r = NUM_LAYERS * _ROWS_PER_LAYER
    bq, bk, bv = small[r:r + 1, :], small[r + 1:r + 2, :], small[r + 2:r + 3, :]
    bskip = small[r + 3:r + 4, :]
    g_fin, b_fin = small[r + 4:r + 5, :], small[r + 5:r + 6, :]
    b_head = small[r + 6:r + 7, 0:OUT_PAD]
    wqkv_f = w256[:, _OFF_FIN:_OFF_FIN + 3 * hid]
    wskip_f = w256[:, _OFF_FIN + 3 * hid:_OFF_FIN + 4 * hid]
    w_head = w256[:, _OFF_HEAD:_OFF_HEAD + OUT_PAD]

    a = attention(h, wqkv_f, wskip_f, bq, bk, bv, bskip)
    h = jnp.maximum(layernorm(a, g_fin, b_fin), 0.0)
    # fused (lane-padded) per-node output heads; split per node outside
    out_ref[...] = jnp.dot(h, w_head, preferred_element_type=f32) + b_head


def _full_spec(a):
    nd = a.ndim
    return pl.BlockSpec(a.shape, lambda i, _nd=nd: (0,) * _nd)


# ---------------------------------------------------------------------------
# Parameter construction (deterministic, in-script) -> packed slabs
# ---------------------------------------------------------------------------
def _lin(key, din, dout):
    kw, kb = jax.random.split(key)
    return (0.05 * jax.random.normal(kw, (din, dout), jnp.float32),
            0.05 * jax.random.normal(kb, (dout,), jnp.float32))


def _conv(key, din):
    ks = jax.random.split(key, 4)
    qw, qb = _lin(ks[0], din, HID)
    kw_, kb_ = _lin(ks[1], din, HID)
    vw, vb = _lin(ks[2], din, HID)
    sw, sb = _lin(ks[3], din, HID)
    # fold the 1/sqrt(ch) attention scale into the query projection host-side
    return dict(wqkv=jnp.concatenate([qw * ATTN_SCALE, kw_, vw], axis=1),
                bq=qb * ATTN_SCALE, bk=kb_, bv=vb, wskip=sw, bskip=sb)


def _pad_row(v):
    v = jnp.asarray(v, jnp.float32).reshape(-1)
    return jnp.pad(v, (0, SMALL_W - v.shape[0]))


def init_params(key):
    keys = jax.random.split(key, 8)
    params = {}

    emb_keys = jax.random.split(keys[0], NUM_NODES)
    params["emb"] = [0.1 * jax.random.normal(emb_keys[i],
                                             (NODE_CLASSES[i] + 1, EMBEDDING_DIM),
                                             jnp.float32)
                     for i in range(NUM_NODES)]

    small_rows = []
    mid_cols, wf1_cols, wf2_cols = [], [], []
    w16 = None

    prev = EMBEDDING_DIM
    layer_keys = jax.random.split(keys[1], NUM_LAYERS)
    for li in range(NUM_LAYERS):
        lk = jax.random.split(layer_keys[li], 4)
        conv = _conv(lk[0], prev)
        res_w, res_b = _lin(lk[1], prev, HID)
        f1w, f1b = _lin(lk[2], HID, HIDDEN_DIM)
        f2w, f2b = _lin(lk[3], HIDDEN_DIM, HID)

        blk = jnp.concatenate([conv["wqkv"], conv["wskip"], res_w], axis=1)
        if li == 0:
            w16 = blk                                         # (EMB, 5*HID)
        else:
            mid_cols.append(blk)                              # (HID, 5*HID)
        wf1_cols.append(jnp.pad(f1w, ((0, 0), (0, FFN_PAD - HIDDEN_DIM))))
        wf2_cols.append(jnp.pad(f2w, ((0, FFN_PAD - HIDDEN_DIM), (0, 0))))

        small_rows += [_pad_row(conv["bq"]), _pad_row(conv["bk"]), _pad_row(conv["bv"]),
                       _pad_row(conv["bskip"]), _pad_row(res_b),
                       _pad_row(jnp.ones((HID,))), _pad_row(jnp.zeros((HID,))),
                       _pad_row(f1b), _pad_row(f2b),
                       _pad_row(jnp.ones((HID,))), _pad_row(jnp.zeros((HID,)))]
        prev = HID

    convf = _conv(keys[2], HID)

    # fused + lane-padded per-node output heads
    head_keys = jax.random.split(keys[3], NUM_NODES)
    w_head = jnp.zeros((HID, OUT_PAD), jnp.float32)
    b_head = jnp.zeros((OUT_PAD,), jnp.float32)
    off = 0
    for i in range(NUM_NODES):
        hw, hb = _lin(head_keys[i], HID, NODE_CLASSES[i])
        w_head = w_head.at[:, off:off + NODE_CLASSES[i]].set(hw)
        b_head = b_head.at[off:off + NODE_CLASSES[i]].set(hb)
        off += NODE_CLASSES[i]

    small_rows += [_pad_row(convf["bq"]), _pad_row(convf["bk"]), _pad_row(convf["bv"]),
                   _pad_row(convf["bskip"]),
                   _pad_row(jnp.ones((HID,))), _pad_row(jnp.zeros((HID,))),
                   _pad_row(b_head)]

    w256 = jnp.concatenate(
        mid_cols + [convf["wqkv"], convf["wskip"], w_head] + wf1_cols, axis=1)
    w128 = jnp.concatenate(wf2_cols, axis=1)

    assert w256.shape == (HID, W256_COLS)
    assert len(small_rows) == SMALL_ROWS

    params["small"] = jnp.stack(small_rows, axis=0)           # (29, 256) f32
    params["w16"] = w16.astype(jnp.bfloat16)                  # (16, 1280) bf16
    params["w256"] = w256.astype(jnp.bfloat16)                # (256, 2688) bf16
    params["w128"] = w128.astype(jnp.bfloat16)                # (128, 512) bf16
    return params


# ---------------------------------------------------------------------------
# Forward pass (one pallas_call, 7 packed inputs)
# ---------------------------------------------------------------------------
def transformer_gnn_forward(params, x, edge_index):
    """x: (batch*num_nodes, 1) int32; edge_index: (2, E) int32 on the batched graph."""
    total = x.shape[0]
    batch_size = total // NUM_NODES
    n_total = batch_size * NUM_NODES

    # attention bias in the folded-head layout, precomputed once and reused by all
    # layers: kron(I_heads, adj) is block-diagonal so heads never attend across
    # each other; non-edge entries get -1e30.
    src, dst = edge_index[0], edge_index[1]
    adj = jnp.zeros((n_total, n_total), jnp.float32).at[dst, src].set(1.0)
    has_edge = (jnp.sum(adj, axis=1, keepdims=True) > 0.0).astype(jnp.float32)
    bias = (jnp.kron(jnp.eye(HEADS, dtype=jnp.float32), adj) - 1.0) * 1e30

    # Embedding lookup is a data-dependent gather -> plain-JAX glue outside the kernel.
    xi = x.reshape(batch_size, NUM_NODES)
    embs = [params["emb"][i][jnp.clip(xi[:, i], 0, NODE_CLASSES[i])]
            for i in range(NUM_NODES)]
    h0 = jnp.stack(embs, axis=1).reshape(n_total, EMBEDDING_DIM).astype(jnp.float32)

    inputs = [h0, bias, has_edge,
              params["small"], params["w16"], params["w256"], params["w128"]]

    out = pl.pallas_call(
        functools.partial(_fused_forward_kernel, n=n_total),
        out_shape=jax.ShapeDtypeStruct((n_total, OUT_PAD), jnp.float32),
        grid=(1,),
        in_specs=[_full_spec(a) for a in inputs],
        out_specs=pl.BlockSpec((n_total, OUT_PAD), lambda i: (0, 0)),
        compiler_params=pltpu.CompilerParams(dimension_semantics=("arbitrary",)),
    )(*inputs)

    out = out.reshape(batch_size, NUM_NODES, OUT_PAD)
    logits = []
    off = 0
    for i in range(NUM_NODES):
        c = NODE_CLASSES[i]
        logits.append(out[:, i, off:off + c])
        off += c
    return logits


# ---------------------------------------------------------------------------
# Main
# ---------------------------------------------------------------------------
if __name__ == "__main__":
    key = jax.random.PRNGKey(0)
    k_param, k_x = jax.random.split(key)

    params = init_params(k_param)

    batch_size = 2
    n_total = batch_size * NUM_NODES

    # integer node observations, shape (batch*num_nodes, 1)
    maxes = jnp.array(NODE_CLASSES, jnp.int32)
    x = jax.random.randint(k_x, (batch_size, NUM_NODES), 0, 8, jnp.int32)
    x = jnp.minimum(x, maxes[None, :]).reshape(n_total, 1)

    # bidirectional ring within each graph, offset per batch element
    base_src = jnp.array([0, 1, 2, 3, 1, 2, 3, 0], jnp.int32)
    base_dst = jnp.array([1, 2, 3, 0, 0, 1, 2, 3], jnp.int32)
    srcs, dsts = [], []
    for b in range(batch_size):
        srcs.append(base_src + b * NUM_NODES)
        dsts.append(base_dst + b * NUM_NODES)
    edge_index = jnp.stack([jnp.concatenate(srcs), jnp.concatenate(dsts)], axis=0)

    logits = jax.jit(transformer_gnn_forward)(params, x, edge_index)
    logits = jax.block_until_ready(logits)

    # sanity: one logit tensor per node, shape (batch, node_classes[i])
    assert len(logits) == NUM_NODES
    for i, lg in enumerate(logits):
        assert lg.shape == (batch_size, NODE_CLASSES[i])
        assert bool(jnp.all(jnp.isfinite(lg)))

    print("KERNEL_OK")
</pallas_src>

<mosaic_0001>
module attributes {stable_mosaic.version = 11 : i64} {
  func.func @_fused_forward_kernel(%arg0: i32, %arg1: memref<8x16xf32, #tpu.memory_space<vmem>>, %arg2: memref<64x64xf32, #tpu.memory_space<vmem>>, %arg3: memref<8x1xf32, #tpu.memory_space<vmem>>, %arg4: memref<29x256xf32, #tpu.memory_space<vmem>>, %arg5: memref<16x1280xbf16, #tpu.memory_space<vmem>>, %arg6: memref<256x2688xbf16, #tpu.memory_space<vmem>>, %arg7: memref<128x512xbf16, #tpu.memory_space<vmem>>, %arg8: memref<8x128xf32, #tpu.memory_space<vmem>>) attributes {dimension_semantics = [#tpu.dimension_semantics<arbitrary>], iteration_bounds = array<i64: 1>, scalar_prefetch = 0 : i64, scratch_operands = 0 : i64, tpu.core_type = #tpu.core_type<tc>, window_params = [{pipeline_mode = #tpu.pipeline_mode<synchronous>, transform_indices = @transform_0, window_bounds = array<i64: 8, 16>}, {pipeline_mode = #tpu.pipeline_mode<synchronous>, transform_indices = @transform_1, window_bounds = array<i64: 64, 64>}, {pipeline_mode = #tpu.pipeline_mode<synchronous>, transform_indices = @transform_2, window_bounds = array<i64: 8, 1>}, {pipeline_mode = #tpu.pipeline_mode<synchronous>, transform_indices = @transform_3, window_bounds = array<i64: 29, 256>}, {pipeline_mode = #tpu.pipeline_mode<synchronous>, transform_indices = @transform_4, window_bounds = array<i64: 16, 1280>}, {pipeline_mode = #tpu.pipeline_mode<synchronous>, transform_indices = @transform_5, window_bounds = array<i64: 256, 2688>}, {pipeline_mode = #tpu.pipeline_mode<synchronous>, transform_indices = @transform_6, window_bounds = array<i64: 128, 512>}, {pipeline_mode = #tpu.pipeline_mode<synchronous>, transform_indices = @transform_7, window_bounds = array<i64: 8, 128>}]} {
    %c0 = arith.constant 0 : index
    %c0_0 = arith.constant 0 : index
    %0 = vector.load %arg1[%c0, %c0_0] : memref<8x16xf32, #tpu.memory_space<vmem>>, vector<8x16xf32>
    %c0_1 = arith.constant 0 : index
    %c0_2 = arith.constant 0 : index
    %1 = vector.load %arg2[%c0_1, %c0_2] : memref<64x64xf32, #tpu.memory_space<vmem>>, vector<64x64xf32>
    %c0_3 = arith.constant 0 : index
    %c0_4 = arith.constant 0 : index
    %2 = vector.load %arg3[%c0_3, %c0_4] : memref<8x1xf32, #tpu.memory_space<vmem>>, vector<8x1xf32>
    %c0_5 = arith.constant 0 : index
    %c0_6 = arith.constant 0 : index
    %3 = vector.load %arg4[%c0_5, %c0_6] : memref<29x256xf32, #tpu.memory_space<vmem>>, vector<29x256xf32>
    %c0_7 = arith.constant 0 : index
    %c0_8 = arith.constant 0 : index
    %4 = vector.load %arg5[%c0_7, %c0_8] : memref<16x1280xbf16, #tpu.memory_space<vmem>>, vector<16x1280xbf16>
    %5 = arith.extf %4 : vector<16x1280xbf16> to vector<16x1280xf32>
    %c0_9 = arith.constant 0 : index
    %c0_10 = arith.constant 0 : index
    %6 = vector.load %arg6[%c0_9, %c0_10] : memref<256x2688xbf16, #tpu.memory_space<vmem>>, vector<256x2688xbf16>
    %7 = arith.extf %6 : vector<256x2688xbf16> to vector<256x2688xf32>
    %c0_11 = arith.constant 0 : index
    %c0_12 = arith.constant 0 : index
    %8 = vector.load %arg7[%c0_11, %c0_12] : memref<128x512xbf16, #tpu.memory_space<vmem>>, vector<128x512xbf16>
    %9 = arith.extf %8 : vector<128x512xbf16> to vector<128x512xf32>
    %10 = vector.extract_strided_slice %3 {offsets = [0, 0], sizes = [1, 256], strides = [1, 1]} : vector<29x256xf32> to vector<1x256xf32>
    %11 = vector.extract_strided_slice %3 {offsets = [1, 0], sizes = [1, 256], strides = [1, 1]} : vector<29x256xf32> to vector<1x256xf32>
    %12 = vector.extract_strided_slice %3 {offsets = [2, 0], sizes = [1, 256], strides = [1, 1]} : vector<29x256xf32> to vector<1x256xf32>
    %13 = vector.extract_strided_slice %3 {offsets = [3, 0], sizes = [1, 256], strides = [1, 1]} : vector<29x256xf32> to vector<1x256xf32>
    %14 = vector.extract_strided_slice %3 {offsets = [4, 0], sizes = [1, 256], strides = [1, 1]} : vector<29x256xf32> to vector<1x256xf32>
    %15 = vector.extract_strided_slice %3 {offsets = [5, 0], sizes = [1, 256], strides = [1, 1]} : vector<29x256xf32> to vector<1x256xf32>
    %16 = vector.extract_strided_slice %3 {offsets = [6, 0], sizes = [1, 256], strides = [1, 1]} : vector<29x256xf32> to vector<1x256xf32>
    %17 = vector.extract_strided_slice %3 {offsets = [7, 0], sizes = [1, 128], strides = [1, 1]} : vector<29x256xf32> to vector<1x128xf32>
    %18 = vector.extract_strided_slice %3 {offsets = [8, 0], sizes = [1, 256], strides = [1, 1]} : vector<29x256xf32> to vector<1x256xf32>
    %19 = vector.extract_strided_slice %3 {offsets = [9, 0], sizes = [1, 256], strides = [1, 1]} : vector<29x256xf32> to vector<1x256xf32>
    %20 = vector.extract_strided_slice %3 {offsets = [10, 0], sizes = [1, 256], strides = [1, 1]} : vector<29x256xf32> to vector<1x256xf32>
    %21 = vector.extract_strided_slice %5 {offsets = [0, 0], sizes = [16, 768], strides = [1, 1]} : vector<16x1280xf32> to vector<16x768xf32>
    %22 = vector.extract_strided_slice %5 {offsets = [0, 768], sizes = [16, 256], strides = [1, 1]} : vector<16x1280xf32> to vector<16x256xf32>
    %23 = vector.extract_strided_slice %5 {offsets = [0, 1024], sizes = [16, 256], strides = [1, 1]} : vector<16x1280xf32> to vector<16x256xf32>
    %24 = vector.extract_strided_slice %7 {offsets = [0, 2432], sizes = [256, 128], strides = [1, 1]} : vector<256x2688xf32> to vector<256x128xf32>
    %25 = vector.extract_strided_slice %9 {offsets = [0, 0], sizes = [128, 256], strides = [1, 1]} : vector<128x512xf32> to vector<128x256xf32>
    %cst = arith.constant dense<0.000000e+00> : vector<8x256xf32>
    %26 = tpu.matmul %0, %23, %cst {dimension_numbers = #tpu.dot_dimension_numbers<[1], [0], [0], [1], [0, 0, 1, 1], [], []>} : vector<8x16xf32>, vector<16x256xf32>, vector<8x256xf32> -> vector<8x256xf32>
    %27 = vector.broadcast %14 : vector<1x256xf32> to vector<8x256xf32>
    %28 = arith.addf %26, %27 : vector<8x256xf32>
    %cst_13 = arith.constant dense<0.000000e+00> : vector<8x768xf32>
    %29 = tpu.matmul %0, %21, %cst_13 {dimension_numbers = #tpu.dot_dimension_numbers<[1], [0], [0], [1], [0, 0, 1, 1], [], []>} : vector<8x16xf32>, vector<16x768xf32>, vector<8x768xf32> -> vector<8x768xf32>
    %30 = vector.extract_strided_slice %29 {offsets = [0, 0], sizes = [8, 256], strides = [1, 1]} : vector<8x768xf32> to vector<8x256xf32>
    %31 = vector.broadcast %10 : vector<1x256xf32> to vector<8x256xf32>
    %32 = arith.addf %30, %31 : vector<8x256xf32>
    %33 = vector.extract_strided_slice %29 {offsets = [0, 256], sizes = [8, 256], strides = [1, 1]} : vector<8x768xf32> to vector<8x256xf32>
    %34 = vector.broadcast %11 : vector<1x256xf32> to vector<8x256xf32>
    %35 = arith.addf %33, %34 : vector<8x256xf32>
    %36 = vector.extract_strided_slice %29 {offsets = [0, 512], sizes = [8, 256], strides = [1, 1]} : vector<8x768xf32> to vector<8x256xf32>
    %37 = vector.broadcast %12 : vector<1x256xf32> to vector<8x256xf32>
    %38 = arith.addf %36, %37 : vector<8x256xf32>
    %39 = vector.extract_strided_slice %32 {offsets = [0, 0], sizes = [8, 32], strides = [1, 1]} : vector<8x256xf32> to vector<8x32xf32>
    %40 = vector.extract_strided_slice %32 {offsets = [0, 32], sizes = [8, 32], strides = [1, 1]} : vector<8x256xf32> to vector<8x32xf32>
    %41 = vector.extract_strided_slice %32 {offsets = [0, 64], sizes = [8, 32], strides = [1, 1]} : vector<8x256xf32> to vector<8x32xf32>
    %42 = vector.extract_strided_slice %32 {offsets = [0, 96], sizes = [8, 32], strides = [1, 1]} : vector<8x256xf32> to vector<8x32xf32>
    %43 = vector.extract_strided_slice %32 {offsets = [0, 128], sizes = [8, 32], strides = [1, 1]} : vector<8x256xf32> to vector<8x32xf32>
    %44 = vector.extract_strided_slice %32 {offsets = [0, 160], sizes = [8, 32], strides = [1, 1]} : vector<8x256xf32> to vector<8x32xf32>
    %45 = vector.extract_strided_slice %32 {offsets = [0, 192], sizes = [8, 32], strides = [1, 1]} : vector<8x256xf32> to vector<8x32xf32>
    %46 = vector.extract_strided_slice %32 {offsets = [0, 224], sizes = [8, 32], strides = [1, 1]} : vector<8x256xf32> to vector<8x32xf32>
    %47 = tpu.concatenate %39, %40, %41, %42, %43, %44, %45, %46 in 0 : vector<8x32xf32>, vector<8x32xf32>, vector<8x32xf32>, vector<8x32xf32>, vector<8x32xf32>, vector<8x32xf32>, vector<8x32xf32>, vector<8x32xf32> -> vector<64x32xf32>
    %48 = vector.extract_strided_slice %35 {offsets = [0, 0], sizes = [8, 32], strides = [1, 1]} : vector<8x256xf32> to vector<8x32xf32>
    %49 = vector.extract_strided_slice %35 {offsets = [0, 32], sizes = [8, 32], strides = [1, 1]} : vector<8x256xf32> to vector<8x32xf32>
    %50 = vector.extract_strided_slice %35 {offsets = [0, 64], sizes = [8, 32], strides = [1, 1]} : vector<8x256xf32> to vector<8x32xf32>
    %51 = vector.extract_strided_slice %35 {offsets = [0, 96], sizes = [8, 32], strides = [1, 1]} : vector<8x256xf32> to vector<8x32xf32>
    %52 = vector.extract_strided_slice %35 {offsets = [0, 128], sizes = [8, 32], strides = [1, 1]} : vector<8x256xf32> to vector<8x32xf32>
    %53 = vector.extract_strided_slice %35 {offsets = [0, 160], sizes = [8, 32], strides = [1, 1]} : vector<8x256xf32> to vector<8x32xf32>
    %54 = vector.extract_strided_slice %35 {offsets = [0, 192], sizes = [8, 32], strides = [1, 1]} : vector<8x256xf32> to vector<8x32xf32>
    %55 = vector.extract_strided_slice %35 {offsets = [0, 224], sizes = [8, 32], strides = [1, 1]} : vector<8x256xf32> to vector<8x32xf32>
    %56 = tpu.concatenate %48, %49, %50, %51, %52, %53, %54, %55 in 0 : vector<8x32xf32>, vector<8x32xf32>, vector<8x32xf32>, vector<8x32xf32>, vector<8x32xf32>, vector<8x32xf32>, vector<8x32xf32>, vector<8x32xf32> -> vector<64x32xf32>
    %57 = vector.extract_strided_slice %38 {offsets = [0, 0], sizes = [8, 32], strides = [1, 1]} : vector<8x256xf32> to vector<8x32xf32>
    %58 = vector.extract_strided_slice %38 {offsets = [0, 32], sizes = [8, 32], strides = [1, 1]} : vector<8x256xf32> to vector<8x32xf32>
    %59 = vector.extract_strided_slice %38 {offsets = [0, 64], sizes = [8, 32], strides = [1, 1]} : vector<8x256xf32> to vector<8x32xf32>
    %60 = vector.extract_strided_slice %38 {offsets = [0, 96], sizes = [8, 32], strides = [1, 1]} : vector<8x256xf32> to vector<8x32xf32>
    %61 = vector.extract_strided_slice %38 {offsets = [0, 128], sizes = [8, 32], strides = [1, 1]} : vector<8x256xf32> to vector<8x32xf32>
    %62 = vector.extract_strided_slice %38 {offsets = [0, 160], sizes = [8, 32], strides = [1, 1]} : vector<8x256xf32> to vector<8x32xf32>
    %63 = vector.extract_strided_slice %38 {offsets = [0, 192], sizes = [8, 32], strides = [1, 1]} : vector<8x256xf32> to vector<8x32xf32>
    %64 = vector.extract_strided_slice %38 {offsets = [0, 224], sizes = [8, 32], strides = [1, 1]} : vector<8x256xf32> to vector<8x32xf32>
    %65 = tpu.concatenate %57, %58, %59, %60, %61, %62, %63, %64 in 0 : vector<8x32xf32>, vector<8x32xf32>, vector<8x32xf32>, vector<8x32xf32>, vector<8x32xf32>, vector<8x32xf32>, vector<8x32xf32>, vector<8x32xf32> -> vector<64x32xf32>
    "tpu.trace_start"() <{level = 10 : i32, message = "ic,jc->ij"}> : () -> ()
    %cst_14 = arith.constant dense<0.000000e+00> : vector<64x64xf32>
    %66 = tpu.matmul %47, %56, %cst_14 {dimension_numbers = #tpu.dot_dimension_numbers<[1], [1], [0], [0], [0, 0, 1, 0], [], []>} : vector<64x32xf32>, vector<64x32xf32>, vector<64x64xf32> -> vector<64x64xf32>
    "tpu.trace_stop"() : () -> ()
    %67 = arith.addf %66, %1 : vector<64x64xf32>
    %cst_15 = arith.constant dense<0xFF800000> : vector<64xf32>
    %68 = vector.multi_reduction <maximumf>, %67, %cst_15 [1] : vector<64x64xf32> to vector<64xf32>
    %69 = vector.shape_cast %68 : vector<64xf32> to vector<64x1xf32>
    %70 = vector.broadcast %69 : vector<64x1xf32> to vector<64x64xf32>
    %71 = arith.subf %67, %70 : vector<64x64xf32>
    %72 = math.exp %71 : vector<64x64xf32>
    %cst_16 = arith.constant dense<0.000000e+00> : vector<64xf32>
    %73 = vector.multi_reduction <add>, %72, %cst_16 [1] : vector<64x64xf32> to vector<64xf32>
    %74 = vector.shape_cast %73 : vector<64xf32> to vector<64x1xf32>
    %75 = tpu.reciprocal %74 {approx = true} : vector<64x1xf32> -> vector<64x1xf32>
    %76 = vector.broadcast %75 : vector<64x1xf32> to vector<64x64xf32>
    %77 = arith.mulf %72, %76 : vector<64x64xf32>
    %cst_17 = arith.constant dense<0.000000e+00> : vector<64x32xf32>
    %78 = tpu.matmul %77, %65, %cst_17 {dimension_numbers = #tpu.dot_dimension_numbers<[1], [0], [0], [1], [0, 0, 1, 1], [], []>} : vector<64x64xf32>, vector<64x32xf32>, vector<64x32xf32> -> vector<64x32xf32>
    %79 = vector.extract_strided_slice %78 {offsets = [0, 0], sizes = [8, 32], strides = [1, 1]} : vector<64x32xf32> to vector<8x32xf32>
    %80 = vector.extract_strided_slice %78 {offsets = [8, 0], sizes = [8, 32], strides = [1, 1]} : vector<64x32xf32> to vector<8x32xf32>
    %81 = vector.extract_strided_slice %78 {offsets = [16, 0], sizes = [8, 32], strides = [1, 1]} : vector<64x32xf32> to vector<8x32xf32>
    %82 = vector.extract_strided_slice %78 {offsets = [24, 0], sizes = [8, 32], strides = [1, 1]} : vector<64x32xf32> to vector<8x32xf32>
    %83 = vector.extract_strided_slice %78 {offsets = [32, 0], sizes = [8, 32], strides = [1, 1]} : vector<64x32xf32> to vector<8x32xf32>
    %84 = vector.extract_strided_slice %78 {offsets = [40, 0], sizes = [8, 32], strides = [1, 1]} : vector<64x32xf32> to vector<8x32xf32>
    %85 = vector.extract_strided_slice %78 {offsets = [48, 0], sizes = [8, 32], strides = [1, 1]} : vector<64x32xf32> to vector<8x32xf32>
    %86 = vector.extract_strided_slice %78 {offsets = [56, 0], sizes = [8, 32], strides = [1, 1]} : vector<64x32xf32> to vector<8x32xf32>
    %87 = tpu.concatenate %79, %80, %81, %82, %83, %84, %85, %86 in 1 : vector<8x32xf32>, vector<8x32xf32>, vector<8x32xf32>, vector<8x32xf32>, vector<8x32xf32>, vector<8x32xf32>, vector<8x32xf32>, vector<8x32xf32> -> vector<8x256xf32>
    %88 = vector.broadcast %2 : vector<8x1xf32> to vector<8x256xf32>
    %89 = arith.mulf %87, %88 : vector<8x256xf32>
    %cst_18 = arith.constant dense<0.000000e+00> : vector<8x256xf32>
    %90 = tpu.matmul %0, %22, %cst_18 {dimension_numbers = #tpu.dot_dimension_numbers<[1], [0], [0], [1], [0, 0, 1, 1], [], []>} : vector<8x16xf32>, vector<16x256xf32>, vector<8x256xf32> -> vector<8x256xf32>
    %91 = arith.addf %89, %90 : vector<8x256xf32>
    %92 = vector.broadcast %13 : vector<1x256xf32> to vector<8x256xf32>
    %93 = arith.addf %91, %92 : vector<8x256xf32>
    %94 = arith.addf %93, %28 : vector<8x256xf32>
    %cst_19 = arith.constant dense<0.000000e+00> : vector<8xf32>
    %95 = vector.multi_reduction <add>, %94, %cst_19 [1] : vector<8x256xf32> to vector<8xf32>
    %96 = vector.shape_cast %95 : vector<8xf32> to vector<8x1xf32>
    %cst_20 = arith.constant 2.560000e+02 : f32
    %97 = vector.broadcast %cst_20 : f32 to vector<8x1xf32>
    %98 = arith.divf %96, %97 : vector<8x1xf32>
    %99 = vector.broadcast %98 : vector<8x1xf32> to vector<8x256xf32>
    %100 = arith.subf %94, %99 : vector<8x256xf32>
    %101 = arith.mulf %100, %100 : vector<8x256xf32>
    %cst_21 = arith.constant dense<0.000000e+00> : vector<8xf32>
    %102 = vector.multi_reduction <add>, %101, %cst_21 [1] : vector<8x256xf32> to vector<8xf32>
    %103 = vector.shape_cast %102 : vector<8xf32> to vector<8x1xf32>
    %cst_22 = arith.constant 2.560000e+02 : f32
    %104 = vector.broadcast %cst_22 : f32 to vector<8x1xf32>
    %105 = arith.divf %103, %104 : vector<8x1xf32>
    %106 = vector.broadcast %98 : vector<8x1xf32> to vector<8x256xf32>
    %107 = arith.subf %94, %106 : vector<8x256xf32>
    %cst_23 = arith.constant 9.99999974E-6 : f32
    %108 = vector.broadcast %cst_23 : f32 to vector<8x1xf32>
    %109 = arith.addf %105, %108 : vector<8x1xf32>
    %110 = math.rsqrt %109 : vector<8x1xf32>
    %111 = vector.broadcast %110 : vector<8x1xf32> to vector<8x256xf32>
    %112 = arith.mulf %107, %111 : vector<8x256xf32>
    %113 = vector.broadcast %15 : vector<1x256xf32> to vector<8x256xf32>
    %114 = arith.mulf %112, %113 : vector<8x256xf32>
    %115 = vector.broadcast %16 : vector<1x256xf32> to vector<8x256xf32>
    %116 = arith.addf %114, %115 : vector<8x256xf32>
    %cst_24 = arith.constant dense<0.000000e+00> : vector<8x128xf32>
    %117 = tpu.matmul %116, %24, %cst_24 {dimension_numbers = #tpu.dot_dimension_numbers<[1], [0], [0], [1], [0, 0, 1, 1], [], []>} : vector<8x256xf32>, vector<256x128xf32>, vector<8x128xf32> -> vector<8x128xf32>
    %118 = vector.broadcast %17 : vector<1x128xf32> to vector<8x128xf32>
    %119 = arith.addf %117, %118 : vector<8x128xf32>
    %cst_25 = arith.constant 0.000000e+00 : f32
    %120 = vector.broadcast %cst_25 : f32 to vector<8x128xf32>
    %121 = arith.maximumf %119, %120 : vector<8x128xf32>
    %cst_26 = arith.constant dense<0.000000e+00> : vector<8x256xf32>
    %122 = tpu.matmul %121, %25, %cst_26 {dimension_numbers = #tpu.dot_dimension_numbers<[1], [0], [0], [1], [0, 0, 1, 1], [], []>} : vector<8x128xf32>, vector<128x256xf32>, vector<8x256xf32> -> vector<8x256xf32>
    %123 = vector.broadcast %18 : vector<1x256xf32> to vector<8x256xf32>
    %124 = arith.addf %122, %123 : vector<8x256xf32>
    %125 = arith.addf %124, %116 : vector<8x256xf32>
    %cst_27 = arith.constant dense<0.000000e+00> : vector<8xf32>
    %126 = vector.multi_reduction <add>, %125, %cst_27 [1] : vector<8x256xf32> to vector<8xf32>
    %127 = vector.shape_cast %126 : vector<8xf32> to vector<8x1xf32>
    %cst_28 = arith.constant 2.560000e+02 : f32
    %128 = vector.broadcast %cst_28 : f32 to vector<8x1xf32>
    %129 = arith.divf %127, %128 : vector<8x1xf32>
    %130 = vector.broadcast %129 : vector<8x1xf32> to vector<8x256xf32>
    %131 = arith.subf %125, %130 : vector<8x256xf32>
    %132 = arith.mulf %131, %131 : vector<8x256xf32>
    %cst_29 = arith.constant dense<0.000000e+00> : vector<8xf32>
    %133 = vector.multi_reduction <add>, %132, %cst_29 [1] : vector<8x256xf32> to vector<8xf32>
    %134 = vector.shape_cast %133 : vector<8xf32> to vector<8x1xf32>
    %cst_30 = arith.constant 2.560000e+02 : f32
    %135 = vector.broadcast %cst_30 : f32 to vector<8x1xf32>
    %136 = arith.divf %134, %135 : vector<8x1xf32>
    %137 = vector.broadcast %129 : vector<8x1xf32> to vector<8x256xf32>
    %138 = arith.subf %125, %137 : vector<8x256xf32>
    %cst_31 = arith.constant 9.99999974E-6 : f32
    %139 = vector.broadcast %cst_31 : f32 to vector<8x1xf32>
    %140 = arith.addf %136, %139 : vector<8x1xf32>
    %141 = math.rsqrt %140 : vector<8x1xf32>
    %142 = vector.broadcast %141 : vector<8x1xf32> to vector<8x256xf32>
    %143 = arith.mulf %138, %142 : vector<8x256xf32>
    %144 = vector.broadcast %19 : vector<1x256xf32> to vector<8x256xf32>
    %145 = arith.mulf %143, %144 : vector<8x256xf32>
    %146 = vector.broadcast %20 : vector<1x256xf32> to vector<8x256xf32>
    %147 = arith.addf %145, %146 : vector<8x256xf32>
    %148 = vector.extract_strided_slice %3 {offsets = [11, 0], sizes = [1, 256], strides = [1, 1]} : vector<29x256xf32> to vector<1x256xf32>
    %149 = vector.extract_strided_slice %3 {offsets = [12, 0], sizes = [1, 256], strides = [1, 1]} : vector<29x256xf32> to vector<1x256xf32>
    %150 = vector.extract_strided_slice %3 {offsets = [13, 0], sizes = [1, 256], strides = [1, 1]} : vector<29x256xf32> to vector<1x256xf32>
    %151 = vector.extract_strided_slice %3 {offsets = [14, 0], sizes = [1, 256], strides = [1, 1]} : vector<29x256xf32> to vector<1x256xf32>
    %152 = vector.extract_strided_slice %3 {offsets = [15, 0], sizes = [1, 256], strides = [1, 1]} : vector<29x256xf32> to vector<1x256xf32>
    %153 = vector.extract_strided_slice %3 {offsets = [16, 0], sizes = [1, 256], strides = [1, 1]} : vector<29x256xf32> to vector<1x256xf32>
    %154 = vector.extract_strided_slice %3 {offsets = [17, 0], sizes = [1, 256], strides = [1, 1]} : vector<29x256xf32> to vector<1x256xf32>
    %155 = vector.extract_strided_slice %3 {offsets = [18, 0], sizes = [1, 128], strides = [1, 1]} : vector<29x256xf32> to vector<1x128xf32>
    %156 = vector.extract_strided_slice %3 {offsets = [19, 0], sizes = [1, 256], strides = [1, 1]} : vector<29x256xf32> to vector<1x256xf32>
    %157 = vector.extract_strided_slice %3 {offsets = [20, 0], sizes = [1, 256], strides = [1, 1]} : vector<29x256xf32> to vector<1x256xf32>
    %158 = vector.extract_strided_slice %3 {offsets = [21, 0], sizes = [1, 256], strides = [1, 1]} : vector<29x256xf32> to vector<1x256xf32>
    %159 = vector.extract_strided_slice %7 {offsets = [0, 0], sizes = [256, 768], strides = [1, 1]} : vector<256x2688xf32> to vector<256x768xf32>
    %160 = vector.extract_strided_slice %7 {offsets = [0, 768], sizes = [256, 256], strides = [1, 1]} : vector<256x2688xf32> to vector<256x256xf32>
    %161 = vector.extract_strided_slice %7 {offsets = [0, 1024], sizes = [256, 256], strides = [1, 1]} : vector<256x2688xf32> to vector<256x256xf32>
    %162 = vector.extract_strided_slice %7 {offsets = [0, 2560], sizes = [256, 128], strides = [1, 1]} : vector<256x2688xf32> to vector<256x128xf32>
    %163 = vector.extract_strided_slice %9 {offsets = [0, 256], sizes = [128, 256], strides = [1, 1]} : vector<128x512xf32> to vector<128x256xf32>
    %cst_32 = arith.constant dense<0.000000e+00> : vector<8x256xf32>
    %164 = tpu.matmul %147, %161, %cst_32 {dimension_numbers = #tpu.dot_dimension_numbers<[1], [0], [0], [1], [0, 0, 1, 1], [], []>} : vector<8x256xf32>, vector<256x256xf32>, vector<8x256xf32> -> vector<8x256xf32>
    %165 = vector.broadcast %152 : vector<1x256xf32> to vector<8x256xf32>
    %166 = arith.addf %164, %165 : vector<8x256xf32>
    %cst_33 = arith.constant dense<0.000000e+00> : vector<8x768xf32>
    %167 = tpu.matmul %147, %159, %cst_33 {dimension_numbers = #tpu.dot_dimension_numbers<[1], [0], [0], [1], [0, 0, 1, 1], [], []>} : vector<8x256xf32>, vector<256x768xf32>, vector<8x768xf32> -> vector<8x768xf32>
    %168 = vector.extract_strided_slice %167 {offsets = [0, 0], sizes = [8, 256], strides = [1, 1]} : vector<8x768xf32> to vector<8x256xf32>
    %169 = vector.broadcast %148 : vector<1x256xf32> to vector<8x256xf32>
    %170 = arith.addf %168, %169 : vector<8x256xf32>
    %171 = vector.extract_strided_slice %167 {offsets = [0, 256], sizes = [8, 256], strides = [1, 1]} : vector<8x768xf32> to vector<8x256xf32>
    %172 = vector.broadcast %149 : vector<1x256xf32> to vector<8x256xf32>
    %173 = arith.addf %171, %172 : vector<8x256xf32>
    %174 = vector.extract_strided_slice %167 {offsets = [0, 512], sizes = [8, 256], strides = [1, 1]} : vector<8x768xf32> to vector<8x256xf32>
    %175 = vector.broadcast %150 : vector<1x256xf32> to vector<8x256xf32>
    %176 = arith.addf %174, %175 : vector<8x256xf32>
    %177 = vector.extract_strided_slice %170 {offsets = [0, 0], sizes = [8, 32], strides = [1, 1]} : vector<8x256xf32> to vector<8x32xf32>
    %178 = vector.extract_strided_slice %170 {offsets = [0, 32], sizes = [8, 32], strides = [1, 1]} : vector<8x256xf32> to vector<8x32xf32>
    %179 = vector.extract_strided_slice %170 {offsets = [0, 64], sizes = [8, 32], strides = [1, 1]} : vector<8x256xf32> to vector<8x32xf32>
    %180 = vector.extract_strided_slice %170 {offsets = [0, 96], sizes = [8, 32], strides = [1, 1]} : vector<8x256xf32> to vector<8x32xf32>
    %181 = vector.extract_strided_slice %170 {offsets = [0, 128], sizes = [8, 32], strides = [1, 1]} : vector<8x256xf32> to vector<8x32xf32>
    %182 = vector.extract_strided_slice %170 {offsets = [0, 160], sizes = [8, 32], strides = [1, 1]} : vector<8x256xf32> to vector<8x32xf32>
    %183 = vector.extract_strided_slice %170 {offsets = [0, 192], sizes = [8, 32], strides = [1, 1]} : vector<8x256xf32> to vector<8x32xf32>
    %184 = vector.extract_strided_slice %170 {offsets = [0, 224], sizes = [8, 32], strides = [1, 1]} : vector<8x256xf32> to vector<8x32xf32>
    %185 = tpu.concatenate %177, %178, %179, %180, %181, %182, %183, %184 in 0 : vector<8x32xf32>, vector<8x32xf32>, vector<8x32xf32>, vector<8x32xf32>, vector<8x32xf32>, vector<8x32xf32>, vector<8x32xf32>, vector<8x32xf32> -> vector<64x32xf32>
    %186 = vector.extract_strided_slice %173 {offsets = [0, 0], sizes = [8, 32], strides = [1, 1]} : vector<8x256xf32> to vector<8x32xf32>
    %187 = vector.extract_strided_slice %173 {offsets = [0, 32], sizes = [8, 32], strides = [1, 1]} : vector<8x256xf32> to vector<8x32xf32>
    %188 = vector.extract_strided_slice %173 {offsets = [0, 64], sizes = [8, 32], strides = [1, 1]} : vector<8x256xf32> to vector<8x32xf32>
    %189 = vector.extract_strided_slice %173 {offsets = [0, 96], sizes = [8, 32], strides = [1, 1]} : vector<8x256xf32> to vector<8x32xf32>
    %190 = vector.extract_strided_slice %173 {offsets = [0, 128], sizes = [8, 32], strides = [1, 1]} : vector<8x256xf32> to vector<8x32xf32>
    %191 = vector.extract_strided_slice %173 {offsets = [0, 160], sizes = [8, 32], strides = [1, 1]} : vector<8x256xf32> to vector<8x32xf32>
    %192 = vector.extract_strided_slice %173 {offsets = [0, 192], sizes = [8, 32], strides = [1, 1]} : vector<8x256xf32> to vector<8x32xf32>
    %193 = vector.extract_strided_slice %173 {offsets = [0, 224], sizes = [8, 32], strides = [1, 1]} : vector<8x256xf32> to vector<8x32xf32>
    %194 = tpu.concatenate %186, %187, %188, %189, %190, %191, %192, %193 in 0 : vector<8x32xf32>, vector<8x32xf32>, vector<8x32xf32>, vector<8x32xf32>, vector<8x32xf32>, vector<8x32xf32>, vector<8x32xf32>, vector<8x32xf32> -> vector<64x32xf32>
    %195 = vector.extract_strided_slice %176 {offsets = [0, 0], sizes = [8, 32], strides = [1, 1]} : vector<8x256xf32> to vector<8x32xf32>
    %196 = vector.extract_strided_slice %176 {offsets = [0, 32], sizes = [8, 32], strides = [1, 1]} : vector<8x256xf32> to vector<8x32xf32>
    %197 = vector.extract_strided_slice %176 {offsets = [0, 64], sizes = [8, 32], strides = [1, 1]} : vector<8x256xf32> to vector<8x32xf32>
    %198 = vector.extract_strided_slice %176 {offsets = [0, 96], sizes = [8, 32], strides = [1, 1]} : vector<8x256xf32> to vector<8x32xf32>
    %199 = vector.extract_strided_slice %176 {offsets = [0, 128], sizes = [8, 32], strides = [1, 1]} : vector<8x256xf32> to vector<8x32xf32>
    %200 = vector.extract_strided_slice %176 {offsets = [0, 160], sizes = [8, 32], strides = [1, 1]} : vector<8x256xf32> to vector<8x32xf32>
    %201 = vector.extract_strided_slice %176 {offsets = [0, 192], sizes = [8, 32], strides = [1, 1]} : vector<8x256xf32> to vector<8x32xf32>
    %202 = vector.extract_strided_slice %176 {offsets = [0, 224], sizes = [8, 32], strides = [1, 1]} : vector<8x256xf32> to vector<8x32xf32>
    %203 = tpu.concatenate %195, %196, %197, %198, %199, %200, %201, %202 in 0 : vector<8x32xf32>, vector<8x32xf32>, vector<8x32xf32>, vector<8x32xf32>, vector<8x32xf32>, vector<8x32xf32>, vector<8x32xf32>, vector<8x32xf32> -> vector<64x32xf32>
    "tpu.trace_start"() <{level = 10 : i32, message = "ic,jc->ij"}> : () -> ()
    %cst_34 = arith.constant dense<0.000000e+00> : vector<64x64xf32>
    %204 = tpu.matmul %185, %194, %cst_34 {dimension_numbers = #tpu.dot_dimension_numbers<[1], [1], [0], [0], [0, 0, 1, 0], [], []>} : vector<64x32xf32>, vector<64x32xf32>, vector<64x64xf32> -> vector<64x64xf32>
    "tpu.trace_stop"() : () -> ()
    %205 = arith.addf %204, %1 : vector<64x64xf32>
    %cst_35 = arith.constant dense<0xFF800000> : vector<64xf32>
    %206 = vector.multi_reduction <maximumf>, %205, %cst_35 [1] : vector<64x64xf32> to vector<64xf32>
    %207 = vector.shape_cast %206 : vector<64xf32> to vector<64x1xf32>
    %208 = vector.broadcast %207 : vector<64x1xf32> to vector<64x64xf32>
    %209 = arith.subf %205, %208 : vector<64x64xf32>
    %210 = math.exp %209 : vector<64x64xf32>
    %cst_36 = arith.constant dense<0.000000e+00> : vector<64xf32>
    %211 = vector.multi_reduction <add>, %210, %cst_36 [1] : vector<64x64xf32> to vector<64xf32>
    %212 = vector.shape_cast %211 : vector<64xf32> to vector<64x1xf32>
    %213 = tpu.reciprocal %212 {approx = true} : vector<64x1xf32> -> vector<64x1xf32>
    %214 = vector.broadcast %213 : vector<64x1xf32> to vector<64x64xf32>
    %215 = arith.mulf %210, %214 : vector<64x64xf32>
    %cst_37 = arith.constant dense<0.000000e+00> : vector<64x32xf32>
    %216 = tpu.matmul %215, %203, %cst_37 {dimension_numbers = #tpu.dot_dimension_numbers<[1], [0], [0], [1], [0, 0, 1, 1], [], []>} : vector<64x64xf32>, vector<64x32xf32>, vector<64x32xf32> -> vector<64x32xf32>
    %217 = vector.extract_strided_slice %216 {offsets = [0, 0], sizes = [8, 32], strides = [1, 1]} : vector<64x32xf32> to vector<8x32xf32>
    %218 = vector.extract_strided_slice %216 {offsets = [8, 0], sizes = [8, 32], strides = [1, 1]} : vector<64x32xf32> to vector<8x32xf32>
    %219 = vector.extract_strided_slice %216 {offsets = [16, 0], sizes = [8, 32], strides = [1, 1]} : vector<64x32xf32> to vector<8x32xf32>
    %220 = vector.extract_strided_slice %216 {offsets = [24, 0], sizes = [8, 32], strides = [1, 1]} : vector<64x32xf32> to vector<8x32xf32>
    %221 = vector.extract_strided_slice %216 {offsets = [32, 0], sizes = [8, 32], strides = [1, 1]} : vector<64x32xf32> to vector<8x32xf32>
    %222 = vector.extract_strided_slice %216 {offsets = [40, 0], sizes = [8, 32], strides = [1, 1]} : vector<64x32xf32> to vector<8x32xf32>
    %223 = vector.extract_strided_slice %216 {offsets = [48, 0], sizes = [8, 32], strides = [1, 1]} : vector<64x32xf32> to vector<8x32xf32>
    %224 = vector.extract_strided_slice %216 {offsets = [56, 0], sizes = [8, 32], strides = [1, 1]} : vector<64x32xf32> to vector<8x32xf32>
    %225 = tpu.concatenate %217, %218, %219, %220, %221, %222, %223, %224 in 1 : vector<8x32xf32>, vector<8x32xf32>, vector<8x32xf32>, vector<8x32xf32>, vector<8x32xf32>, vector<8x32xf32>, vector<8x32xf32>, vector<8x32xf32> -> vector<8x256xf32>
    %226 = vector.broadcast %2 : vector<8x1xf32> to vector<8x256xf32>
    %227 = arith.mulf %225, %226 : vector<8x256xf32>
    %cst_38 = arith.constant dense<0.000000e+00> : vector<8x256xf32>
    %228 = tpu.matmul %147, %160, %cst_38 {dimension_numbers = #tpu.dot_dimension_numbers<[1], [0], [0], [1], [0, 0, 1, 1], [], []>} : vector<8x256xf32>, vector<256x256xf32>, vector<8x256xf32> -> vector<8x256xf32>
    %229 = arith.addf %227, %228 : vector<8x256xf32>
    %230 = vector.broadcast %151 : vector<1x256xf32> to vector<8x256xf32>
    %231 = arith.addf %229, %230 : vector<8x256xf32>
    %232 = arith.addf %231, %166 : vector<8x256xf32>
    %cst_39 = arith.constant dense<0.000000e+00> : vector<8xf32>
    %233 = vector.multi_reduction <add>, %232, %cst_39 [1] : vector<8x256xf32> to vector<8xf32>
    %234 = vector.shape_cast %233 : vector<8xf32> to vector<8x1xf32>
    %cst_40 = arith.constant 2.560000e+02 : f32
    %235 = vector.broadcast %cst_40 : f32 to vector<8x1xf32>
    %236 = arith.divf %234, %235 : vector<8x1xf32>
    %237 = vector.broadcast %236 : vector<8x1xf32> to vector<8x256xf32>
    %238 = arith.subf %232, %237 : vector<8x256xf32>
    %239 = arith.mulf %238, %238 : vector<8x256xf32>
    %cst_41 = arith.constant dense<0.000000e+00> : vector<8xf32>
    %240 = vector.multi_reduction <add>, %239, %cst_41 [1] : vector<8x256xf32> to vector<8xf32>
    %241 = vector.shape_cast %240 : vector<8xf32> to vector<8x1xf32>
    %cst_42 = arith.constant 2.560000e+02 : f32
    %242 = vector.broadcast %cst_42 : f32 to vector<8x1xf32>
    %243 = arith.divf %241, %242 : vector<8x1xf32>
    %244 = vector.broadcast %236 : vector<8x1xf32> to vector<8x256xf32>
    %245 = arith.subf %232, %244 : vector<8x256xf32>
    %cst_43 = arith.constant 9.99999974E-6 : f32
    %246 = vector.broadcast %cst_43 : f32 to vector<8x1xf32>
    %247 = arith.addf %243, %246 : vector<8x1xf32>
    %248 = math.rsqrt %247 : vector<8x1xf32>
    %249 = vector.broadcast %248 : vector<8x1xf32> to vector<8x256xf32>
    %250 = arith.mulf %245, %249 : vector<8x256xf32>
    %251 = vector.broadcast %153 : vector<1x256xf32> to vector<8x256xf32>
    %252 = arith.mulf %250, %251 : vector<8x256xf32>
    %253 = vector.broadcast %154 : vector<1x256xf32> to vector<8x256xf32>
    %254 = arith.addf %252, %253 : vector<8x256xf32>
    %cst_44 = arith.constant dense<0.000000e+00> : vector<8x128xf32>
    %255 = tpu.matmul %254, %162, %cst_44 {dimension_numbers = #tpu.dot_dimension_numbers<[1], [0], [0], [1], [0, 0, 1, 1], [], []>} : vector<8x256xf32>, vector<256x128xf32>, vector<8x128xf32> -> vector<8x128xf32>
    %256 = vector.broadcast %155 : vector<1x128xf32> to vector<8x128xf32>
    %257 = arith.addf %255, %256 : vector<8x128xf32>
    %cst_45 = arith.constant 0.000000e+00 : f32
    %258 = vector.broadcast %cst_45 : f32 to vector<8x128xf32>
    %259 = arith.maximumf %257, %258 : vector<8x128xf32>
    %cst_46 = arith.constant dense<0.000000e+00> : vector<8x256xf32>
    %260 = tpu.matmul %259, %163, %cst_46 {dimension_numbers = #tpu.dot_dimension_numbers<[1], [0], [0], [1], [0, 0, 1, 1], [], []>} : vector<8x128xf32>, vector<128x256xf32>, vector<8x256xf32> -> vector<8x256xf32>
    %261 = vector.broadcast %156 : vector<1x256xf32> to vector<8x256xf32>
    %262 = arith.addf %260, %261 : vector<8x256xf32>
    %263 = arith.addf %262, %254 : vector<8x256xf32>
    %cst_47 = arith.constant dense<0.000000e+00> : vector<8xf32>
    %264 = vector.multi_reduction <add>, %263, %cst_47 [1] : vector<8x256xf32> to vector<8xf32>
    %265 = vector.shape_cast %264 : vector<8xf32> to vector<8x1xf32>
    %cst_48 = arith.constant 2.560000e+02 : f32
    %266 = vector.broadcast %cst_48 : f32 to vector<8x1xf32>
    %267 = arith.divf %265, %266 : vector<8x1xf32>
    %268 = vector.broadcast %267 : vector<8x1xf32> to vector<8x256xf32>
    %269 = arith.subf %263, %268 : vector<8x256xf32>
    %270 = arith.mulf %269, %269 : vector<8x256xf32>
    %cst_49 = arith.constant dense<0.000000e+00> : vector<8xf32>
    %271 = vector.multi_reduction <add>, %270, %cst_49 [1] : vector<8x256xf32> to vector<8xf32>
    %272 = vector.shape_cast %271 : vector<8xf32> to vector<8x1xf32>
    %cst_50 = arith.constant 2.560000e+02 : f32
    %273 = vector.broadcast %cst_50 : f32 to vector<8x1xf32>
    %274 = arith.divf %272, %273 : vector<8x1xf32>
    %275 = vector.broadcast %267 : vector<8x1xf32> to vector<8x256xf32>
    %276 = arith.subf %263, %275 : vector<8x256xf32>
    %cst_51 = arith.constant 9.99999974E-6 : f32
    %277 = vector.broadcast %cst_51 : f32 to vector<8x1xf32>
    %278 = arith.addf %274, %277 : vector<8x1xf32>
    %279 = math.rsqrt %278 : vector<8x1xf32>
    %280 = vector.broadcast %279 : vector<8x1xf32> to vector<8x256xf32>
    %281 = arith.mulf %276, %280 : vector<8x256xf32>
    %282 = vector.broadcast %157 : vector<1x256xf32> to vector<8x256xf32>
    %283 = arith.mulf %281, %282 : vector<8x256xf32>
    %284 = vector.broadcast %158 : vector<1x256xf32> to vector<8x256xf32>
    %285 = arith.addf %283, %284 : vector<8x256xf32>
    %286 = vector.extract_strided_slice %3 {offsets = [22, 0], sizes = [1, 256], strides = [1, 1]} : vector<29x256xf32> to vector<1x256xf32>
    %287 = vector.extract_strided_slice %3 {offsets = [23, 0], sizes = [1, 256], strides = [1, 1]} : vector<29x256xf32> to vector<1x256xf32>
    %288 = vector.extract_strided_slice %3 {offsets = [24, 0], sizes = [1, 256], strides = [1, 1]} : vector<29x256xf32> to vector<1x256xf32>
    %289 = vector.extract_strided_slice %3 {offsets = [25, 0], sizes = [1, 256], strides = [1, 1]} : vector<29x256xf32> to vector<1x256xf32>
    %290 = vector.extract_strided_slice %3 {offsets = [26, 0], sizes = [1, 256], strides = [1, 1]} : vector<29x256xf32> to vector<1x256xf32>
    %291 = vector.extract_strided_slice %3 {offsets = [27, 0], sizes = [1, 256], strides = [1, 1]} : vector<29x256xf32> to vector<1x256xf32>
    %292 = vector.extract_strided_slice %3 {offsets = [28, 0], sizes = [1, 128], strides = [1, 1]} : vector<29x256xf32> to vector<1x128xf32>
    %293 = vector.extract_strided_slice %7 {offsets = [0, 1280], sizes = [256, 768], strides = [1, 1]} : vector<256x2688xf32> to vector<256x768xf32>
    %294 = vector.extract_strided_slice %7 {offsets = [0, 2048], sizes = [256, 256], strides = [1, 1]} : vector<256x2688xf32> to vector<256x256xf32>
    %295 = vector.extract_strided_slice %7 {offsets = [0, 2304], sizes = [256, 128], strides = [1, 1]} : vector<256x2688xf32> to vector<256x128xf32>
    %cst_52 = arith.constant dense<0.000000e+00> : vector<8x768xf32>
    %296 = tpu.matmul %285, %293, %cst_52 {dimension_numbers = #tpu.dot_dimension_numbers<[1], [0], [0], [1], [0, 0, 1, 1], [], []>} : vector<8x256xf32>, vector<256x768xf32>, vector<8x768xf32> -> vector<8x768xf32>
    %297 = vector.extract_strided_slice %296 {offsets = [0, 0], sizes = [8, 256], strides = [1, 1]} : vector<8x768xf32> to vector<8x256xf32>
    %298 = vector.broadcast %286 : vector<1x256xf32> to vector<8x256xf32>
    %299 = arith.addf %297, %298 : vector<8x256xf32>
    %300 = vector.extract_strided_slice %296 {offsets = [0, 256], sizes = [8, 256], strides = [1, 1]} : vector<8x768xf32> to vector<8x256xf32>
    %301 = vector.broadcast %287 : vector<1x256xf32> to vector<8x256xf32>
    %302 = arith.addf %300, %301 : vector<8x256xf32>
    %303 = vector.extract_strided_slice %296 {offsets = [0, 512], sizes = [8, 256], strides = [1, 1]} : vector<8x768xf32> to vector<8x256xf32>
    %304 = vector.broadcast %288 : vector<1x256xf32> to vector<8x256xf32>
    %305 = arith.addf %303, %304 : vector<8x256xf32>
    %306 = vector.extract_strided_slice %299 {offsets = [0, 0], sizes = [8, 32], strides = [1, 1]} : vector<8x256xf32> to vector<8x32xf32>
    %307 = vector.extract_strided_slice %299 {offsets = [0, 32], sizes = [8, 32], strides = [1, 1]} : vector<8x256xf32> to vector<8x32xf32>
    %308 = vector.extract_strided_slice %299 {offsets = [0, 64], sizes = [8, 32], strides = [1, 1]} : vector<8x256xf32> to vector<8x32xf32>
    %309 = vector.extract_strided_slice %299 {offsets = [0, 96], sizes = [8, 32], strides = [1, 1]} : vector<8x256xf32> to vector<8x32xf32>
    %310 = vector.extract_strided_slice %299 {offsets = [0, 128], sizes = [8, 32], strides = [1, 1]} : vector<8x256xf32> to vector<8x32xf32>
    %311 = vector.extract_strided_slice %299 {offsets = [0, 160], sizes = [8, 32], strides = [1, 1]} : vector<8x256xf32> to vector<8x32xf32>
    %312 = vector.extract_strided_slice %299 {offsets = [0, 192], sizes = [8, 32], strides = [1, 1]} : vector<8x256xf32> to vector<8x32xf32>
    %313 = vector.extract_strided_slice %299 {offsets = [0, 224], sizes = [8, 32], strides = [1, 1]} : vector<8x256xf32> to vector<8x32xf32>
    %314 = tpu.concatenate %306, %307, %308, %309, %310, %311, %312, %313 in 0 : vector<8x32xf32>, vector<8x32xf32>, vector<8x32xf32>, vector<8x32xf32>, vector<8x32xf32>, vector<8x32xf32>, vector<8x32xf32>, vector<8x32xf32> -> vector<64x32xf32>
    %315 = vector.extract_strided_slice %302 {offsets = [0, 0], sizes = [8, 32], strides = [1, 1]} : vector<8x256xf32> to vector<8x32xf32>
    %316 = vector.extract_strided_slice %302 {offsets = [0, 32], sizes = [8, 32], strides = [1, 1]} : vector<8x256xf32> to vector<8x32xf32>
    %317 = vector.extract_strided_slice %302 {offsets = [0, 64], sizes = [8, 32], strides = [1, 1]} : vector<8x256xf32> to vector<8x32xf32>
    %318 = vector.extract_strided_slice %302 {offsets = [0, 96], sizes = [8, 32], strides = [1, 1]} : vector<8x256xf32> to vector<8x32xf32>
    %319 = vector.extract_strided_slice %302 {offsets = [0, 128], sizes = [8, 32], strides = [1, 1]} : vector<8x256xf32> to vector<8x32xf32>
    %320 = vector.extract_strided_slice %302 {offsets = [0, 160], sizes = [8, 32], strides = [1, 1]} : vector<8x256xf32> to vector<8x32xf32>
    %321 = vector.extract_strided_slice %302 {offsets = [0, 192], sizes = [8, 32], strides = [1, 1]} : vector<8x256xf32> to vector<8x32xf32>
    %322 = vector.extract_strided_slice %302 {offsets = [0, 224], sizes = [8, 32], strides = [1, 1]} : vector<8x256xf32> to vector<8x32xf32>
    %323 = tpu.concatenate %315, %316, %317, %318, %319, %320, %321, %322 in 0 : vector<8x32xf32>, vector<8x32xf32>, vector<8x32xf32>, vector<8x32xf32>, vector<8x32xf32>, vector<8x32xf32>, vector<8x32xf32>, vector<8x32xf32> -> vector<64x32xf32>
    %324 = vector.extract_strided_slice %305 {offsets = [0, 0], sizes = [8, 32], strides = [1, 1]} : vector<8x256xf32> to vector<8x32xf32>
    %325 = vector.extract_strided_slice %305 {offsets = [0, 32], sizes = [8, 32], strides = [1, 1]} : vector<8x256xf32> to vector<8x32xf32>
    %326 = vector.extract_strided_slice %305 {offsets = [0, 64], sizes = [8, 32], strides = [1, 1]} : vector<8x256xf32> to vector<8x32xf32>
    %327 = vector.extract_strided_slice %305 {offsets = [0, 96], sizes = [8, 32], strides = [1, 1]} : vector<8x256xf32> to vector<8x32xf32>
    %328 = vector.extract_strided_slice %305 {offsets = [0, 128], sizes = [8, 32], strides = [1, 1]} : vector<8x256xf32> to vector<8x32xf32>
    %329 = vector.extract_strided_slice %305 {offsets = [0, 160], sizes = [8, 32], strides = [1, 1]} : vector<8x256xf32> to vector<8x32xf32>
    %330 = vector.extract_strided_slice %305 {offsets = [0, 192], sizes = [8, 32], strides = [1, 1]} : vector<8x256xf32> to vector<8x32xf32>
    %331 = vector.extract_strided_slice %305 {offsets = [0, 224], sizes = [8, 32], strides = [1, 1]} : vector<8x256xf32> to vector<8x32xf32>
    %332 = tpu.concatenate %324, %325, %326, %327, %328, %329, %330, %331 in 0 : vector<8x32xf32>, vector<8x32xf32>, vector<8x32xf32>, vector<8x32xf32>, vector<8x32xf32>, vector<8x32xf32>, vector<8x32xf32>, vector<8x32xf32> -> vector<64x32xf32>
    "tpu.trace_start"() <{level = 10 : i32, message = "ic,jc->ij"}> : () -> ()
    %cst_53 = arith.constant dense<0.000000e+00> : vector<64x64xf32>
    %333 = tpu.matmul %314, %323, %cst_53 {dimension_numbers = #tpu.dot_dimension_numbers<[1], [1], [0], [0], [0, 0, 1, 0], [], []>} : vector<64x32xf32>, vector<64x32xf32>, vector<64x64xf32> -> vector<64x64xf32>
    "tpu.trace_stop"() : () -> ()
    %334 = arith.addf %333, %1 : vector<64x64xf32>
    %cst_54 = arith.constant dense<0xFF800000> : vector<64xf32>
    %335 = vector.multi_reduction <maximumf>, %334, %cst_54 [1] : vector<64x64xf32> to vector<64xf32>
    %336 = vector.shape_cast %335 : vector<64xf32> to vector<64x1xf32>
    %337 = vector.broadcast %336 : vector<64x1xf32> to vector<64x64xf32>
    %338 = arith.subf %334, %337 : vector<64x64xf32>
    %339 = math.exp %338 : vector<64x64xf32>
    %cst_55 = arith.constant dense<0.000000e+00> : vector<64xf32>
    %340 = vector.multi_reduction <add>, %339, %cst_55 [1] : vector<64x64xf32> to vector<64xf32>
    %341 = vector.shape_cast %340 : vector<64xf32> to vector<64x1xf32>
    %342 = tpu.reciprocal %341 {approx = true} : vector<64x1xf32> -> vector<64x1xf32>
    %343 = vector.broadcast %342 : vector<64x1xf32> to vector<64x64xf32>
    %344 = arith.mulf %339, %343 : vector<64x64xf32>
    %cst_56 = arith.constant dense<0.000000e+00> : vector<64x32xf32>
    %345 = tpu.matmul %344, %332, %cst_56 {dimension_numbers = #tpu.dot_dimension_numbers<[1], [0], [0], [1], [0, 0, 1, 1], [], []>} : vector<64x64xf32>, vector<64x32xf32>, vector<64x32xf32> -> vector<64x32xf32>
    %346 = vector.extract_strided_slice %345 {offsets = [0, 0], sizes = [8, 32], strides = [1, 1]} : vector<64x32xf32> to vector<8x32xf32>
    %347 = vector.extract_strided_slice %345 {offsets = [8, 0], sizes = [8, 32], strides = [1, 1]} : vector<64x32xf32> to vector<8x32xf32>
    %348 = vector.extract_strided_slice %345 {offsets = [16, 0], sizes = [8, 32], strides = [1, 1]} : vector<64x32xf32> to vector<8x32xf32>
    %349 = vector.extract_strided_slice %345 {offsets = [24, 0], sizes = [8, 32], strides = [1, 1]} : vector<64x32xf32> to vector<8x32xf32>
    %350 = vector.extract_strided_slice %345 {offsets = [32, 0], sizes = [8, 32], strides = [1, 1]} : vector<64x32xf32> to vector<8x32xf32>
    %351 = vector.extract_strided_slice %345 {offsets = [40, 0], sizes = [8, 32], strides = [1, 1]} : vector<64x32xf32> to vector<8x32xf32>
    %352 = vector.extract_strided_slice %345 {offsets = [48, 0], sizes = [8, 32], strides = [1, 1]} : vector<64x32xf32> to vector<8x32xf32>
    %353 = vector.extract_strided_slice %345 {offsets = [56, 0], sizes = [8, 32], strides = [1, 1]} : vector<64x32xf32> to vector<8x32xf32>
    %354 = tpu.concatenate %346, %347, %348, %349, %350, %351, %352, %353 in 1 : vector<8x32xf32>, vector<8x32xf32>, vector<8x32xf32>, vector<8x32xf32>, vector<8x32xf32>, vector<8x32xf32>, vector<8x32xf32>, vector<8x32xf32> -> vector<8x256xf32>
    %355 = vector.broadcast %2 : vector<8x1xf32> to vector<8x256xf32>
    %356 = arith.mulf %354, %355 : vector<8x256xf32>
    %cst_57 = arith.constant dense<0.000000e+00> : vector<8x256xf32>
    %357 = tpu.matmul %285, %294, %cst_57 {dimension_numbers = #tpu.dot_dimension_numbers<[1], [0], [0], [1], [0, 0, 1, 1], [], []>} : vector<8x256xf32>, vector<256x256xf32>, vector<8x256xf32> -> vector<8x256xf32>
    %358 = arith.addf %356, %357 : vector<8x256xf32>
    %359 = vector.broadcast %289 : vector<1x256xf32> to vector<8x256xf32>
    %360 = arith.addf %358, %359 : vector<8x256xf32>
    %cst_58 = arith.constant dense<0.000000e+00> : vector<8xf32>
    %361 = vector.multi_reduction <add>, %360, %cst_58 [1] : vector<8x256xf32> to vector<8xf32>
    %362 = vector.shape_cast %361 : vector<8xf32> to vector<8x1xf32>
    %cst_59 = arith.constant 2.560000e+02 : f32
    %363 = vector.broadcast %cst_59 : f32 to vector<8x1xf32>
    %364 = arith.divf %362, %363 : vector<8x1xf32>
    %365 = vector.broadcast %364 : vector<8x1xf32> to vector<8x256xf32>
    %366 = arith.subf %360, %365 : vector<8x256xf32>
    %367 = arith.mulf %366, %366 : vector<8x256xf32>
    %cst_60 = arith.constant dense<0.000000e+00> : vector<8xf32>
    %368 = vector.multi_reduction <add>, %367, %cst_60 [1] : vector<8x256xf32> to vector<8xf32>
    %369 = vector.shape_cast %368 : vector<8xf32> to vector<8x1xf32>
    %cst_61 = arith.constant 2.560000e+02 : f32
    %370 = vector.broadcast %cst_61 : f32 to vector<8x1xf32>
    %371 = arith.divf %369, %370 : vector<8x1xf32>
    %372 = vector.broadcast %364 : vector<8x1xf32> to vector<8x256xf32>
    %373 = arith.subf %360, %372 : vector<8x256xf32>
    %cst_62 = arith.constant 9.99999974E-6 : f32
    %374 = vector.broadcast %cst_62 : f32 to vector<8x1xf32>
    %375 = arith.addf %371, %374 : vector<8x1xf32>
    %376 = math.rsqrt %375 : vector<8x1xf32>
    %377 = vector.broadcast %376 : vector<8x1xf32> to vector<8x256xf32>
    %378 = arith.mulf %373, %377 : vector<8x256xf32>
    %379 = vector.broadcast %290 : vector<1x256xf32> to vector<8x256xf32>
    %380 = arith.mulf %378, %379 : vector<8x256xf32>
    %381 = vector.broadcast %291 : vector<1x256xf32> to vector<8x256xf32>
    %382 = arith.addf %380, %381 : vector<8x256xf32>
    %cst_63 = arith.constant 0.000000e+00 : f32
    %383 = vector.broadcast %cst_63 : f32 to vector<8x256xf32>
    %384 = arith.maximumf %382, %383 : vector<8x256xf32>
    %cst_64 = arith.constant dense<0.000000e+00> : vector<8x128xf32>
    %385 = tpu.matmul %384, %295, %cst_64 {dimension_numbers = #tpu.dot_dimension_numbers<[1], [0], [0], [1], [0, 0, 1, 1], [], []>} : vector<8x256xf32>, vector<256x128xf32>, vector<8x128xf32> -> vector<8x128xf32>
    %386 = vector.broadcast %292 : vector<1x128xf32> to vector<8x128xf32>
    %387 = arith.addf %385, %386 : vector<8x128xf32>
    %c0_65 = arith.constant 0 : index
    %c0_66 = arith.constant 0 : index
    %388 = vector.load %arg8[%c0_65, %c0_66] : memref<8x128xf32, #tpu.memory_space<vmem>>, vector<8x128xf32>
    tpu.vector_store %arg8[%c0_65, %c0_66], %387 {strides = array<i32>} : memref<8x128xf32, #tpu.memory_space<vmem>>, vector<8x128xf32>,
    return
  }
  func.func @transform_0(%arg0: i32) -> (i32, i32) {
    %c0_i32 = arith.constant 0 : i32
    %c0_i32_0 = arith.constant 0 : i32
    %c0_i32_1 = arith.constant 0 : i32
    return %c0_i32, %c0_i32_0 : i32, i32
  }
  func.func @transform_1(%arg0: i32) -> (i32, i32) {
    %c0_i32 = arith.constant 0 : i32
    %c0_i32_0 = arith.constant 0 : i32
    %c0_i32_1 = arith.constant 0 : i32
    return %c0_i32, %c0_i32_0 : i32, i32
  }
  func.func @transform_2(%arg0: i32) -> (i32, i32) {
    %c0_i32 = arith.constant 0 : i32
    %c0_i32_0 = arith.constant 0 : i32
    %c0_i32_1 = arith.constant 0 : i32
    return %c0_i32, %c0_i32_0 : i32, i32
  }
  func.func @transform_3(%arg0: i32) -> (i32, i32) {
    %c0_i32 = arith.constant 0 : i32
    %c0_i32_0 = arith.constant 0 : i32
    %c0_i32_1 = arith.constant 0 : i32
    return %c0_i32, %c0_i32_0 : i32, i32
  }
  func.func @transform_4(%arg0: i32) -> (i32, i32) {
    %c0_i32 = arith.constant 0 : i32
    %c0_i32_0 = arith.constant 0 : i32
    %c0_i32_1 = arith.constant 0 : i32
    return %c0_i32, %c0_i32_0 : i32, i32
  }
  func.func @transform_5(%arg0: i32) -> (i32, i32) {
    %c0_i32 = arith.constant 0 : i32
    %c0_i32_0 = arith.constant 0 : i32
    %c0_i32_1 = arith.constant 0 : i32
    return %c0_i32, %c0_i32_0 : i32, i32
  }
  func.func @transform_6(%arg0: i32) -> (i32, i32) {
    %c0_i32 = arith.constant 0 : i32
    %c0_i32_0 = arith.constant 0 : i32
    %c0_i32_1 = arith.constant 0 : i32
    return %c0_i32, %c0_i32_0 : i32, i32
  }
  func.func @transform_7(%arg0: i32) -> (i32, i32) {
    %c0_i32 = arith.constant 0 : i32
    %c0_i32_0 = arith.constant 0 : i32
    %c0_i32_1 = arith.constant 0 : i32
    return %c0_i32, %c0_i32_0 : i32, i32
  }
}

</mosaic_0001>

<llo_original>
// kernel: transformer_gnn_forward.1
$region0: #{transformer_gnn_forward.1}
  #allocation0 [shape = 'u32[]', space=smem, size = 0x4, offset = 0x4, fixed_abs, tag = 'smem constant byte address 0x4 - core index']
  #allocation1 [shape = 'u32[144,128]{1,0:T(1,128)}', space=vmem, size = 0x12000, scoped, tag = 'internal scratch']
  %s0 = inlined_call_operand.vmem [shape: f32[8,16], index: 0, kind: input, shape index: {}]
  %s1 = inlined_call_operand.vmem [shape: f32[64,64], index: 1, kind: input, shape index: {}]
  %s2 = inlined_call_operand.vmem [shape: f32[8,1], index: 2, kind: input, shape index: {}]
  %s3 = inlined_call_operand.vmem [shape: f32[29,256], index: 3, kind: input, shape index: {}]
  %s4 = inlined_call_operand.vmem [shape: bf16[16,1280], index: 4, kind: input, shape index: {}]
  %s5 = inlined_call_operand.vmem [shape: bf16[256,2688], index: 5, kind: input, shape index: {}]
  %s6 = inlined_call_operand.vmem [shape: bf16[128,512], index: 6, kind: input, shape index: {}]
  %s7 = inlined_call_operand.vmem [shape: f32[8,128], index: 7, kind: output, shape index: {}]
  %s8 = sld [smem:[#allocation0]]
  $region38: #{transformer_gnn_forward.1} parent=0
    _
  %s10 = ssub.s32 1, %s8
  %s11 = scalar_select 0, %s10, %s8
  // Predicated region
  $region2: #{transformer_gnn_forward.1} parent=0 // pred_check
    _
  $region3: #{transformer_gnn_forward.1} parent=0 // pred_check_branch
    %13 = sbr.rel (0) target = $region5
  $region4: #{transformer_gnn_forward.1} parent=0 // pred_region
    _
  $region5: #{transformer_gnn_forward.1} parent=0 // pred_fallthru
    _
  // Predicated region
  $region6: #{transformer_gnn_forward.1} parent=0 // pred_check
    _
  $region7: #{transformer_gnn_forward.1} parent=0 // pred_check_branch
    %15 = sbr.rel (0) target = $region9
  $region8: #{transformer_gnn_forward.1} parent=0 // pred_region
    _
  $region9: #{transformer_gnn_forward.1} parent=0 // pred_fallthru
    _
  // Predicated region
  $region10: #{transformer_gnn_forward.1} parent=0 // pred_check
    _
  $region11: #{transformer_gnn_forward.1} parent=0 // pred_check_branch
    %17 = sbr.rel (0) target = $region13
  $region12: #{transformer_gnn_forward.1} parent=0 // pred_region
    _
  $region13: #{transformer_gnn_forward.1} parent=0 // pred_fallthru
    _
  // Predicated region
  $region14: #{transformer_gnn_forward.1} parent=0 // pred_check
    _
  $region15: #{transformer_gnn_forward.1} parent=0 // pred_check_branch
    %19 = sbr.rel (0) target = $region17
  $region16: #{transformer_gnn_forward.1} parent=0 // pred_region
    _
  $region17: #{transformer_gnn_forward.1} parent=0 // pred_fallthru
    _
  // Predicated region
  $region18: #{transformer_gnn_forward.1} parent=0 // pred_check
    _
  $region19: #{transformer_gnn_forward.1} parent=0 // pred_check_branch
    %21 = sbr.rel (0) target = $region21
  $region20: #{transformer_gnn_forward.1} parent=0 // pred_region
    _
  $region21: #{transformer_gnn_forward.1} parent=0 // pred_fallthru
    _
  // Predicated region
  $region22: #{transformer_gnn_forward.1} parent=0 // pred_check
    _
  $region23: #{transformer_gnn_forward.1} parent=0 // pred_check_branch
    %23 = sbr.rel (0) target = $region25
  $region24: #{transformer_gnn_forward.1} parent=0 // pred_region
    _
  $region25: #{transformer_gnn_forward.1} parent=0 // pred_fallthru
    _
  // Predicated region
  $region26: #{transformer_gnn_forward.1} parent=0 // pred_check
    _
  $region27: #{transformer_gnn_forward.1} parent=0 // pred_check_branch
    %25 = sbr.rel (0) target = $region29
  $region28: #{transformer_gnn_forward.1} parent=0 // pred_region
    _
  $region29: #{transformer_gnn_forward.1} parent=0 // pred_fallthru
    _
  %v26 = vld [vmem:[%s0] sm:$0xff]
  %v27 = vld [vmem:[%s1] sm:$0xff]
  %v28 = vld [vmem:[%s1 + $0x8] sm:$0xff]
  %v29 = vld [vmem:[%s1 + $0x10] sm:$0xff]
  %v30 = vld [vmem:[%s1 + $0x18] sm:$0xff]
  %v31 = vld [vmem:[%s1 + $0x20] sm:$0xff]
  %v32 = vld [vmem:[%s1 + $0x28] sm:$0xff]
  %v33 = vld [vmem:[%s1 + $0x30] sm:$0xff]
  %v34 = vld [vmem:[%s1 + $0x38] sm:$0xff]
  %v35 = vld [vmem:[%s2] sm:$0xff]
  %v36 = vld [vmem:[%s3] sm:$0xff]
  %v37 = vld [vmem:[%s3 + $0x8] sm:$0xff]
  %v38 = vld [vmem:[%s3 + $0x10] sm:$0xff]
  %v39 = vld [vmem:[%s3 + $0x18] sm:$0xff]
  %v40 = vld [vmem:[%s3 + $0x20] sm:$0xff]
  %v41 = vld [vmem:[%s3 + $0x28] sm:$0xff]
  %v42 = vld [vmem:[%s3 + $0x30] sm:$0x1f]
  %v43 = vld [vmem:[%s3 + $0x38] sm:$0x1f]
  %v44 = vld [vmem:[%s4] sm:$0xff]
  %v45 = vld [vmem:[%s4 + $0x8] sm:$0xff]
  %v46 = vld [vmem:[%s4 + $0x10] sm:$0xff]
  %v47 = vld [vmem:[%s4 + $0x18] sm:$0xff]
  %v48 = vld [vmem:[%s4 + $0x20] sm:$0xff]
  %v49 = vld [vmem:[%s4 + $0x28] sm:$0xff]
  %v50 = vld [vmem:[%s4 + $0x30] sm:$0xff]
  %v51 = vld [vmem:[%s4 + $0x38] sm:$0xff]
  %v52 = vld [vmem:[%s4 + $0x40] sm:$0xff]
  %v53 = vld [vmem:[%s4 + $0x48] sm:$0xff]
  %v54 = vunpack.c.l.bf16 %v44
  %v55 = vunpack.c.h.bf16 %v44
  %v56 = vunpack.c.l.bf16 %v45
  %v57 = vunpack.c.h.bf16 %v45
  %v58 = vunpack.c.l.bf16 %v46
  %v59 = vunpack.c.h.bf16 %v46
  %v60 = vunpack.c.l.bf16 %v47
  %v61 = vunpack.c.h.bf16 %v47
  %v62 = vunpack.c.l.bf16 %v48
  %v63 = vunpack.c.h.bf16 %v48
  %v64 = vunpack.c.l.bf16 %v49
  %v65 = vunpack.c.h.bf16 %v49
  %v66 = vunpack.c.l.bf16 %v50
  %v67 = vunpack.c.h.bf16 %v50
  %v68 = vunpack.c.l.bf16 %v51
  %v69 = vunpack.c.h.bf16 %v51
  %v70 = vunpack.c.l.bf16 %v52
  %v71 = vunpack.c.h.bf16 %v52
  %v72 = vunpack.c.l.bf16 %v53
  %v73 = vunpack.c.h.bf16 %v53
  %v74 = vld [vmem:[%s5] sm:$0xff]
  %v75 = vld [vmem:[%s5 + $0x8] sm:$0xff]
  %v76 = vld [vmem:[%s5 + $0x10] sm:$0xff]
  %v77 = vld [vmem:[%s5 + $0x18] sm:$0xff]
  %v78 = vld [vmem:[%s5 + $0x20] sm:$0xff]
  %v79 = vld [vmem:[%s5 + $0x28] sm:$0xff]
  %v80 = vld [vmem:[%s5 + $0x30] sm:$0xff]
  %v81 = vld [vmem:[%s5 + $0x38] sm:$0xff]
  %v82 = vld [vmem:[%s5 + $0x40] sm:$0xff]
  %v83 = vld [vmem:[%s5 + $0x48] sm:$0xff]
  %v84 = vld [vmem:[%s5 + $0x50] sm:$0xf]
  %v85 = vld [vmem:[%s5 + $0x54] sm:$0xff]
  %v86 = vld [vmem:[%s5 + $0x5c] sm:$0xff]
  %v87 = vld [vmem:[%s5 + $0x64] sm:$0xff]
  %v88 = vld [vmem:[%s5 + $0x6c] sm:$0xff]
  %v89 = vld [vmem:[%s5 + $0x74] sm:$0xff]
  %v90 = vld [vmem:[%s5 + $0x7c] sm:$0xff]
  %v91 = vld [vmem:[%s5 + $0x84] sm:$0xff]
  %v92 = vld [vmem:[%s5 + $0x8c] sm:$0xff]
  %v93 = vld [vmem:[%s5 + $0x94] sm:$0xff]
  %v94 = vld [vmem:[%s5 + $0x9c] sm:$0xff]
  %v95 = vld [vmem:[%s5 + $0xa4] sm:$0xf]
  %v96 = vld [vmem:[%s5 + $0xa8] sm:$0xff]
  %v97 = vld [vmem:[%s5 + $0xb0] sm:$0xff]
  %v98 = vld [vmem:[%s5 + $0xb8] sm:$0xff]
  %v99 = vld [vmem:[%s5 + $0xc0] sm:$0xff]
  %v100 = vld [vmem:[%s5 + $0xc8] sm:$0xff]
  %v101 = vld [vmem:[%s5 + $0xd0] sm:$0xff]
  %v102 = vld [vmem:[%s5 + $0xd8] sm:$0xff]
  %v103 = vld [vmem:[%s5 + $0xe0] sm:$0xff]
  %v104 = vld [vmem:[%s5 + $0xe8] sm:$0xff]
  %v105 = vld [vmem:[%s5 + $0xf0] sm:$0xff]
  %v106 = vld [vmem:[%s5 + $0xf8] sm:$0xf]
  %v107 = vld [vmem:[%s5 + $0xfc] sm:$0xff]
  %v108 = vld [vmem:[%s5 + $0x104] sm:$0xff]
  %v109 = vld [vmem:[%s5 + $0x10c] sm:$0xff]
  %v110 = vld [vmem:[%s5 + $0x114] sm:$0xff]
  %v111 = vld [vmem:[%s5 + $0x11c] sm:$0xff]
  %v112 = vld [vmem:[%s5 + $0x124] sm:$0xff]
  %v113 = vld [vmem:[%s5 + $0x12c] sm:$0xff]
  %v114 = vld [vmem:[%s5 + $0x134] sm:$0xff]
  %v115 = vld [vmem:[%s5 + $0x13c] sm:$0xff]
  %v116 = vld [vmem:[%s5 + $0x144] sm:$0xff]
  %v117 = vld [vmem:[%s5 + $0x14c] sm:$0xf]
  %v118 = vld [vmem:[%s5 + $0x150] sm:$0xff]
  %v119 = vld [vmem:[%s5 + $0x158] sm:$0xff]
  %v120 = vld [vmem:[%s5 + $0x160] sm:$0xff]
  %v121 = vld [vmem:[%s5 + $0x168] sm:$0xff]
  %v122 = vld [vmem:[%s5 + $0x170] sm:$0xff]
  %v123 = vld [vmem:[%s5 + $0x178] sm:$0xff]
  %v124 = vld [vmem:[%s5 + $0x180] sm:$0xff]
  %v125 = vld [vmem:[%s5 + $0x188] sm:$0xff]
  %v126 = vld [vmem:[%s5 + $0x190] sm:$0xff]
  %v127 = vld [vmem:[%s5 + $0x198] sm:$0xff]
  %v128 = vld [vmem:[%s5 + $0x1a0] sm:$0xf]
  %v129 = vld [vmem:[%s5 + $0x1a4] sm:$0xff]
  %v130 = vld [vmem:[%s5 + $0x1ac] sm:$0xff]
  %v131 = vld [vmem:[%s5 + $0x1b4] sm:$0xff]
  %v132 = vld [vmem:[%s5 + $0x1bc] sm:$0xff]
  %v133 = vld [vmem:[%s5 + $0x1c4] sm:$0xff]
  %v134 = vld [vmem:[%s5 + $0x1cc] sm:$0xff]
  %v135 = vld [vmem:[%s5 + $0x1d4] sm:$0xff]
  %v136 = vld [vmem:[%s5 + $0x1dc] sm:$0xff]
  %v137 = vld [vmem:[%s5 + $0x1e4] sm:$0xff]
  %v138 = vld [vmem:[%s5 + $0x1ec] sm:$0xff]
  %v139 = vld [vmem:[%s5 + $0x1f4] sm:$0xf]
  %v140 = vld [vmem:[%s5 + $0x1f8] sm:$0xff]
  %v141 = vld [vmem:[%s5 + $0x200] sm:$0xff]
  %v142 = vld [vmem:[%s5 + $0x208] sm:$0xff]
  %v143 = vld [vmem:[%s5 + $0x210] sm:$0xff]
  %v144 = vld [vmem:[%s5 + $0x218] sm:$0xff]
  %v145 = vld [vmem:[%s5 + $0x220] sm:$0xff]
  %v146 = vld [vmem:[%s5 + $0x228] sm:$0xff]
  %v147 = vld [vmem:[%s5 + $0x230] sm:$0xff]
  %v148 = vld [vmem:[%s5 + $0x238] sm:$0xff]
  %v149 = vld [vmem:[%s5 + $0x240] sm:$0xff]
  %v150 = vld [vmem:[%s5 + $0x248] sm:$0xf]
  %v151 = vld [vmem:[%s5 + $0x24c] sm:$0xff]
  %v152 = vld [vmem:[%s5 + $0x254] sm:$0xff]
  %v153 = vld [vmem:[%s5 + $0x25c] sm:$0xff]
  %v154 = vld [vmem:[%s5 + $0x264] sm:$0xff]
  %v155 = vld [vmem:[%s5 + $0x26c] sm:$0xff]
  %v156 = vld [vmem:[%s5 + $0x274] sm:$0xff]
  %v157 = vld [vmem:[%s5 + $0x27c] sm:$0xff]
  %v158 = vld [vmem:[%s5 + $0x284] sm:$0xff]
  %v159 = vld [vmem:[%s5 + $0x28c] sm:$0xff]
  %v160 = vld [vmem:[%s5 + $0x294] sm:$0xff]
  %v161 = vld [vmem:[%s5 + $0x29c] sm:$0xf]
  %v162 = vld [vmem:[%s5 + $0x2a0] sm:$0xff]
  %v163 = vld [vmem:[%s5 + $0x2a8] sm:$0xff]
  %v164 = vld [vmem:[%s5 + $0x2b0] sm:$0xff]
  %v165 = vld [vmem:[%s5 + $0x2b8] sm:$0xff]
  %v166 = vld [vmem:[%s5 + $0x2c0] sm:$0xff]
  %v167 = vld [vmem:[%s5 + $0x2c8] sm:$0xff]
  %v168 = vld [vmem:[%s5 + $0x2d0] sm:$0xff]
  %v169 = vld [vmem:[%s5 + $0x2d8] sm:$0xff]
  %v170 = vld [vmem:[%s5 + $0x2e0] sm:$0xff]
  %v171 = vld [vmem:[%s5 + $0x2e8] sm:$0xff]
  %v172 = vld [vmem:[%s5 + $0x2f0] sm:$0xf]
  %v173 = vld [vmem:[%s5 + $0x2f4] sm:$0xff]
  %v174 = vld [vmem:[%s5 + $0x2fc] sm:$0xff]
  %v175 = vld [vmem:[%s5 + $0x304] sm:$0xff]
  %v176 = vld [vmem:[%s5 + $0x30c] sm:$0xff]
  %v177 = vld [vmem:[%s5 + $0x314] sm:$0xff]
  %v178 = vld [vmem:[%s5 + $0x31c] sm:$0xff]
  %v179 = vld [vmem:[%s5 + $0x324] sm:$0xff]
  %v180 = vld [vmem:[%s5 + $0x32c] sm:$0xff]
  %v181 = vld [vmem:[%s5 + $0x334] sm:$0xff]
  %v182 = vld [vmem:[%s5 + $0x33c] sm:$0xff]
  %v183 = vld [vmem:[%s5 + $0x344] sm:$0xf]
  %v184 = vld [vmem:[%s5 + $0x348] sm:$0xff]
  %v185 = vld [vmem:[%s5 + $0x350] sm:$0xff]
  %v186 = vld [vmem:[%s5 + $0x358] sm:$0xff]
  %v187 = vld [vmem:[%s5 + $0x360] sm:$0xff]
  %v188 = vld [vmem:[%s5 + $0x368] sm:$0xff]
  %v189 = vld [vmem:[%s5 + $0x370] sm:$0xff]
  %v190 = vld [vmem:[%s5 + $0x378] sm:$0xff]
  %v191 = vld [vmem:[%s5 + $0x380] sm:$0xff]
  %v192 = vld [vmem:[%s5 + $0x388] sm:$0xff]
  %v193 = vld [vmem:[%s5 + $0x390] sm:$0xff]
  %v194 = vld [vmem:[%s5 + $0x398] sm:$0xf]
  %v195 = vld [vmem:[%s5 + $0x39c] sm:$0xff]
  %v196 = vld [vmem:[%s5 + $0x3a4] sm:$0xff]
  %v197 = vld [vmem:[%s5 + $0x3ac] sm:$0xff]
  %v198 = vld [vmem:[%s5 + $0x3b4] sm:$0xff]
  %v199 = vld [vmem:[%s5 + $0x3bc] sm:$0xff]
  %v200 = vld [vmem:[%s5 + $0x3c4] sm:$0xff]
  %v201 = vld [vmem:[%s5 + $0x3cc] sm:$0xff]
  %v202 = vld [vmem:[%s5 + $0x3d4] sm:$0xff]
  %v203 = vld [vmem:[%s5 + $0x3dc] sm:$0xff]
  %v204 = vld [vmem:[%s5 + $0x3e4] sm:$0xff]
  %v205 = vld [vmem:[%s5 + $0x3ec] sm:$0xf]
  %v206 = vld [vmem:[%s5 + $0x3f0] sm:$0xff]
  %v207 = vld [vmem:[%s5 + $0x3f8] sm:$0xff]
  %v208 = vld [vmem:[%s5 + $0x400] sm:$0xff]
  %v209 = vld [vmem:[%s5 + $0x408] sm:$0xff]
  %v210 = vld [vmem:[%s5 + $0x410] sm:$0xff]
  %v211 = vld [vmem:[%s5 + $0x418] sm:$0xff]
  %v212 = vld [vmem:[%s5 + $0x420] sm:$0xff]
  %v213 = vld [vmem:[%s5 + $0x428] sm:$0xff]
  %v214 = vld [vmem:[%s5 + $0x430] sm:$0xff]
  %v215 = vld [vmem:[%s5 + $0x438] sm:$0xff]
  %v216 = vld [vmem:[%s5 + $0x440] sm:$0xf]
  %v217 = vld [vmem:[%s5 + $0x444] sm:$0xff]
  %v218 = vld [vmem:[%s5 + $0x44c] sm:$0xff]
  %v219 = vld [vmem:[%s5 + $0x454] sm:$0xff]
  %v220 = vld [vmem:[%s5 + $0x45c] sm:$0xff]
  %v221 = vld [vmem:[%s5 + $0x464] sm:$0xff]
  %v222 = vld [vmem:[%s5 + $0x46c] sm:$0xff]
  %v223 = vld [vmem:[%s5 + $0x474] sm:$0xff]
  %v224 = vld [vmem:[%s5 + $0x47c] sm:$0xff]
  %v225 = vld [vmem:[%s5 + $0x484] sm:$0xff]
  %v226 = vld [vmem:[%s5 + $0x48c] sm:$0xff]
  %v227 = vld [vmem:[%s5 + $0x494] sm:$0xf]
  %v228 = vld [vmem:[%s5 + $0x498] sm:$0xff]
  %v229 = vld [vmem:[%s5 + $0x4a0] sm:$0xff]
  %v230 = vld [vmem:[%s5 + $0x4a8] sm:$0xff]
  %v231 = vld [vmem:[%s5 + $0x4b0] sm:$0xff]
  %v232 = vld [vmem:[%s5 + $0x4b8] sm:$0xff]
  %v233 = vld [vmem:[%s5 + $0x4c0] sm:$0xff]
  %v234 = vld [vmem:[%s5 + $0x4c8] sm:$0xff]
  %v235 = vld [vmem:[%s5 + $0x4d0] sm:$0xff]
  %v236 = vld [vmem:[%s5 + $0x4d8] sm:$0xff]
  %v237 = vld [vmem:[%s5 + $0x4e0] sm:$0xff]
  %v238 = vld [vmem:[%s5 + $0x4e8] sm:$0xf]
  %v239 = vld [vmem:[%s5 + $0x4ec] sm:$0xff]
  %v240 = vld [vmem:[%s5 + $0x4f4] sm:$0xff]
  %v241 = vld [vmem:[%s5 + $0x4fc] sm:$0xff]
  %v242 = vld [vmem:[%s5 + $0x504] sm:$0xff]
  %v243 = vld [vmem:[%s5 + $0x50c] sm:$0xff]
  %v244 = vld [vmem:[%s5 + $0x514] sm:$0xff]
  %v245 = vld [vmem:[%s5 + $0x51c] sm:$0xff]
  %v246 = vld [vmem:[%s5 + $0x524] sm:$0xff]
  %v247 = vld [vmem:[%s5 + $0x52c] sm:$0xff]
  %v248 = vld [vmem:[%s5 + $0x534] sm:$0xff]
  %v249 = vld [vmem:[%s5 + $0x53c] sm:$0xf]
  %v250 = vld [vmem:[%s5 + $0x540] sm:$0xff]
  %v251 = vld [vmem:[%s5 + $0x548] sm:$0xff]
  %v252 = vld [vmem:[%s5 + $0x550] sm:$0xff]
  %v253 = vld [vmem:[%s5 + $0x558] sm:$0xff]
  %v254 = vld [vmem:[%s5 + $0x560] sm:$0xff]
  %v255 = vld [vmem:[%s5 + $0x568] sm:$0xff]
  %v256 = vld [vmem:[%s5 + $0x570] sm:$0xff]
  %v257 = vld [vmem:[%s5 + $0x578] sm:$0xff]
  %v258 = vld [vmem:[%s5 + $0x580] sm:$0xff]
  %v259 = vld [vmem:[%s5 + $0x588] sm:$0xff]
  %v260 = vld [vmem:[%s5 + $0x590] sm:$0xf]
  %v261 = vld [vmem:[%s5 + $0x594] sm:$0xff]
  %v262 = vld [vmem:[%s5 + $0x59c] sm:$0xff]
  %v263 = vld [vmem:[%s5 + $0x5a4] sm:$0xff]
  %v264 = vld [vmem:[%s5 + $0x5ac] sm:$0xff]
  %v265 = vld [vmem:[%s5 + $0x5b4] sm:$0xff]
  %v266 = vld [vmem:[%s5 + $0x5bc] sm:$0xff]
  %v267 = vld [vmem:[%s5 + $0x5c4] sm:$0xff]
  %v268 = vld [vmem:[%s5 + $0x5cc] sm:$0xff]
  %v269 = vld [vmem:[%s5 + $0x5d4] sm:$0xff]
  %v270 = vld [vmem:[%s5 + $0x5dc] sm:$0xff]
  %v271 = vld [vmem:[%s5 + $0x5e4] sm:$0xf]
  %v272 = vld [vmem:[%s5 + $0x5e8] sm:$0xff]
  %v273 = vld [vmem:[%s5 + $0x5f0] sm:$0xff]
  %v274 = vld [vmem:[%s5 + $0x5f8] sm:$0xff]
  %v275 = vld [vmem:[%s5 + $0x600] sm:$0xff]
  %v276 = vld [vmem:[%s5 + $0x608] sm:$0xff]
  %v277 = vld [vmem:[%s5 + $0x610] sm:$0xff]
  %v278 = vld [vmem:[%s5 + $0x618] sm:$0xff]
  %v279 = vld [vmem:[%s5 + $0x620] sm:$0xff]
  %v280 = vld [vmem:[%s5 + $0x628] sm:$0xff]
  %v281 = vld [vmem:[%s5 + $0x630] sm:$0xff]
  %v282 = vld [vmem:[%s5 + $0x638] sm:$0xf]
  %v283 = vld [vmem:[%s5 + $0x63c] sm:$0xff]
  %v284 = vld [vmem:[%s5 + $0x644] sm:$0xff]
  %v285 = vld [vmem:[%s5 + $0x64c] sm:$0xff]
  %v286 = vld [vmem:[%s5 + $0x654] sm:$0xff]
  %v287 = vld [vmem:[%s5 + $0x65c] sm:$0xff]
  %v288 = vld [vmem:[%s5 + $0x664] sm:$0xff]
  %v289 = vld [vmem:[%s5 + $0x66c] sm:$0xff]
  %v290 = vld [vmem:[%s5 + $0x674] sm:$0xff]
  %v291 = vld [vmem:[%s5 + $0x67c] sm:$0xff]
  %v292 = vld [vmem:[%s5 + $0x684] sm:$0xff]
  %v293 = vld [vmem:[%s5 + $0x68c] sm:$0xf]
  %v294 = vld [vmem:[%s5 + $0x690] sm:$0xff]
  %v295 = vld [vmem:[%s5 + $0x698] sm:$0xff]
  %v296 = vld [vmem:[%s5 + $0x6a0] sm:$0xff]
  %v297 = vld [vmem:[%s5 + $0x6a8] sm:$0xff]
  %v298 = vld [vmem:[%s5 + $0x6b0] sm:$0xff]
  %v299 = vld [vmem:[%s5 + $0x6b8] sm:$0xff]
  %v300 = vld [vmem:[%s5 + $0x6c0] sm:$0xff]
  %v301 = vld [vmem:[%s5 + $0x6c8] sm:$0xff]
  %v302 = vld [vmem:[%s5 + $0x6d0] sm:$0xff]
  %v303 = vld [vmem:[%s5 + $0x6d8] sm:$0xff]
  %v304 = vld [vmem:[%s5 + $0x6e0] sm:$0xf]
  %v305 = vld [vmem:[%s5 + $0x6e4] sm:$0xff]
  %v306 = vld [vmem:[%s5 + $0x6ec] sm:$0xff]
  %v307 = vld [vmem:[%s5 + $0x6f4] sm:$0xff]
  %v308 = vld [vmem:[%s5 + $0x6fc] sm:$0xff]
  %v309 = vld [vmem:[%s5 + $0x704] sm:$0xff]
  %v310 = vld [vmem:[%s5 + $0x70c] sm:$0xff]
  %v311 = vld [vmem:[%s5 + $0x714] sm:$0xff]
  %v312 = vld [vmem:[%s5 + $0x71c] sm:$0xff]
  %v313 = vld [vmem:[%s5 + $0x724] sm:$0xff]
  %v314 = vld [vmem:[%s5 + $0x72c] sm:$0xff]
  %v315 = vld [vmem:[%s5 + $0x734] sm:$0xf]
  %v316 = vld [vmem:[%s5 + $0x738] sm:$0xff]
  %v317 = vld [vmem:[%s5 + $0x740] sm:$0xff]
  %v318 = vld [vmem:[%s5 + $0x748] sm:$0xff]
  %v319 = vld [vmem:[%s5 + $0x750] sm:$0xff]
  %v320 = vld [vmem:[%s5 + $0x758] sm:$0xff]
  %v321 = vld [vmem:[%s5 + $0x760] sm:$0xff]
  %v322 = vld [vmem:[%s5 + $0x768] sm:$0xff]
  %v323 = vld [vmem:[%s5 + $0x770] sm:$0xff]
  %v324 = vld [vmem:[%s5 + $0x778] sm:$0xff]
  %v325 = vld [vmem:[%s5 + $0x780] sm:$0xff]
  %v326 = vld [vmem:[%s5 + $0x788] sm:$0xf]
  %v327 = vld [vmem:[%s5 + $0x78c] sm:$0xff]
  %v328 = vld [vmem:[%s5 + $0x794] sm:$0xff]
  %v329 = vld [vmem:[%s5 + $0x79c] sm:$0xff]
  %v330 = vld [vmem:[%s5 + $0x7a4] sm:$0xff]
  %v331 = vld [vmem:[%s5 + $0x7ac] sm:$0xff]
  %v332 = vld [vmem:[%s5 + $0x7b4] sm:$0xff]
  %v333 = vld [vmem:[%s5 + $0x7bc] sm:$0xff]
  %v334 = vld [vmem:[%s5 + $0x7c4] sm:$0xff]
  %v335 = vld [vmem:[%s5 + $0x7cc] sm:$0xff]
  %v336 = vld [vmem:[%s5 + $0x7d4] sm:$0xff]
  %v337 = vld [vmem:[%s5 + $0x7dc] sm:$0xf]
  %v338 = vld [vmem:[%s5 + $0x7e0] sm:$0xff]
  %v339 = vld [vmem:[%s5 + $0x7e8] sm:$0xff]
  %v340 = vld [vmem:[%s5 + $0x7f0] sm:$0xff]
  %v341 = vld [vmem:[%s5 + $0x7f8] sm:$0xff]
  %v342 = vld [vmem:[%s5 + $0x800] sm:$0xff]
  %v343 = vld [vmem:[%s5 + $0x808] sm:$0xff]
  %v344 = vld [vmem:[%s5 + $0x810] sm:$0xff]
  %v345 = vld [vmem:[%s5 + $0x818] sm:$0xff]
  %v346 = vld [vmem:[%s5 + $0x820] sm:$0xff]
  %v347 = vld [vmem:[%s5 + $0x828] sm:$0xff]
  %v348 = vld [vmem:[%s5 + $0x830] sm:$0xf]
  %v349 = vld [vmem:[%s5 + $0x834] sm:$0xff]
  %v350 = vld [vmem:[%s5 + $0x83c] sm:$0xff]
  %v351 = vld [vmem:[%s5 + $0x844] sm:$0xff]
  %v352 = vld [vmem:[%s5 + $0x84c] sm:$0xff]
  %v353 = vld [vmem:[%s5 + $0x854] sm:$0xff]
  %v354 = vld [vmem:[%s5 + $0x85c] sm:$0xff]
  %v355 = vld [vmem:[%s5 + $0x864] sm:$0xff]
  %v356 = vld [vmem:[%s5 + $0x86c] sm:$0xff]
  %v357 = vld [vmem:[%s5 + $0x874] sm:$0xff]
  %v358 = vld [vmem:[%s5 + $0x87c] sm:$0xff]
  %v359 = vld [vmem:[%s5 + $0x884] sm:$0xf]
  %v360 = vld [vmem:[%s5 + $0x888] sm:$0xff]
  %v361 = vld [vmem:[%s5 + $0x890] sm:$0xff]
  %v362 = vld [vmem:[%s5 + $0x898] sm:$0xff]
  %v363 = vld [vmem:[%s5 + $0x8a0] sm:$0xff]
  %v364 = vld [vmem:[%s5 + $0x8a8] sm:$0xff]
  %v365 = vld [vmem:[%s5 + $0x8b0] sm:$0xff]
  %v366 = vld [vmem:[%s5 + $0x8b8] sm:$0xff]
  %v367 = vld [vmem:[%s5 + $0x8c0] sm:$0xff]
  %v368 = vld [vmem:[%s5 + $0x8c8] sm:$0xff]
  %v369 = vld [vmem:[%s5 + $0x8d0] sm:$0xff]
  %v370 = vld [vmem:[%s5 + $0x8d8] sm:$0xf]
  %v371 = vld [vmem:[%s5 + $0x8dc] sm:$0xff]
  %v372 = vld [vmem:[%s5 + $0x8e4] sm:$0xff]
  %v373 = vld [vmem:[%s5 + $0x8ec] sm:$0xff]
  %v374 = vld [vmem:[%s5 + $0x8f4] sm:$0xff]
  %v375 = vld [vmem:[%s5 + $0x8fc] sm:$0xff]
  %v376 = vld [vmem:[%s5 + $0x904] sm:$0xff]
  %v377 = vld [vmem:[%s5 + $0x90c] sm:$0xff]
  %v378 = vld [vmem:[%s5 + $0x914] sm:$0xff]
  %v379 = vld [vmem:[%s5 + $0x91c] sm:$0xff]
  %v380 = vld [vmem:[%s5 + $0x924] sm:$0xff]
  %v381 = vld [vmem:[%s5 + $0x92c] sm:$0xf]
  %v382 = vld [vmem:[%s5 + $0x930] sm:$0xff]
  %v383 = vld [vmem:[%s5 + $0x938] sm:$0xff]
  %v384 = vld [vmem:[%s5 + $0x940] sm:$0xff]
  %v385 = vld [vmem:[%s5 + $0x948] sm:$0xff]
  %v386 = vld [vmem:[%s5 + $0x950] sm:$0xff]
  %v387 = vld [vmem:[%s5 + $0x958] sm:$0xff]
  %v388 = vld [vmem:[%s5 + $0x960] sm:$0xff]
  %v389 = vld [vmem:[%s5 + $0x968] sm:$0xff]
  %v390 = vld [vmem:[%s5 + $0x970] sm:$0xff]
  %v391 = vld [vmem:[%s5 + $0x978] sm:$0xff]
  %v392 = vld [vmem:[%s5 + $0x980] sm:$0xf]
  %v393 = vld [vmem:[%s5 + $0x984] sm:$0xff]
  %v394 = vld [vmem:[%s5 + $0x98c] sm:$0xff]
  %v395 = vld [vmem:[%s5 + $0x994] sm:$0xff]
  %v396 = vld [vmem:[%s5 + $0x99c] sm:$0xff]
  %v397 = vld [vmem:[%s5 + $0x9a4] sm:$0xff]
  %v398 = vld [vmem:[%s5 + $0x9ac] sm:$0xff]
  %v399 = vld [vmem:[%s5 + $0x9b4] sm:$0xff]
  %v400 = vld [vmem:[%s5 + $0x9bc] sm:$0xff]
  %v401 = vld [vmem:[%s5 + $0x9c4] sm:$0xff]
  %v402 = vld [vmem:[%s5 + $0x9cc] sm:$0xff]
  %v403 = vld [vmem:[%s5 + $0x9d4] sm:$0xf]
  %v404 = vld [vmem:[%s5 + $0x9d8] sm:$0xff]
  %v405 = vld [vmem:[%s5 + $0x9e0] sm:$0xff]
  %v406 = vld [vmem:[%s5 + $0x9e8] sm:$0xff]
  %v407 = vld [vmem:[%s5 + $0x9f0] sm:$0xff]
  %v408 = vld [vmem:[%s5 + $0x9f8] sm:$0xff]
  %v409 = vld [vmem:[%s5 + $0xa00] sm:$0xff]
  %v410 = vld [vmem:[%s5 + $0xa08] sm:$0xff]
  %v411 = vld [vmem:[%s5 + $0xa10] sm:$0xff]
  %v412 = vld [vmem:[%s5 + $0xa18] sm:$0xff]
  %v413 = vld [vmem:[%s5 + $0xa20] sm:$0xff]
  %v414 = vld [vmem:[%s5 + $0xa28] sm:$0xf]
  %v415 = vld [vmem:[%s5 + $0xa2c] sm:$0xff]
  %v416 = vld [vmem:[%s5 + $0xa34] sm:$0xff]
  %v417 = vld [vmem:[%s5 + $0xa3c] sm:$0xff]
  %v418 = vld [vmem:[%s5 + $0xa44] sm:$0xff]
  %v419 = vld [vmem:[%s5 + $0xa4c] sm:$0xff]
  %v420 = vld [vmem:[%s5 + $0xa54] sm:$0xff]
  %v421 = vld [vmem:[%s5 + $0xa5c] sm:$0xff]
  %v422 = vld [vmem:[%s5 + $0xa64] sm:$0xff]
  %v423 = vld [vmem:[%s5 + $0xa6c] sm:$0xff]
  %v424 = vld [vmem:[%s5 + $0xa74] sm:$0xff]
  %v425 = vld [vmem:[%s5 + $0xa7c] sm:$0xf]
  %v426 = vunpack.c.l.bf16 %v74
  %v427 = vunpack.c.h.bf16 %v74
  %v428 = vunpack.c.l.bf16 %v75
  %v429 = vunpack.c.h.bf16 %v75
  %v430 = vunpack.c.l.bf16 %v76
  %v431 = vunpack.c.h.bf16 %v76
  %v432 = vunpack.c.l.bf16 %v77
  %v433 = vunpack.c.h.bf16 %v77
  %v434 = vunpack.c.l.bf16 %v78
  %v435 = vunpack.c.h.bf16 %v78
  %v436 = vunpack.c.l.bf16 %v79
  %v437 = vunpack.c.h.bf16 %v79
  %v438 = vunpack.c.l.bf16 %v80
  %v439 = vunpack.c.h.bf16 %v80
  %v440 = vunpack.c.l.bf16 %v81
  %v441 = vunpack.c.h.bf16 %v81
  %v442 = vunpack.c.l.bf16 %v82
  %v443 = vunpack.c.h.bf16 %v82
  %v444 = vunpack.c.l.bf16 %v83
  %v445 = vunpack.c.h.bf16 %v83
  %v446 = vunpack.c.l.bf16 %v84
  %v447 = vunpack.c.l.bf16 %v85
  %v448 = vunpack.c.h.bf16 %v85
  %v449 = vunpack.c.l.bf16 %v86
  %v450 = vunpack.c.h.bf16 %v86
  %v451 = vunpack.c.l.bf16 %v87
  %v452 = vunpack.c.h.bf16 %v87
  %v453 = vunpack.c.l.bf16 %v88
  %v454 = vunpack.c.h.bf16 %v88
  %v455 = vunpack.c.l.bf16 %v89
  %v456 = vunpack.c.h.bf16 %v89
  %v457 = vunpack.c.l.bf16 %v90
  %v458 = vunpack.c.h.bf16 %v90
  %v459 = vunpack.c.l.bf16 %v91
  %v460 = vunpack.c.h.bf16 %v91
  %v461 = vunpack.c.l.bf16 %v92
  %v462 = vunpack.c.h.bf16 %v92
  %v463 = vunpack.c.l.bf16 %v93
  %v464 = vunpack.c.h.bf16 %v93
  %v465 = vunpack.c.l.bf16 %v94
  %v466 = vunpack.c.h.bf16 %v94
  %v467 = vunpack.c.l.bf16 %v95
  %v468 = vunpack.c.l.bf16 %v96
  %v469 = vunpack.c.h.bf16 %v96
  %v470 = vunpack.c.l.bf16 %v97
  %v471 = vunpack.c.h.bf16 %v97
  %v472 = vunpack.c.l.bf16 %v98
  %v473 = vunpack.c.h.bf16 %v98
  %v474 = vunpack.c.l.bf16 %v99
  %v475 = vunpack.c.h.bf16 %v99
  %v476 = vunpack.c.l.bf16 %v100
  %v477 = vunpack.c.h.bf16 %v100
  %v478 = vunpack.c.l.bf16 %v101
  %v479 = vunpack.c.h.bf16 %v101
  %v480 = vunpack.c.l.bf16 %v102
  %v481 = vunpack.c.h.bf16 %v102
  %v482 = vunpack.c.l.bf16 %v103
  %v483 = vunpack.c.h.bf16 %v103
  %v484 = vunpack.c.l.bf16 %v104
  %v485 = vunpack.c.h.bf16 %v104
  %v486 = vunpack.c.l.bf16 %v105
  %v487 = vunpack.c.h.bf16 %v105
  %v488 = vunpack.c.l.bf16 %v106
  %v489 = vunpack.c.l.bf16 %v107
  %v490 = vunpack.c.h.bf16 %v107
  %v491 = vunpack.c.l.bf16 %v108
  %v492 = vunpack.c.h.bf16 %v108
  %v493 = vunpack.c.l.bf16 %v109
  %v494 = vunpack.c.h.bf16 %v109
  %v495 = vunpack.c.l.bf16 %v110
  %v496 = vunpack.c.h.bf16 %v110
  %v497 = vunpack.c.l.bf16 %v111
  %v498 = vunpack.c.h.bf16 %v111
  %v499 = vunpack.c.l.bf16 %v112
  %v500 = vunpack.c.h.bf16 %v112
  %v501 = vunpack.c.l.bf16 %v113
  %v502 = vunpack.c.h.bf16 %v113
  %v503 = vunpack.c.l.bf16 %v114
  %v504 = vunpack.c.h.bf16 %v114
  %v505 = vunpack.c.l.bf16 %v115
  %v506 = vunpack.c.h.bf16 %v115
  %v507 = vunpack.c.l.bf16 %v116
  %v508 = vunpack.c.h.bf16 %v116
  %v509 = vunpack.c.l.bf16 %v117
  %v510 = vunpack.c.l.bf16 %v118
  %v511 = vunpack.c.h.bf16 %v118
  %v512 = vunpack.c.l.bf16 %v119
  %v513 = vunpack.c.h.bf16 %v119
  %v514 = vunpack.c.l.bf16 %v120
  %v515 = vunpack.c.h.bf16 %v120
  %v516 = vunpack.c.l.bf16 %v121
  %v517 = vunpack.c.h.bf16 %v121
  %v518 = vunpack.c.l.bf16 %v122
  %v519 = vunpack.c.h.bf16 %v122
  %v520 = vunpack.c.l.bf16 %v123
  %v521 = vunpack.c.h.bf16 %v123
  %v522 = vunpack.c.l.bf16 %v124
  %v523 = vunpack.c.h.bf16 %v124
  %v524 = vunpack.c.l.bf16 %v125
  %v525 = vunpack.c.h.bf16 %v125
  %v526 = vunpack.c.l.bf16 %v126
  %v527 = vunpack.c.h.bf16 %v126
  %v528 = vunpack.c.l.bf16 %v127
  %v529 = vunpack.c.h.bf16 %v127
  %v530 = vunpack.c.l.bf16 %v128
  %v531 = vunpack.c.l.bf16 %v129
  %v532 = vunpack.c.h.bf16 %v129
  %v533 = vunpack.c.l.bf16 %v130
  %v534 = vunpack.c.h.bf16 %v130
  %v535 = vunpack.c.l.bf16 %v131
  %v536 = vunpack.c.h.bf16 %v131
  %v537 = vunpack.c.l.bf16 %v132
  %v538 = vunpack.c.h.bf16 %v132
  %v539 = vunpack.c.l.bf16 %v133
  %v540 = vunpack.c.h.bf16 %v133
  %v541 = vunpack.c.l.bf16 %v134
  %v542 = vunpack.c.h.bf16 %v134
  %v543 = vunpack.c.l.bf16 %v135
  %v544 = vunpack.c.h.bf16 %v135
  %v545 = vunpack.c.l.bf16 %v136
  %v546 = vunpack.c.h.bf16 %v136
  %v547 = vunpack.c.l.bf16 %v137
  %v548 = vunpack.c.h.bf16 %v137
  %v549 = vunpack.c.l.bf16 %v138
  %v550 = vunpack.c.h.bf16 %v138
  %v551 = vunpack.c.l.bf16 %v139
  %v552 = vunpack.c.l.bf16 %v140
  %v553 = vunpack.c.h.bf16 %v140
  %v554 = vunpack.c.l.bf16 %v141
  %v555 = vunpack.c.h.bf16 %v141
  %v556 = vunpack.c.l.bf16 %v142
  %v557 = vunpack.c.h.bf16 %v142
  %v558 = vunpack.c.l.bf16 %v143
  %v559 = vunpack.c.h.bf16 %v143
  %v560 = vunpack.c.l.bf16 %v144
  %v561 = vunpack.c.h.bf16 %v144
  %v562 = vunpack.c.l.bf16 %v145
  %v563 = vunpack.c.h.bf16 %v145
  %v564 = vunpack.c.l.bf16 %v146
  %v565 = vunpack.c.h.bf16 %v146
  %v566 = vunpack.c.l.bf16 %v147
  %v567 = vunpack.c.h.bf16 %v147
  %v568 = vunpack.c.l.bf16 %v148
  %v569 = vunpack.c.h.bf16 %v148
  %v570 = vunpack.c.l.bf16 %v149
  %v571 = vunpack.c.h.bf16 %v149
  %v572 = vunpack.c.l.bf16 %v150
  %v573 = vunpack.c.l.bf16 %v151
  %v574 = vunpack.c.h.bf16 %v151
  %v575 = vunpack.c.l.bf16 %v152
  %v576 = vunpack.c.h.bf16 %v152
  %v577 = vunpack.c.l.bf16 %v153
  %v578 = vunpack.c.h.bf16 %v153
  %v579 = vunpack.c.l.bf16 %v154
  %v580 = vunpack.c.h.bf16 %v154
  %v581 = vunpack.c.l.bf16 %v155
  %v582 = vunpack.c.h.bf16 %v155
  %v583 = vunpack.c.l.bf16 %v156
  %v584 = vunpack.c.h.bf16 %v156
  %v585 = vunpack.c.l.bf16 %v157
  %v586 = vunpack.c.h.bf16 %v157
  %v587 = vunpack.c.l.bf16 %v158
  %v588 = vunpack.c.h.bf16 %v158
  %v589 = vunpack.c.l.bf16 %v159
  %v590 = vunpack.c.h.bf16 %v159
  %v591 = vunpack.c.l.bf16 %v160
  %v592 = vunpack.c.h.bf16 %v160
  %v593 = vunpack.c.l.bf16 %v161
  %v594 = vunpack.c.l.bf16 %v162
  %v595 = vunpack.c.h.bf16 %v162
  %v596 = vunpack.c.l.bf16 %v163
  %v597 = vunpack.c.h.bf16 %v163
  %v598 = vunpack.c.l.bf16 %v164
  %v599 = vunpack.c.h.bf16 %v164
  %v600 = vunpack.c.l.bf16 %v165
  %v601 = vunpack.c.h.bf16 %v165
  %v602 = vunpack.c.l.bf16 %v166
  %v603 = vunpack.c.h.bf16 %v166
  %v604 = vunpack.c.l.bf16 %v167
  %v605 = vunpack.c.h.bf16 %v167
  %v606 = vunpack.c.l.bf16 %v168
  %v607 = vunpack.c.h.bf16 %v168
  %v608 = vunpack.c.l.bf16 %v169
  %v609 = vunpack.c.h.bf16 %v169
  %v610 = vunpack.c.l.bf16 %v170
  %v611 = vunpack.c.h.bf16 %v170
  %v612 = vunpack.c.l.bf16 %v171
  %v613 = vunpack.c.h.bf16 %v171
  %v614 = vunpack.c.l.bf16 %v172
  %v615 = vunpack.c.l.bf16 %v173
  %v616 = vunpack.c.h.bf16 %v173
  %v617 = vunpack.c.l.bf16 %v174
  %v618 = vunpack.c.h.bf16 %v174
  %v619 = vunpack.c.l.bf16 %v175
  %v620 = vunpack.c.h.bf16 %v175
  %v621 = vunpack.c.l.bf16 %v176
  %v622 = vunpack.c.h.bf16 %v176
  %v623 = vunpack.c.l.bf16 %v177
  %v624 = vunpack.c.h.bf16 %v177
  %v625 = vunpack.c.l.bf16 %v178
  %v626 = vunpack.c.h.bf16 %v178
  %v627 = vunpack.c.l.bf16 %v179
  %v628 = vunpack.c.h.bf16 %v179
  %v629 = vunpack.c.l.bf16 %v180
  %v630 = vunpack.c.h.bf16 %v180
  %v631 = vunpack.c.l.bf16 %v181
  %v632 = vunpack.c.h.bf16 %v181
  %v633 = vunpack.c.l.bf16 %v182
  %v634 = vunpack.c.h.bf16 %v182
  %v635 = vunpack.c.l.bf16 %v183
  %v636 = vunpack.c.l.bf16 %v184
  %v637 = vunpack.c.h.bf16 %v184
  %v638 = vunpack.c.l.bf16 %v185
  %v639 = vunpack.c.h.bf16 %v185
  %v640 = vunpack.c.l.bf16 %v186
  %v641 = vunpack.c.h.bf16 %v186
  %v642 = vunpack.c.l.bf16 %v187
  %v643 = vunpack.c.h.bf16 %v187
  %v644 = vunpack.c.l.bf16 %v188
  %v645 = vunpack.c.h.bf16 %v188
  %v646 = vunpack.c.l.bf16 %v189
  %v647 = vunpack.c.h.bf16 %v189
  %v648 = vunpack.c.l.bf16 %v190
  %v649 = vunpack.c.h.bf16 %v190
  %v650 = vunpack.c.l.bf16 %v191
  %v651 = vunpack.c.h.bf16 %v191
  %v652 = vunpack.c.l.bf16 %v192
  %v653 = vunpack.c.h.bf16 %v192
  %v654 = vunpack.c.l.bf16 %v193
  %v655 = vunpack.c.h.bf16 %v193
  %v656 = vunpack.c.l.bf16 %v194
  %v657 = vunpack.c.l.bf16 %v195
  %v658 = vunpack.c.h.bf16 %v195
  %v659 = vunpack.c.l.bf16 %v196
  %v660 = vunpack.c.h.bf16 %v196
  %v661 = vunpack.c.l.bf16 %v197
  %v662 = vunpack.c.h.bf16 %v197
  %v663 = vunpack.c.l.bf16 %v198
  %v664 = vunpack.c.h.bf16 %v198
  %v665 = vunpack.c.l.bf16 %v199
  %v666 = vunpack.c.h.bf16 %v199
  %v667 = vunpack.c.l.bf16 %v200
  %v668 = vunpack.c.h.bf16 %v200
  %v669 = vunpack.c.l.bf16 %v201
  %v670 = vunpack.c.h.bf16 %v201
  %v671 = vunpack.c.l.bf16 %v202
  %v672 = vunpack.c.h.bf16 %v202
  %v673 = vunpack.c.l.bf16 %v203
  %v674 = vunpack.c.h.bf16 %v203
  %v675 = vunpack.c.l.bf16 %v204
  %v676 = vunpack.c.h.bf16 %v204
  %v677 = vunpack.c.l.bf16 %v205
  %v678 = vunpack.c.l.bf16 %v206
  %v679 = vunpack.c.h.bf16 %v206
  %v680 = vunpack.c.l.bf16 %v207
  %v681 = vunpack.c.h.bf16 %v207
  %v682 = vunpack.c.l.bf16 %v208
  %v683 = vunpack.c.h.bf16 %v208
  %v684 = vunpack.c.l.bf16 %v209
  %v685 = vunpack.c.h.bf16 %v209
  %v686 = vunpack.c.l.bf16 %v210
  %v687 = vunpack.c.h.bf16 %v210
  %v688 = vunpack.c.l.bf16 %v211
  %v689 = vunpack.c.h.bf16 %v211
  %v690 = vunpack.c.l.bf16 %v212
  %v691 = vunpack.c.h.bf16 %v212
  %v692 = vunpack.c.l.bf16 %v213
  %v693 = vunpack.c.h.bf16 %v213
  %v694 = vunpack.c.l.bf16 %v214
  %v695 = vunpack.c.h.bf16 %v214
  %v696 = vunpack.c.l.bf16 %v215
  %v697 = vunpack.c.h.bf16 %v215
  %v698 = vunpack.c.l.bf16 %v216
  %v699 = vunpack.c.l.bf16 %v217
  %v700 = vunpack.c.h.bf16 %v217
  %v701 = vunpack.c.l.bf16 %v218
  %v702 = vunpack.c.h.bf16 %v218
  %v703 = vunpack.c.l.bf16 %v219
  %v704 = vunpack.c.h.bf16 %v219
  %v705 = vunpack.c.l.bf16 %v220
  %v706 = vunpack.c.h.bf16 %v220
  %v707 = vunpack.c.l.bf16 %v221
  %v708 = vunpack.c.h.bf16 %v221
  %v709 = vunpack.c.l.bf16 %v222
  %v710 = vunpack.c.h.bf16 %v222
  %v711 = vunpack.c.l.bf16 %v223
  %v712 = vunpack.c.h.bf16 %v223
  %v713 = vunpack.c.l.bf16 %v224
  %v714 = vunpack.c.h.bf16 %v224
  %v715 = vunpack.c.l.bf16 %v225
  %v716 = vunpack.c.h.bf16 %v225
  %v717 = vunpack.c.l.bf16 %v226
  %v718 = vunpack.c.h.bf16 %v226
  %v719 = vunpack.c.l.bf16 %v227
  %v720 = vunpack.c.l.bf16 %v228
  %v721 = vunpack.c.h.bf16 %v228
  %v722 = vunpack.c.l.bf16 %v229
  %v723 = vunpack.c.h.bf16 %v229
  %v724 = vunpack.c.l.bf16 %v230
  %v725 = vunpack.c.h.bf16 %v230
  %v726 = vunpack.c.l.bf16 %v231
  %v727 = vunpack.c.h.bf16 %v231
  %v728 = vunpack.c.l.bf16 %v232
  %v729 = vunpack.c.h.bf16 %v232
  %v730 = vunpack.c.l.bf16 %v233
  %v731 = vunpack.c.h.bf16 %v233
  %v732 = vunpack.c.l.bf16 %v234
  %v733 = vunpack.c.h.bf16 %v234
  %v734 = vunpack.c.l.bf16 %v235
  %v735 = vunpack.c.h.bf16 %v235
  %v736 = vunpack.c.l.bf16 %v236
  %v737 = vunpack.c.h.bf16 %v236
  %v738 = vunpack.c.l.bf16 %v237
  %v739 = vunpack.c.h.bf16 %v237
  %v740 = vunpack.c.l.bf16 %v238
  %v741 = vunpack.c.l.bf16 %v239
  %v742 = vunpack.c.h.bf16 %v239
  %v743 = vunpack.c.l.bf16 %v240
  %v744 = vunpack.c.h.bf16 %v240
  %v745 = vunpack.c.l.bf16 %v241
  %v746 = vunpack.c.h.bf16 %v241
  %v747 = vunpack.c.l.bf16 %v242
  %v748 = vunpack.c.h.bf16 %v242
  %v749 = vunpack.c.l.bf16 %v243
  %v750 = vunpack.c.h.bf16 %v243
  %v751 = vunpack.c.l.bf16 %v244
  %v752 = vunpack.c.h.bf16 %v244
  %v753 = vunpack.c.l.bf16 %v245
  %v754 = vunpack.c.h.bf16 %v245
  %v755 = vunpack.c.l.bf16 %v246
  %v756 = vunpack.c.h.bf16 %v246
  %v757 = vunpack.c.l.bf16 %v247
  %v758 = vunpack.c.h.bf16 %v247
  %v759 = vunpack.c.l.bf16 %v248
  %v760 = vunpack.c.h.bf16 %v248
  %v761 = vunpack.c.l.bf16 %v249
  %v762 = vunpack.c.l.bf16 %v250
  %v763 = vunpack.c.h.bf16 %v250
  %v764 = vunpack.c.l.bf16 %v251
  %v765 = vunpack.c.h.bf16 %v251
  %v766 = vunpack.c.l.bf16 %v252
  %v767 = vunpack.c.h.bf16 %v252
  %v768 = vunpack.c.l.bf16 %v253
  %v769 = vunpack.c.h.bf16 %v253
  %v770 = vunpack.c.l.bf16 %v254
  %v771 = vunpack.c.h.bf16 %v254
  %v772 = vunpack.c.l.bf16 %v255
  %v773 = vunpack.c.h.bf16 %v255
  %v774 = vunpack.c.l.bf16 %v256
  %v775 = vunpack.c.h.bf16 %v256
  %v776 = vunpack.c.l.bf16 %v257
  %v777 = vunpack.c.h.bf16 %v257
  %v778 = vunpack.c.l.bf16 %v258
  %v779 = vunpack.c.h.bf16 %v258
  %v780 = vunpack.c.l.bf16 %v259
  %v781 = vunpack.c.h.bf16 %v259
  %v782 = vunpack.c.l.bf16 %v260
  %v783 = vunpack.c.l.bf16 %v261
  %v784 = vunpack.c.h.bf16 %v261
  %v785 = vunpack.c.l.bf16 %v262
  %v786 = vunpack.c.h.bf16 %v262
  %v787 = vunpack.c.l.bf16 %v263
  %v788 = vunpack.c.h.bf16 %v263
  %v789 = vunpack.c.l.bf16 %v264
  %v790 = vunpack.c.h.bf16 %v264
  %v791 = vunpack.c.l.bf16 %v265
  %v792 = vunpack.c.h.bf16 %v265
  %v793 = vunpack.c.l.bf16 %v266
  %v794 = vunpack.c.h.bf16 %v266
  %v795 = vunpack.c.l.bf16 %v267
  %v796 = vunpack.c.h.bf16 %v267
  %v797 = vunpack.c.l.bf16 %v268
  %v798 = vunpack.c.h.bf16 %v268
  %v799 = vunpack.c.l.bf16 %v269
  %v800 = vunpack.c.h.bf16 %v269
  %v801 = vunpack.c.l.bf16 %v270
  %v802 = vunpack.c.h.bf16 %v270
  %v803 = vunpack.c.l.bf16 %v271
  %v804 = vunpack.c.l.bf16 %v272
  %v805 = vunpack.c.h.bf16 %v272
  %v806 = vunpack.c.l.bf16 %v273
  %v807 = vunpack.c.h.bf16 %v273
  %v808 = vunpack.c.l.bf16 %v274
  %v809 = vunpack.c.h.bf16 %v274
  %v810 = vunpack.c.l.bf16 %v275
  %v811 = vunpack.c.h.bf16 %v275
  %v812 = vunpack.c.l.bf16 %v276
  %v813 = vunpack.c.h.bf16 %v276
  %v814 = vunpack.c.l.bf16 %v277
  %v815 = vunpack.c.h.bf16 %v277
  %v816 = vunpack.c.l.bf16 %v278
  %v817 = vunpack.c.h.bf16 %v278
  %v818 = vunpack.c.l.bf16 %v279
  %v819 = vunpack.c.h.bf16 %v279
  %v820 = vunpack.c.l.bf16 %v280
  %v821 = vunpack.c.h.bf16 %v280
  %v822 = vunpack.c.l.bf16 %v281
  %v823 = vunpack.c.h.bf16 %v281
  %v824 = vunpack.c.l.bf16 %v282
  %v825 = vunpack.c.l.bf16 %v283
  %v826 = vunpack.c.h.bf16 %v283
  %v827 = vunpack.c.l.bf16 %v284
  %v828 = vunpack.c.h.bf16 %v284
  %v829 = vunpack.c.l.bf16 %v285
  %v830 = vunpack.c.h.bf16 %v285
  %v831 = vunpack.c.l.bf16 %v286
  %v832 = vunpack.c.h.bf16 %v286
  %v833 = vunpack.c.l.bf16 %v287
  %v834 = vunpack.c.h.bf16 %v287
  %v835 = vunpack.c.l.bf16 %v288
  %v836 = vunpack.c.h.bf16 %v288
  %v837 = vunpack.c.l.bf16 %v289
  %v838 = vunpack.c.h.bf16 %v289
  %v839 = vunpack.c.l.bf16 %v290
  %v840 = vunpack.c.h.bf16 %v290
  %v841 = vunpack.c.l.bf16 %v291
  %v842 = vunpack.c.h.bf16 %v291
  %v843 = vunpack.c.l.bf16 %v292
  %v844 = vunpack.c.h.bf16 %v292
  %v845 = vunpack.c.l.bf16 %v293
  %v846 = vunpack.c.l.bf16 %v294
  %v847 = vunpack.c.h.bf16 %v294
  %v848 = vunpack.c.l.bf16 %v295
  %v849 = vunpack.c.h.bf16 %v295
  %v850 = vunpack.c.l.bf16 %v296
  %v851 = vunpack.c.h.bf16 %v296
  %v852 = vunpack.c.l.bf16 %v297
  %v853 = vunpack.c.h.bf16 %v297
  %v854 = vunpack.c.l.bf16 %v298
  %v855 = vunpack.c.h.bf16 %v298
  %v856 = vunpack.c.l.bf16 %v299
  %v857 = vunpack.c.h.bf16 %v299
  %v858 = vunpack.c.l.bf16 %v300
  %v859 = vunpack.c.h.bf16 %v300
  %v860 = vunpack.c.l.bf16 %v301
  %v861 = vunpack.c.h.bf16 %v301
  %v862 = vunpack.c.l.bf16 %v302
  %v863 = vunpack.c.h.bf16 %v302
  %v864 = vunpack.c.l.bf16 %v303
  %v865 = vunpack.c.h.bf16 %v303
  %v866 = vunpack.c.l.bf16 %v304
  %v867 = vunpack.c.l.bf16 %v305
  %v868 = vunpack.c.h.bf16 %v305
  %v869 = vunpack.c.l.bf16 %v306
  %v870 = vunpack.c.h.bf16 %v306
  %v871 = vunpack.c.l.bf16 %v307
  %v872 = vunpack.c.h.bf16 %v307
  %v873 = vunpack.c.l.bf16 %v308
  %v874 = vunpack.c.h.bf16 %v308
  %v875 = vunpack.c.l.bf16 %v309
  %v876 = vunpack.c.h.bf16 %v309
  %v877 = vunpack.c.l.bf16 %v310
  %v878 = vunpack.c.h.bf16 %v310
  %v879 = vunpack.c.l.bf16 %v311
  %v880 = vunpack.c.h.bf16 %v311
  %v881 = vunpack.c.l.bf16 %v312
  %v882 = vunpack.c.h.bf16 %v312
  %v883 = vunpack.c.l.bf16 %v313
  %v884 = vunpack.c.h.bf16 %v313
  %v885 = vunpack.c.l.bf16 %v314
  %v886 = vunpack.c.h.bf16 %v314
  %v887 = vunpack.c.l.bf16 %v315
  %v888 = vunpack.c.l.bf16 %v316
  %v889 = vunpack.c.h.bf16 %v316
  %v890 = vunpack.c.l.bf16 %v317
  %v891 = vunpack.c.h.bf16 %v317
  %v892 = vunpack.c.l.bf16 %v318
  %v893 = vunpack.c.h.bf16 %v318
  %v894 = vunpack.c.l.bf16 %v319
  %v895 = vunpack.c.h.bf16 %v319
  %v896 = vunpack.c.l.bf16 %v320
  %v897 = vunpack.c.h.bf16 %v320
  %v898 = vunpack.c.l.bf16 %v321
  %v899 = vunpack.c.h.bf16 %v321
  %v900 = vunpack.c.l.bf16 %v322
  %v901 = vunpack.c.h.bf16 %v322
  %v902 = vunpack.c.l.bf16 %v323
  %v903 = vunpack.c.h.bf16 %v323
  %v904 = vunpack.c.l.bf16 %v324
  %v905 = vunpack.c.h.bf16 %v324
  %v906 = vunpack.c.l.bf16 %v325
  %v907 = vunpack.c.h.bf16 %v325
  %v908 = vunpack.c.l.bf16 %v326
  %v909 = vunpack.c.l.bf16 %v327
  %v910 = vunpack.c.h.bf16 %v327
  %v911 = vunpack.c.l.bf16 %v328
  %v912 = vunpack.c.h.bf16 %v328
  %v913 = vunpack.c.l.bf16 %v329
  %v914 = vunpack.c.h.bf16 %v329
  %v915 = vunpack.c.l.bf16 %v330
  %v916 = vunpack.c.h.bf16 %v330
  %v917 = vunpack.c.l.bf16 %v331
  %v918 = vunpack.c.h.bf16 %v331
  %v919 = vunpack.c.l.bf16 %v332
  %v920 = vunpack.c.h.bf16 %v332
  %v921 = vunpack.c.l.bf16 %v333
  %v922 = vunpack.c.h.bf16 %v333
  %v923 = vunpack.c.l.bf16 %v334
  %v924 = vunpack.c.h.bf16 %v334
  %v925 = vunpack.c.l.bf16 %v335
  %v926 = vunpack.c.h.bf16 %v335
  %v927 = vunpack.c.l.bf16 %v336
  %v928 = vunpack.c.h.bf16 %v336
  %v929 = vunpack.c.l.bf16 %v337
  %v930 = vunpack.c.l.bf16 %v338
  %v931 = vunpack.c.h.bf16 %v338
  %v932 = vunpack.c.l.bf16 %v339
  %v933 = vunpack.c.h.bf16 %v339
  %v934 = vunpack.c.l.bf16 %v340
  %v935 = vunpack.c.h.bf16 %v340
  %v936 = vunpack.c.l.bf16 %v341
  %v937 = vunpack.c.h.bf16 %v341
  %v938 = vunpack.c.l.bf16 %v342
  %v939 = vunpack.c.h.bf16 %v342
  %v940 = vunpack.c.l.bf16 %v343
  %v941 = vunpack.c.h.bf16 %v343
  %v942 = vunpack.c.l.bf16 %v344
  %v943 = vunpack.c.h.bf16 %v344
  %v944 = vunpack.c.l.bf16 %v345
  %v945 = vunpack.c.h.bf16 %v345
  %v946 = vunpack.c.l.bf16 %v346
  %v947 = vunpack.c.h.bf16 %v346
  %v948 = vunpack.c.l.bf16 %v347
  %v949 = vunpack.c.h.bf16 %v347
  %v950 = vunpack.c.l.bf16 %v348
  %v951 = vunpack.c.l.bf16 %v349
  %v952 = vunpack.c.h.bf16 %v349
  %v953 = vunpack.c.l.bf16 %v350
  %v954 = vunpack.c.h.bf16 %v350
  %v955 = vunpack.c.l.bf16 %v351
  %v956 = vunpack.c.h.bf16 %v351
  %v957 = vunpack.c.l.bf16 %v352
  %v958 = vunpack.c.h.bf16 %v352
  %v959 = vunpack.c.l.bf16 %v353
  %v960 = vunpack.c.h.bf16 %v353
  %v961 = vunpack.c.l.bf16 %v354
  %v962 = vunpack.c.h.bf16 %v354
  %v963 = vunpack.c.l.bf16 %v355
  %v964 = vunpack.c.h.bf16 %v355
  %v965 = vunpack.c.l.bf16 %v356
  %v966 = vunpack.c.h.bf16 %v356
  %v967 = vunpack.c.l.bf16 %v357
  %v968 = vunpack.c.h.bf16 %v357
  %v969 = vunpack.c.l.bf16 %v358
  %v970 = vunpack.c.h.bf16 %v358
  %v971 = vunpack.c.l.bf16 %v359
  %v972 = vunpack.c.l.bf16 %v360
  %v973 = vunpack.c.h.bf16 %v360
  %v974 = vunpack.c.l.bf16 %v361
  %v975 = vunpack.c.h.bf16 %v361
  %v976 = vunpack.c.l.bf16 %v362
  %v977 = vunpack.c.h.bf16 %v362
  %v978 = vunpack.c.l.bf16 %v363
  %v979 = vunpack.c.h.bf16 %v363
  %v980 = vunpack.c.l.bf16 %v364
  %v981 = vunpack.c.h.bf16 %v364
  %v982 = vunpack.c.l.bf16 %v365
  %v983 = vunpack.c.h.bf16 %v365
  %v984 = vunpack.c.l.bf16 %v366
  %v985 = vunpack.c.h.bf16 %v366
  %v986 = vunpack.c.l.bf16 %v367
  %v987 = vunpack.c.h.bf16 %v367
  %v988 = vunpack.c.l.bf16 %v368
  %v989 = vunpack.c.h.bf16 %v368
  %v990 = vunpack.c.l.bf16 %v369
  %v991 = vunpack.c.h.bf16 %v369
  %v992 = vunpack.c.l.bf16 %v370
  %v993 = vunpack.c.l.bf16 %v371
  %v994 = vunpack.c.h.bf16 %v371
  %v995 = vunpack.c.l.bf16 %v372
  %v996 = vunpack.c.h.bf16 %v372
  %v997 = vunpack.c.l.bf16 %v373
  %v998 = vunpack.c.h.bf16 %v373
  %v999 = vunpack.c.l.bf16 %v374
  %v1000 = vunpack.c.h.bf16 %v374
  %v1001 = vunpack.c.l.bf16 %v375
  %v1002 = vunpack.c.h.bf16 %v375
  %v1003 = vunpack.c.l.bf16 %v376
  %v1004 = vunpack.c.h.bf16 %v376
  %v1005 = vunpack.c.l.bf16 %v377
  %v1006 = vunpack.c.h.bf16 %v377
  %v1007 = vunpack.c.l.bf16 %v378
  %v1008 = vunpack.c.h.bf16 %v378
  %v1009 = vunpack.c.l.bf16 %v379
  %v1010 = vunpack.c.h.bf16 %v379
  %v1011 = vunpack.c.l.bf16 %v380
  %v1012 = vunpack.c.h.bf16 %v380
  %v1013 = vunpack.c.l.bf16 %v381
  %v1014 = vunpack.c.l.bf16 %v382
  %v1015 = vunpack.c.h.bf16 %v382
  %v1016 = vunpack.c.l.bf16 %v383
  %v1017 = vunpack.c.h.bf16 %v383
  %v1018 = vunpack.c.l.bf16 %v384
  %v1019 = vunpack.c.h.bf16 %v384
  %v1020 = vunpack.c.l.bf16 %v385
  %v1021 = vunpack.c.h.bf16 %v385
  %v1022 = vunpack.c.l.bf16 %v386
  %v1023 = vunpack.c.h.bf16 %v386
  %v1024 = vunpack.c.l.bf16 %v387
  %v1025 = vunpack.c.h.bf16 %v387
  %v1026 = vunpack.c.l.bf16 %v388
  %v1027 = vunpack.c.h.bf16 %v388
  %v1028 = vunpack.c.l.bf16 %v389
  %v1029 = vunpack.c.h.bf16 %v389
  %v1030 = vunpack.c.l.bf16 %v390
  %v1031 = vunpack.c.h.bf16 %v390
  %v1032 = vunpack.c.l.bf16 %v391
  %v1033 = vunpack.c.h.bf16 %v391
  %v1034 = vunpack.c.l.bf16 %v392
  %v1035 = vunpack.c.l.bf16 %v393
  %v1036 = vunpack.c.h.bf16 %v393
  %v1037 = vunpack.c.l.bf16 %v394
  %v1038 = vunpack.c.h.bf16 %v394
  %v1039 = vunpack.c.l.bf16 %v395
  %v1040 = vunpack.c.h.bf16 %v395
  %v1041 = vunpack.c.l.bf16 %v396
  %v1042 = vunpack.c.h.bf16 %v396
  %v1043 = vunpack.c.l.bf16 %v397
  %v1044 = vunpack.c.h.bf16 %v397
  %v1045 = vunpack.c.l.bf16 %v398
  %v1046 = vunpack.c.h.bf16 %v398
  %v1047 = vunpack.c.l.bf16 %v399
  %v1048 = vunpack.c.h.bf16 %v399
  %v1049 = vunpack.c.l.bf16 %v400
  %v1050 = vunpack.c.h.bf16 %v400
  %v1051 = vunpack.c.l.bf16 %v401
  %v1052 = vunpack.c.h.bf16 %v401
  %v1053 = vunpack.c.l.bf16 %v402
  %v1054 = vunpack.c.h.bf16 %v402
  %v1055 = vunpack.c.l.bf16 %v403
  %v1056 = vunpack.c.l.bf16 %v404
  %v1057 = vunpack.c.h.bf16 %v404
  %v1058 = vunpack.c.l.bf16 %v405
  %v1059 = vunpack.c.h.bf16 %v405
  %v1060 = vunpack.c.l.bf16 %v406
  %v1061 = vunpack.c.h.bf16 %v406
  %v1062 = vunpack.c.l.bf16 %v407
  %v1063 = vunpack.c.h.bf16 %v407
  %v1064 = vunpack.c.l.bf16 %v408
  %v1065 = vunpack.c.h.bf16 %v408
  %v1066 = vunpack.c.l.bf16 %v409
  %v1067 = vunpack.c.h.bf16 %v409
  %v1068 = vunpack.c.l.bf16 %v410
  %v1069 = vunpack.c.h.bf16 %v410
  %v1070 = vunpack.c.l.bf16 %v411
  %v1071 = vunpack.c.h.bf16 %v411
  %v1072 = vunpack.c.l.bf16 %v412
  %v1073 = vunpack.c.h.bf16 %v412
  %v1074 = vunpack.c.l.bf16 %v413
  %v1075 = vunpack.c.h.bf16 %v413
  %v1076 = vunpack.c.l.bf16 %v414
  %v1077 = vunpack.c.l.bf16 %v415
  %v1078 = vunpack.c.h.bf16 %v415
  %v1079 = vunpack.c.l.bf16 %v416
  %v1080 = vunpack.c.h.bf16 %v416
  %v1081 = vunpack.c.l.bf16 %v417
  %v1082 = vunpack.c.h.bf16 %v417
  %v1083 = vunpack.c.l.bf16 %v418
  %v1084 = vunpack.c.h.bf16 %v418
  %v1085 = vunpack.c.l.bf16 %v419
  %v1086 = vunpack.c.h.bf16 %v419
  %v1087 = vunpack.c.l.bf16 %v420
  %v1088 = vunpack.c.h.bf16 %v420
  %v1089 = vunpack.c.l.bf16 %v421
  %v1090 = vunpack.c.h.bf16 %v421
  %v1091 = vunpack.c.l.bf16 %v422
  %v1092 = vunpack.c.h.bf16 %v422
  %v1093 = vunpack.c.l.bf16 %v423
  %v1094 = vunpack.c.h.bf16 %v423
  %v1095 = vunpack.c.l.bf16 %v424
  %v1096 = vunpack.c.h.bf16 %v424
  %v1097 = vunpack.c.l.bf16 %v425
  %v1098 = vld [vmem:[%s6] sm:$0xff]
  %v1099 = vld [vmem:[%s6 + $0x8] sm:$0xff]
  %v1100 = vld [vmem:[%s6 + $0x10] sm:$0xff]
  %v1101 = vld [vmem:[%s6 + $0x18] sm:$0xff]
  %v1102 = vld [vmem:[%s6 + $0x20] sm:$0xff]
  %v1103 = vld [vmem:[%s6 + $0x28] sm:$0xff]
  %v1104 = vld [vmem:[%s6 + $0x30] sm:$0xff]
  %v1105 = vld [vmem:[%s6 + $0x38] sm:$0xff]
  %v1106 = vld [vmem:[%s6 + $0x40] sm:$0xff]
  %v1107 = vld [vmem:[%s6 + $0x48] sm:$0xff]
  %v1108 = vld [vmem:[%s6 + $0x50] sm:$0xff]
  %v1109 = vld [vmem:[%s6 + $0x58] sm:$0xff]
  %v1110 = vld [vmem:[%s6 + $0x60] sm:$0xff]
  %v1111 = vld [vmem:[%s6 + $0x68] sm:$0xff]
  %v1112 = vld [vmem:[%s6 + $0x70] sm:$0xff]
  %v1113 = vld [vmem:[%s6 + $0x78] sm:$0xff]
  %v1114 = vld [vmem:[%s6 + $0x80] sm:$0xff]
  %v1115 = vld [vmem:[%s6 + $0x88] sm:$0xff]
  %v1116 = vld [vmem:[%s6 + $0x90] sm:$0xff]
  %v1117 = vld [vmem:[%s6 + $0x98] sm:$0xff]
  %v1118 = vld [vmem:[%s6 + $0xa0] sm:$0xff]
  %v1119 = vld [vmem:[%s6 + $0xa8] sm:$0xff]
  %v1120 = vld [vmem:[%s6 + $0xb0] sm:$0xff]
  %v1121 = vld [vmem:[%s6 + $0xb8] sm:$0xff]
  %v1122 = vld [vmem:[%s6 + $0xc0] sm:$0xff]
  %v1123 = vld [vmem:[%s6 + $0xc8] sm:$0xff]
  %v1124 = vld [vmem:[%s6 + $0xd0] sm:$0xff]
  %v1125 = vld [vmem:[%s6 + $0xd8] sm:$0xff]
  %v1126 = vld [vmem:[%s6 + $0xe0] sm:$0xff]
  %v1127 = vld [vmem:[%s6 + $0xe8] sm:$0xff]
  %v1128 = vld [vmem:[%s6 + $0xf0] sm:$0xff]
  %v1129 = vld [vmem:[%s6 + $0xf8] sm:$0xff]
  %v1130 = vunpack.c.l.bf16 %v1098
  %v1131 = vunpack.c.h.bf16 %v1098
  %v1132 = vunpack.c.l.bf16 %v1099
  %v1133 = vunpack.c.h.bf16 %v1099
  %v1134 = vunpack.c.l.bf16 %v1100
  %v1135 = vunpack.c.h.bf16 %v1100
  %v1136 = vunpack.c.l.bf16 %v1101
  %v1137 = vunpack.c.h.bf16 %v1101
  %v1138 = vunpack.c.l.bf16 %v1102
  %v1139 = vunpack.c.h.bf16 %v1102
  %v1140 = vunpack.c.l.bf16 %v1103
  %v1141 = vunpack.c.h.bf16 %v1103
  %v1142 = vunpack.c.l.bf16 %v1104
  %v1143 = vunpack.c.h.bf16 %v1104
  %v1144 = vunpack.c.l.bf16 %v1105
  %v1145 = vunpack.c.h.bf16 %v1105
  %v1146 = vunpack.c.l.bf16 %v1106
  %v1147 = vunpack.c.h.bf16 %v1106
  %v1148 = vunpack.c.l.bf16 %v1107
  %v1149 = vunpack.c.h.bf16 %v1107
  %v1150 = vunpack.c.l.bf16 %v1108
  %v1151 = vunpack.c.h.bf16 %v1108
  %v1152 = vunpack.c.l.bf16 %v1109
  %v1153 = vunpack.c.h.bf16 %v1109
  %v1154 = vunpack.c.l.bf16 %v1110
  %v1155 = vunpack.c.h.bf16 %v1110
  %v1156 = vunpack.c.l.bf16 %v1111
  %v1157 = vunpack.c.h.bf16 %v1111
  %v1158 = vunpack.c.l.bf16 %v1112
  %v1159 = vunpack.c.h.bf16 %v1112
  %v1160 = vunpack.c.l.bf16 %v1113
  %v1161 = vunpack.c.h.bf16 %v1113
  %v1162 = vunpack.c.l.bf16 %v1114
  %v1163 = vunpack.c.h.bf16 %v1114
  %v1164 = vunpack.c.l.bf16 %v1115
  %v1165 = vunpack.c.h.bf16 %v1115
  %v1166 = vunpack.c.l.bf16 %v1116
  %v1167 = vunpack.c.h.bf16 %v1116
  %v1168 = vunpack.c.l.bf16 %v1117
  %v1169 = vunpack.c.h.bf16 %v1117
  %v1170 = vunpack.c.l.bf16 %v1118
  %v1171 = vunpack.c.h.bf16 %v1118
  %v1172 = vunpack.c.l.bf16 %v1119
  %v1173 = vunpack.c.h.bf16 %v1119
  %v1174 = vunpack.c.l.bf16 %v1120
  %v1175 = vunpack.c.h.bf16 %v1120
  %v1176 = vunpack.c.l.bf16 %v1121
  %v1177 = vunpack.c.h.bf16 %v1121
  %v1178 = vunpack.c.l.bf16 %v1122
  %v1179 = vunpack.c.h.bf16 %v1122
  %v1180 = vunpack.c.l.bf16 %v1123
  %v1181 = vunpack.c.h.bf16 %v1123
  %v1182 = vunpack.c.l.bf16 %v1124
  %v1183 = vunpack.c.h.bf16 %v1124
  %v1184 = vunpack.c.l.bf16 %v1125
  %v1185 = vunpack.c.h.bf16 %v1125
  %v1186 = vunpack.c.l.bf16 %v1126
  %v1187 = vunpack.c.h.bf16 %v1126
  %v1188 = vunpack.c.l.bf16 %v1127
  %v1189 = vunpack.c.h.bf16 %v1127
  %v1190 = vunpack.c.l.bf16 %v1128
  %v1191 = vunpack.c.h.bf16 %v1128
  %v1192 = vunpack.c.l.bf16 %v1129
  %v1193 = vunpack.c.h.bf16 %v1129
  %v1194 = vlaneseq
  %v1195 = vshrl.u32 %v1194, 7
  %v1196 = vsub.s32 4, %v1195
  %v1197 = vrot.slane %v36, %v1196
  %v1198 = vlaneseq
  %v1199 = vshrl.u32 %v1198, 7
  %v1200 = vsub.s32 4, %v1199
  %v1201 = vrot.slane %v37, %v1200
  %vm1202 = vcmask 130048
  %v1204 = vsel %vm1202, %v26, 0
  %1206 = vmatprep.subr.mxu0 0.0
  %1207 = vmatpush1.msra.mxu0 0.0
  %1208 = vmatprep.subr.mxu0 0.0
  %1209 = vmatpush1.msra.mxu0 0.0
  %1210 = vmatprep.subr.mxu0 0.0
  %1211 = vmatpush1.msra.mxu0 0.0
  %1212 = vmatprep.subr.mxu0 0.0
  %1213 = vmatpush1.msra.mxu0 0.0
  %1214 = vmatprep.subr.mxu0 0.0
  %1215 = vmatpush1.msra.mxu0 0.0
  %1216 = vmatprep.subr.mxu0 0.0
  %1217 = vmatpush1.msra.mxu0 0.0
  %1218 = vmatprep.subr.mxu0 0.0
  %1219 = vmatpush1.msra.mxu0 0.0
  %1220 = vmatprep.subr.mxu0 0.0
  %1221 = vmatpush1.msra.mxu0 0.0
  %1222 = vmatprep.subr.mxu0 0.0
  %1223 = vmatpush1.msra.mxu0 0.0
  %1224 = vmatprep.subr.mxu0 0.0
  %1225 = vmatpush1.msra.mxu0 0.0
  %1226 = vmatprep.subr.mxu0 0.0
  %1227 = vmatpush1.msra.mxu0 0.0
  %1228 = vmatprep.subr.mxu0 0.0
  %1229 = vmatpush1.msra.mxu0 0.0
  %1230 = vmatprep.subr.mxu0 0.0
  %1231 = vmatpush1.msra.mxu0 0.0
  %1232 = vmatprep.subr.mxu0 0.0
  %1233 = vmatpush1.msra.mxu0 0.0
  %1234 = vmatprep.subr.mxu0 %v73
  %1235 = vmatpush1.msra.mxu0 %v72
  %1236 = vmatprep.subr.mxu0 %v63
  %1237 = vmatpush1.msra.mxu0 %v62
  %1238 = vmatprep.subr.mxu0 0.0
  %1239 = vmatpush2.msra.mxu0 0.0
  %1240 = vmatprep.subr.mxu0 0.0
  %1241 = vmatpush2.msra.mxu0 0.0
  %1242 = vmatprep.subr.mxu0 0.0
  %1243 = vmatpush2.msra.mxu0 0.0
  %1244 = vmatprep.subr.mxu0 0.0
  %1245 = vmatpush2.msra.mxu0 0.0
  %1246 = vmatprep.subr.mxu0 0.0
  %1247 = vmatpush2.msra.mxu0 0.0
  %1248 = vmatprep.subr.mxu0 0.0
  %1249 = vmatpush2.msra.mxu0 0.0
  %1250 = vmatprep.subr.mxu0 0.0
  %1251 = vmatpush2.msra.mxu0 0.0
  %1252 = vmatprep.subr.mxu0 0.0
  %1253 = vmatpush2.msra.mxu0 0.0
  %1254 = vmatprep.subr.mxu0 0.0
  %1255 = vmatpush2.msra.mxu0 0.0
  %1256 = vmatprep.subr.mxu0 0.0
  %1257 = vmatpush2.msra.mxu0 0.0
  %1258 = vmatprep.subr.mxu0 0.0
  %1259 = vmatpush2.msra.mxu0 0.0
  %1260 = vmatprep.subr.mxu0 0.0
  %1261 = vmatpush2.msra.mxu0 0.0
  %1262 = vmatprep.subr.mxu0 0.0
  %1263 = vmatpush2.msra.mxu0 0.0
  %1264 = vmatprep.subr.mxu0 0.0
  %1265 = vmatpush2.msra.mxu0 0.0
  %1266 = vmatprep.subr.mxu0 0.0
  %1267 = vmatpush2.msra.mxu0 0.0
  %1268 = vmatprep.subr.mxu0 0.0
  %1269 = vmatpush2.msra.mxu0 0.0
  %1270 = vmatprep.mubr.f32.mxu0 0.0
  %1271 = vmatmul.mubr.f32.gmra.mxu0 %v1204
  %v1272 = vpop.f32.mrf.mxu0
  %v1273 = vadd.f32 %v1197, %v1272
  %v1274 = vpop.f32.mrf.mxu0
  %v1275 = vadd.f32 %v1201, %v1274
  %1276 = vdwg.mxu0
  %1277 = vmatprep.subr.mxu0 0.0
  %1278 = vmatpush1.msra.mxu0 0.0
  %1279 = vmatprep.subr.mxu0 0.0
  %1280 = vmatpush1.msra.mxu0 0.0
  %1281 = vmatprep.subr.mxu0 0.0
  %1282 = vmatpush1.msra.mxu0 0.0
  %1283 = vmatprep.subr.mxu0 0.0
  %1284 = vmatpush1.msra.mxu0 0.0
  %1285 = vmatprep.subr.mxu0 0.0
  %1286 = vmatpush1.msra.mxu0 0.0
  %1287 = vmatprep.subr.mxu0 0.0
  %1288 = vmatpush1.msra.mxu0 0.0
  %1289 = vmatprep.subr.mxu0 0.0
  %1290 = vmatpush1.msra.mxu0 0.0
  %1291 = vmatprep.subr.mxu0 0.0
  %1292 = vmatpush1.msra.mxu0 0.0
  %1293 = vmatprep.subr.mxu0 0.0
  %1294 = vmatpush1.msra.mxu0 0.0
  %1295 = vmatprep.subr.mxu0 0.0
  %1296 = vmatpush1.msra.mxu0 0.0
  %1297 = vmatprep.subr.mxu0 0.0
  %1298 = vmatpush1.msra.mxu0 0.0
  %1299 = vmatprep.subr.mxu0 0.0
  %1300 = vmatpush1.msra.mxu0 0.0
  %1301 = vmatprep.subr.mxu0 0.0
  %1302 = vmatpush1.msra.mxu0 0.0
  %1303 = vmatprep.subr.mxu0 0.0
  %1304 = vmatpush1.msra.mxu0 0.0
  %1305 = vmatprep.subr.mxu0 %v65
  %1306 = vmatpush1.msra.mxu0 %v64
  %1307 = vmatprep.subr.mxu0 %v55
  %1308 = vmatpush1.msra.mxu0 %v54
  %1309 = vmatprep.subr.mxu0 0.0
  %1310 = vmatpush2.msra.mxu0 0.0
  %1311 = vmatprep.subr.mxu0 0.0
  %1312 = vmatpush2.msra.mxu0 0.0
  %1313 = vmatprep.subr.mxu0 0.0
  %1314 = vmatpush2.msra.mxu0 0.0
  %1315 = vmatprep.subr.mxu0 0.0
  %1316 = vmatpush2.msra.mxu0 0.0
  %1317 = vmatprep.subr.mxu0 0.0
  %1318 = vmatpush2.msra.mxu0 0.0
  %1319 = vmatprep.subr.mxu0 0.0
  %1320 = vmatpush2.msra.mxu0 0.0
  %1321 = vmatprep.subr.mxu0 0.0
  %1322 = vmatpush2.msra.mxu0 0.0
  %1323 = vmatprep.subr.mxu0 0.0
  %1324 = vmatpush2.msra.mxu0 0.0
  %1325 = vmatprep.subr.mxu0 0.0
  %1326 = vmatpush2.msra.mxu0 0.0
  %1327 = vmatprep.subr.mxu0 0.0
  %1328 = vmatpush2.msra.mxu0 0.0
  %1329 = vmatprep.subr.mxu0 0.0
  %1330 = vmatpush2.msra.mxu0 0.0
  %1331 = vmatprep.subr.mxu0 0.0
  %1332 = vmatpush2.msra.mxu0 0.0
  %1333 = vmatprep.subr.mxu0 0.0
  %1334 = vmatpush2.msra.mxu0 0.0
  %1335 = vmatprep.subr.mxu0 0.0
  %1336 = vmatpush2.msra.mxu0 0.0
  %1337 = vmatprep.subr.mxu0 0.0
  %1338 = vmatpush2.msra.mxu0 0.0
  %1339 = vmatprep.subr.mxu0 0.0
  %1340 = vmatpush2.msra.mxu0 0.0
  %1341 = vmatprep.mubr.f32.mxu0 0.0
  %1342 = vmatmul.mubr.f32.gmra.mxu0 %v1204
  %v1343 = vpop.f32.mrf.mxu0
  %v1344 = vadd.f32 0.0, %v1343
  %v1345 = vpop.f32.mrf.mxu0
  %v1346 = vadd.f32 0.0, %v1345
  %1347 = vdwg.mxu0
  %1348 = vmatprep.subr.mxu0 0.0
  %1349 = vmatpush1.msra.mxu0 0.0
  %1350 = vmatprep.subr.mxu0 0.0
  %1351 = vmatpush1.msra.mxu0 0.0
  %1352 = vmatprep.subr.mxu0 0.0
  %1353 = vmatpush1.msra.mxu0 0.0
  %1354 = vmatprep.subr.mxu0 0.0
  %1355 = vmatpush1.msra.mxu0 0.0
  %1356 = vmatprep.subr.mxu0 0.0
  %1357 = vmatpush1.msra.mxu0 0.0
  %1358 = vmatprep.subr.mxu0 0.0
  %1359 = vmatpush1.msra.mxu0 0.0
  %1360 = vmatprep.subr.mxu0 0.0
  %1361 = vmatpush1.msra.mxu0 0.0
  %1362 = vmatprep.subr.mxu0 0.0
  %1363 = vmatpush1.msra.mxu0 0.0
  %1364 = vmatprep.subr.mxu0 0.0
  %1365 = vmatpush1.msra.mxu0 0.0
  %1366 = vmatprep.subr.mxu0 0.0
  %1367 = vmatpush1.msra.mxu0 0.0
  %1368 = vmatprep.subr.mxu0 0.0
  %1369 = vmatpush1.msra.mxu0 0.0
  %1370 = vmatprep.subr.mxu0 0.0
  %1371 = vmatpush1.msra.mxu0 0.0
  %1372 = vmatprep.subr.mxu0 0.0
  %1373 = vmatpush1.msra.mxu0 0.0
  %1374 = vmatprep.subr.mxu0 0.0
  %1375 = vmatpush1.msra.mxu0 0.0
  %1376 = vmatprep.subr.mxu0 %v67
  %1377 = vmatpush1.msra.mxu0 %v66
  %1378 = vmatprep.subr.mxu0 %v57
  %1379 = vmatpush1.msra.mxu0 %v56
  %1380 = vmatprep.subr.mxu0 0.0
  %1381 = vmatpush2.msra.mxu0 0.0
  %1382 = vmatprep.subr.mxu0 0.0
  %1383 = vmatpush2.msra.mxu0 0.0
  %1384 = vmatprep.subr.mxu0 0.0
  %1385 = vmatpush2.msra.mxu0 0.0
  %1386 = vmatprep.subr.mxu0 0.0
  %1387 = vmatpush2.msra.mxu0 0.0
  %1388 = vmatprep.subr.mxu0 0.0
  %1389 = vmatpush2.msra.mxu0 0.0
  %1390 = vmatprep.subr.mxu0 0.0
  %1391 = vmatpush2.msra.mxu0 0.0
  %1392 = vmatprep.subr.mxu0 0.0
  %1393 = vmatpush2.msra.mxu0 0.0
  %1394 = vmatprep.subr.mxu0 0.0
  %1395 = vmatpush2.msra.mxu0 0.0
  %1396 = vmatprep.subr.mxu0 0.0
  %1397 = vmatpush2.msra.mxu0 0.0
  %1398 = vmatprep.subr.mxu0 0.0
  %1399 = vmatpush2.msra.mxu0 0.0
  %1400 = vmatprep.subr.mxu0 0.0
  %1401 = vmatpush2.msra.mxu0 0.0
  %1402 = vmatprep.subr.mxu0 0.0
  %1403 = vmatpush2.msra.mxu0 0.0
  %1404 = vmatprep.subr.mxu0 0.0
  %1405 = vmatpush2.msra.mxu0 0.0
  %1406 = vmatprep.subr.mxu0 0.0
  %1407 = vmatpush2.msra.mxu0 0.0
  %1408 = vmatprep.subr.mxu0 0.0
  %1409 = vmatpush2.msra.mxu0 0.0
  %1410 = vmatprep.subr.mxu0 0.0
  %1411 = vmatpush2.msra.mxu0 0.0
  %1412 = vmatprep.mubr.f32.mxu0 0.0
  %1413 = vmatmul.mubr.f32.gmra.mxu0 %v1204
  %v1414 = vpop.f32.mrf.mxu0
  %v1415 = vadd.f32 0.0, %v1414
  %v1416 = vpop.f32.mrf.mxu0
  %v1417 = vadd.f32 0.0, %v1416
  %1418 = vdwg.mxu0
  %1419 = vmatprep.subr.mxu0 0.0
  %1420 = vmatpush1.msra.mxu0 0.0
  %1421 = vmatprep.subr.mxu0 0.0
  %1422 = vmatpush1.msra.mxu0 0.0
  %1423 = vmatprep.subr.mxu0 0.0
  %1424 = vmatpush1.msra.mxu0 0.0
  %1425 = vmatprep.subr.mxu0 0.0
  %1426 = vmatpush1.msra.mxu0 0.0
  %1427 = vmatprep.subr.mxu0 0.0
  %1428 = vmatpush1.msra.mxu0 0.0
  %1429 = vmatprep.subr.mxu0 0.0
  %1430 = vmatpush1.msra.mxu0 0.0
  %1431 = vmatprep.subr.mxu0 0.0
  %1432 = vmatpush1.msra.mxu0 0.0
  %1433 = vmatprep.subr.mxu0 0.0
  %1434 = vmatpush1.msra.mxu0 0.0
  %1435 = vmatprep.subr.mxu0 0.0
  %1436 = vmatpush1.msra.mxu0 0.0
  %1437 = vmatprep.subr.mxu0 0.0
  %1438 = vmatpush1.msra.mxu0 0.0
  %1439 = vmatprep.subr.mxu0 0.0
  %1440 = vmatpush1.msra.mxu0 0.0
  %1441 = vmatprep.subr.mxu0 0.0
  %1442 = vmatpush1.msra.mxu0 0.0
  %1443 = vmatprep.subr.mxu0 0.0
  %1444 = vmatpush1.msra.mxu0 0.0
  %1445 = vmatprep.subr.mxu0 0.0
  %1446 = vmatpush1.msra.mxu0 0.0
  %1447 = vmatprep.subr.mxu0 %v69
  %1448 = vmatpush1.msra.mxu0 %v68
  %1449 = vmatprep.subr.mxu0 %v59
  %1450 = vmatpush1.msra.mxu0 %v58
  %1451 = vmatprep.subr.mxu0 0.0
  %1452 = vmatpush2.msra.mxu0 0.0
  %1453 = vmatprep.subr.mxu0 0.0
  %1454 = vmatpush2.msra.mxu0 0.0
  %1455 = vmatprep.subr.mxu0 0.0
  %1456 = vmatpush2.msra.mxu0 0.0
  %1457 = vmatprep.subr.mxu0 0.0
  %1458 = vmatpush2.msra.mxu0 0.0
  %1459 = vmatprep.subr.mxu0 0.0
  %1460 = vmatpush2.msra.mxu0 0.0
  %1461 = vmatprep.subr.mxu0 0.0
  %1462 = vmatpush2.msra.mxu0 0.0
  %1463 = vmatprep.subr.mxu0 0.0
  %1464 = vmatpush2.msra.mxu0 0.0
  %1465 = vmatprep.subr.mxu0 0.0
  %1466 = vmatpush2.msra.mxu0 0.0
  %1467 = vmatprep.subr.mxu0 0.0
  %1468 = vmatpush2.msra.mxu0 0.0
  %1469 = vmatprep.subr.mxu0 0.0
  %1470 = vmatpush2.msra.mxu0 0.0
  %1471 = vmatprep.subr.mxu0 0.0
  %1472 = vmatpush2.msra.mxu0 0.0
  %1473 = vmatprep.subr.mxu0 0.0
  %1474 = vmatpush2.msra.mxu0 0.0
  %1475 = vmatprep.subr.mxu0 0.0
  %1476 = vmatpush2.msra.mxu0 0.0
  %1477 = vmatprep.subr.mxu0 0.0
  %1478 = vmatpush2.msra.mxu0 0.0
  %1479 = vmatprep.subr.mxu0 0.0
  %1480 = vmatpush2.msra.mxu0 0.0
  %1481 = vmatprep.subr.mxu0 0.0
  %1482 = vmatpush2.msra.mxu0 0.0
  %1483 = vmatprep.mubr.f32.mxu0 0.0
  %1484 = vmatmul.mubr.f32.gmra.mxu0 %v1204
  %v1485 = vpop.f32.mrf.mxu0
  %v1486 = vadd.f32 0.0, %v1485
  %v1487 = vpop.f32.mrf.mxu0
  %v1488 = vadd.f32 0.0, %v1487
  %1489 = vdwg.mxu0
  %v1490 = vlaneseq
  %v1491 = vshrl.u32 %v1490, 7
  %v1492 = vsub.s32 0, %v1491
  %v1493 = vrot.slane %v36, %v1492
  %v1494 = vlaneseq
  %v1495 = vshrl.u32 %v1494, 7
  %v1496 = vsub.s32 0, %v1495
  %v1497 = vrot.slane %v37, %v1496
  %v1498 = vadd.f32 %v1344, %v1493
  %v1499 = vadd.f32 %v1346, %v1497
  %v1500 = vlaneseq
  %v1501 = vshrl.u32 %v1500, 7
  %v1502 = vsub.s32 1, %v1501
  %v1503 = vrot.slane %v36, %v1502
  %v1504 = vlaneseq
  %v1505 = vshrl.u32 %v1504, 7
  %v1506 = vsub.s32 1, %v1505
  %v1507 = vrot.slane %v37, %v1506
  %v1508 = vadd.f32 %v1415, %v1503
  %v1509 = vadd.f32 %v1417, %v1507
  %v1510 = vlaneseq
  %v1511 = vshrl.u32 %v1510, 7
  %v1512 = vsub.s32 2, %v1511
  %v1513 = vrot.slane %v36, %v1512
  %v1514 = vlaneseq
  %v1515 = vshrl.u32 %v1514, 7
  %v1516 = vsub.s32 2, %v1515
  %v1517 = vrot.slane %v37, %v1516
  %v1518 = vadd.f32 %v1486, %v1513
  %v1519 = vadd.f32 %v1488, %v1517
  %1521 = vrot.lane.b32.xlu0 %v1498, 96
  %v1522 = vpop.permute.xlu0 %1521
  %1523 = vrot.lane.b32.xlu0 %v1498, 64
  %v1524 = vpop.permute.xlu0 %1523
  %1525 = vrot.lane.b32.xlu0 %v1498, 32
  %v1526 = vpop.permute.xlu0 %1525
  %1528 = vrot.lane.b32.xlu0 %v1499, 96
  %v1529 = vpop.permute.xlu0 %1528
  %1530 = vrot.lane.b32.xlu0 %v1499, 64
  %v1531 = vpop.permute.xlu0 %1530
  %1532 = vrot.lane.b32.xlu0 %v1499, 32
  %v1533 = vpop.permute.xlu0 %1532
  %1535 = vrot.lane.b32.xlu0 %v1508, 96
  %v1536 = vpop.permute.xlu0 %1535
  %1537 = vrot.lane.b32.xlu0 %v1508, 64
  %v1538 = vpop.permute.xlu0 %1537
  %1539 = vrot.lane.b32.xlu0 %v1508, 32
  %v1540 = vpop.permute.xlu0 %1539
  %1542 = vrot.lane.b32.xlu0 %v1509, 96
  %v1543 = vpop.permute.xlu0 %1542
  %1544 = vrot.lane.b32.xlu0 %v1509, 64
  %v1545 = vpop.permute.xlu0 %1544
  %1546 = vrot.lane.b32.xlu0 %v1509, 32
  %v1547 = vpop.permute.xlu0 %1546
  %1549 = vrot.lane.b32.xlu0 %v1518, 96
  %v1550 = vpop.permute.xlu0 %1549
  %1552 = vrot.lane.b32.xlu0 %v1518, 64
  %v1553 = vpop.permute.xlu0 %1552
  %1555 = vrot.lane.b32.xlu0 %v1518, 32
  %v1556 = vpop.permute.xlu0 %1555
  %1559 = vrot.lane.b32.xlu0 %v1519, 96
  %v1560 = vpop.permute.xlu0 %1559
  %1562 = vrot.lane.b32.xlu0 %v1519, 64
  %v1563 = vpop.permute.xlu0 %1562
  %1565 = vrot.lane.b32.xlu0 %v1519, 32
  %v1566 = vpop.permute.xlu0 %1565
  %vm1568 = vcmask 261120
  %v1569 = vsel %vm1568, %v1498, 0
  %v1571 = vsel %vm1568, %v1522, 0
  %v1573 = vsel %vm1568, %v1524, 0
  %v1575 = vsel %vm1568, %v1526, 0
  %v1577 = vsel %vm1568, %v1499, 0
  %v1579 = vsel %vm1568, %v1529, 0
  %v1581 = vsel %vm1568, %v1531, 0
  %v1583 = vsel %vm1568, %v1533, 0
  %v1585 = vsel %vm1568, %v1508, 0
  %v1587 = vsel %vm1568, %v1536, 0
  %v1589 = vsel %vm1568, %v1538, 0
  %v1591 = vsel %vm1568, %v1540, 0
  %v1593 = vsel %vm1568, %v1509, 0
  %v1595 = vsel %vm1568, %v1543, 0
  %v1597 = vsel %vm1568, %v1545, 0
  %v1599 = vsel %vm1568, %v1547, 0
  %1601 = vmatprep.subr.mxu0 0.0
  %1602 = vmatpush1.xpose.msra.mxu0 0.0
  %1603 = vmatprep.subr.mxu0 0.0
  %1604 = vmatpush1.xpose.msra.mxu0 0.0
  %1605 = vmatprep.subr.mxu0 0.0
  %1606 = vmatpush1.xpose.msra.mxu0 0.0
  %1607 = vmatprep.subr.mxu0 0.0
  %1608 = vmatpush1.xpose.msra.mxu0 0.0
  %1609 = vmatprep.subr.mxu0 0.0
  %1610 = vmatpush1.xpose.msra.mxu0 0.0
  %1611 = vmatprep.subr.mxu0 0.0
  %1612 = vmatpush1.xpose.msra.mxu0 0.0
  %1613 = vmatprep.subr.mxu0 0.0
  %1614 = vmatpush1.xpose.msra.mxu0 0.0
  %1615 = vmatprep.subr.mxu0 0.0
  %1616 = vmatpush1.xpose.msra.mxu0 0.0
  %1617 = vmatprep.subr.mxu0 0.0
  %1618 = vmatpush1.xpose.msra.mxu0 %v1599
  %1619 = vmatprep.subr.mxu0 0.0
  %1620 = vmatpush1.xpose.msra.mxu0 %v1597
  %1621 = vmatprep.subr.mxu0 0.0
  %1622 = vmatpush1.xpose.msra.mxu0 %v1595
  %1623 = vmatprep.subr.mxu0 0.0
  %1624 = vmatpush1.xpose.msra.mxu0 %v1593
  %1625 = vmatprep.subr.mxu0 0.0
  %1626 = vmatpush1.xpose.msra.mxu0 %v1591
  %1627 = vmatprep.subr.mxu0 0.0
  %1628 = vmatpush1.xpose.msra.mxu0 %v1589
  %1629 = vmatprep.subr.mxu0 0.0
  %1630 = vmatpush1.xpose.msra.mxu0 %v1587
  %1631 = vmatprep.subr.mxu0 0.0
  %1632 = vmatpush1.xpose.msra.mxu0 %v1585
  %1633 = vmatprep.subr.mxu0 0.0
  %1634 = vmatpush2.xpose.msra.mxu0 0.0
  %1635 = vmatprep.subr.mxu0 0.0
  %1636 = vmatpush2.xpose.msra.mxu0 0.0
  %1637 = vmatprep.subr.mxu0 0.0
  %1638 = vmatpush2.xpose.msra.mxu0 0.0
  %1639 = vmatprep.subr.mxu0 0.0
  %1640 = vmatpush2.xpose.msra.mxu0 0.0
  %1641 = vmatprep.subr.mxu0 0.0
  %1642 = vmatpush2.xpose.msra.mxu0 0.0
  %1643 = vmatprep.subr.mxu0 0.0
  %1644 = vmatpush2.xpose.msra.mxu0 0.0
  %1645 = vmatprep.subr.mxu0 0.0
  %1646 = vmatpush2.xpose.msra.mxu0 0.0
  %1647 = vmatprep.subr.mxu0 0.0
  %1648 = vmatpush2.xpose.msra.mxu0 0.0
  %1649 = vmatprep.subr.mxu0 0.0
  %1650 = vmatpush2.xpose.msra.mxu0 0.0
  %1651 = vmatprep.subr.mxu0 0.0
  %1652 = vmatpush2.xpose.msra.mxu0 0.0
  %1653 = vmatprep.subr.mxu0 0.0
  %1654 = vmatpush2.xpose.msra.mxu0 0.0
  %1655 = vmatprep.subr.mxu0 0.0
  %1656 = vmatpush2.xpose.msra.mxu0 0.0
  %1657 = vmatprep.subr.mxu0 0.0
  %1658 = vmatpush2.xpose.msra.mxu0 0.0
  %1659 = vmatprep.subr.mxu0 0.0
  %1660 = vmatpush2.xpose.msra.mxu0 0.0
  %1661 = vmatprep.subr.mxu0 0.0
  %1662 = vmatpush2.xpose.msra.mxu0 0.0
  %1663 = vmatprep.subr.mxu0 0.0
  %1664 = vmatpush2.xpose.msra.mxu0 0.0
  %1665 = vmatprep.mubr.f32.mxu0 0.0
  %1666 = vmatmul.mubr.f32.gmra.mxu0 %v1569
  %v1667 = vpop.f32.mrf.mxu0
  %v1668 = vadd.f32 %v27, %v1667
  %v1669 = vpop.f32.mrf.mxu0
  %1670 = vmatprep.mubr.f32.mxu0 0.0
  %1671 = vmatmul.mubr.f32.gmra.mxu0 %v1571
  %v1672 = vpop.f32.mrf.mxu0
  %v1673 = vadd.f32 %v28, %v1672
  %v1674 = vpop.f32.mrf.mxu0
  %1675 = vmatprep.mubr.f32.mxu0 0.0
  %1676 = vmatmul.mubr.f32.gmra.mxu0 %v1573
  %v1677 = vpop.f32.mrf.mxu0
  %v1678 = vadd.f32 %v29, %v1677
  %v1679 = vpop.f32.mrf.mxu0
  %1680 = vmatprep.mubr.f32.mxu0 0.0
  %1681 = vmatmul.mubr.f32.gmra.mxu0 %v1575
  %v1682 = vpop.f32.mrf.mxu0
  %v1683 = vadd.f32 %v30, %v1682
  %v1684 = vpop.f32.mrf.mxu0
  %1685 = vmatprep.mubr.f32.mxu0 0.0
  %1686 = vmatmul.mubr.f32.gmra.mxu0 %v1577
  %v1687 = vpop.f32.mrf.mxu0
  %v1688 = vadd.f32 %v31, %v1687
  %v1689 = vpop.f32.mrf.mxu0
  %1690 = vmatprep.mubr.f32.mxu0 0.0
  %1691 = vmatmul.mubr.f32.gmra.mxu0 %v1579
  %v1692 = vpop.f32.mrf.mxu0
  %v1693 = vadd.f32 %v32, %v1692
  %v1694 = vpop.f32.mrf.mxu0
  %1695 = vmatprep.mubr.f32.mxu0 0.0
  %1696 = vmatmul.mubr.f32.gmra.mxu0 %v1581
  %v1697 = vpop.f32.mrf.mxu0
  %v1698 = vadd.f32 %v33, %v1697
  %v1699 = vpop.f32.mrf.mxu0
  %1700 = vmatprep.mubr.f32.mxu0 0.0
  %1701 = vmatmul.mubr.f32.gmra.mxu0 %v1583
  %v1702 = vpop.f32.mrf.mxu0
  %v1703 = vadd.f32 %v34, %v1702
  %v1704 = vpop.f32.mrf.mxu0
  %1705 = vdwg.mxu0
  %vm1706 = vcmask 523264
  %v1707 = vsel %vm1706, %v1668, -inf
  %1708 = vmax.xlane.f32.xlu0 %v1707
  %v1709 = vpop.xlane.xlu0 %1708
  %v1710 = vsel %vm1706, %v1673, -inf
  %1711 = vmax.xlane.f32.xlu0 %v1710
  %v1712 = vpop.xlane.xlu0 %1711
  %v1713 = vsel %vm1706, %v1678, -inf
  %1714 = vmax.xlane.f32.xlu0 %v1713
  %v1715 = vpop.xlane.xlu0 %1714
  %v1716 = vsel %vm1706, %v1683, -inf
  %1717 = vmax.xlane.f32.xlu0 %v1716
  %v1718 = vpop.xlane.xlu0 %1717
  %v1719 = vsel %vm1706, %v1688, -inf
  %1720 = vmax.xlane.f32.xlu0 %v1719
  %v1721 = vpop.xlane.xlu0 %1720
  %v1722 = vsel %vm1706, %v1693, -inf
  %1723 = vmax.xlane.f32.xlu0 %v1722
  %v1724 = vpop.xlane.xlu0 %1723
  %v1725 = vsel %vm1706, %v1698, -inf
  %1726 = vmax.xlane.f32.xlu0 %v1725
  %v1727 = vpop.xlane.xlu0 %1726
  %v1728 = vsel %vm1706, %v1703, -inf
  %1729 = vmax.xlane.f32.xlu0 %v1728
  %v1730 = vpop.xlane.xlu0 %1729
  %v1731 = vsub.f32 %v1668, %v1709
  %v1732 = vsub.f32 %v1673, %v1712
  %v1733 = vsub.f32 %v1678, %v1715
  %v1734 = vsub.f32 %v1683, %v1718
  %v1735 = vsub.f32 %v1688, %v1721
  %v1736 = vsub.f32 %v1693, %v1724
  %v1737 = vsub.f32 %v1698, %v1727
  %v1738 = vsub.f32 %v1703, %v1730
  %v1739 = vmul.f32 %v1731, 1.442695
  %v1740 = vpow.pop %v1739
  %v1741 = vmul.f32 %v1732, 1.442695
  %v1742 = vpow.pop %v1741
  %v1743 = vmul.f32 %v1733, 1.442695
  %v1744 = vpow.pop %v1743
  %v1745 = vmul.f32 %v1734, 1.442695
  %v1746 = vpow.pop %v1745
  %v1747 = vmul.f32 %v1735, 1.442695
  %v1748 = vpow.pop %v1747
  %v1749 = vmul.f32 %v1736, 1.442695
  %v1750 = vpow.pop %v1749
  %v1751 = vmul.f32 %v1737, 1.442695
  %v1752 = vpow.pop %v1751
  %v1753 = vmul.f32 %v1738, 1.442695
  %v1754 = vpow.pop %v1753
  %v1755 = vsel %vm1706, %v1740, 0.0
  %1756 = vadd.xlane.f32.xlu0 %v1755
  %v1757 = vpop.xlane.xlu0 %1756
  %v1758 = vsel %vm1706, %v1742, 0.0
  %1759 = vadd.xlane.f32.xlu0 %v1758
  %v1760 = vpop.xlane.xlu0 %1759
  %v1761 = vsel %vm1706, %v1744, 0.0
  %1762 = vadd.xlane.f32.xlu0 %v1761
  %v1763 = vpop.xlane.xlu0 %1762
  %v1764 = vsel %vm1706, %v1746, 0.0
  %1765 = vadd.xlane.f32.xlu0 %v1764
  %v1766 = vpop.xlane.xlu0 %1765
  %v1767 = vsel %vm1706, %v1748, 0.0
  %1768 = vadd.xlane.f32.xlu0 %v1767
  %v1769 = vpop.xlane.xlu0 %1768
  %v1770 = vsel %vm1706, %v1750, 0.0
  %1771 = vadd.xlane.f32.xlu0 %v1770
  %v1772 = vpop.xlane.xlu0 %1771
  %v1773 = vsel %vm1706, %v1752, 0.0
  %1774 = vadd.xlane.f32.xlu0 %v1773
  %v1775 = vpop.xlane.xlu0 %1774
  %v1776 = vsel %vm1706, %v1754, 0.0
  %1777 = vadd.xlane.f32.xlu0 %v1776
  %v1778 = vpop.xlane.xlu0 %1777
  %v1779 = vrcp.pop %v1757
  %v1780 = vrcp.pop %v1760
  %v1781 = vrcp.pop %v1763
  %v1782 = vrcp.pop %v1766
  %v1783 = vrcp.pop %v1769
  %v1784 = vrcp.pop %v1772
  %v1785 = vrcp.pop %v1775
  %v1786 = vrcp.pop %v1778
  %v1787 = vmul.f32 %v1740, %v1779
  %v1788 = vmul.f32 %v1742, %v1780
  %v1789 = vmul.f32 %v1744, %v1781
  %v1790 = vmul.f32 %v1746, %v1782
  %v1791 = vmul.f32 %v1748, %v1783
  %v1792 = vmul.f32 %v1750, %v1784
  %v1793 = vmul.f32 %v1752, %v1785
  %v1794 = vmul.f32 %v1754, %v1786
  %v1796 = vsel %vm1706, %v1787, 0
  %v1799 = vsel %vm1706, %v1788, 0
  %v1802 = vsel %vm1706, %v1789, 0
  %v1805 = vsel %vm1706, %v1790, 0
  %v1808 = vsel %vm1706, %v1791, 0
  %v1811 = vsel %vm1706, %v1792, 0
  %v1814 = vsel %vm1706, %v1793, 0
  %v1817 = vsel %vm1706, %v1794, 0
  %1819 = vmatprep.subr.mxu0 0.0
  %1820 = vmatpush1.msra.mxu0 0.0
  %1821 = vmatprep.subr.mxu0 0.0
  %1822 = vmatpush1.msra.mxu0 0.0
  %1823 = vmatprep.subr.mxu0 0.0
  %1824 = vmatpush1.msra.mxu0 0.0
  %1825 = vmatprep.subr.mxu0 0.0
  %1826 = vmatpush1.msra.mxu0 0.0
  %1827 = vmatprep.subr.mxu0 0.0
  %1828 = vmatpush1.msra.mxu0 0.0
  %1829 = vmatprep.subr.mxu0 0.0
  %1830 = vmatpush1.msra.mxu0 0.0
  %1831 = vmatprep.subr.mxu0 0.0
  %1832 = vmatpush1.msra.mxu0 0.0
  %1833 = vmatprep.subr.mxu0 0.0
  %1834 = vmatpush1.msra.mxu0 0.0
  %1835 = vmatprep.subr.mxu0 0.0
  %1836 = vmatpush1.msra.mxu0 %v1566
  %1837 = vmatprep.subr.mxu0 0.0
  %1838 = vmatpush1.msra.mxu0 %v1563
  %1839 = vmatprep.subr.mxu0 0.0
  %1840 = vmatpush1.msra.mxu0 %v1560
  %1841 = vmatprep.subr.mxu0 0.0
  %1842 = vmatpush1.msra.mxu0 %v1519
  %1843 = vmatprep.subr.mxu0 0.0
  %1844 = vmatpush1.msra.mxu0 %v1556
  %1845 = vmatprep.subr.mxu0 0.0
  %1846 = vmatpush1.msra.mxu0 %v1553
  %1847 = vmatprep.subr.mxu0 0.0
  %1848 = vmatpush1.msra.mxu0 %v1550
  %1849 = vmatprep.subr.mxu0 0.0
  %1850 = vmatpush1.msra.mxu0 %v1518
  %1851 = vmatprep.subr.mxu0 0.0
  %1852 = vmatpush2.msra.mxu0 0.0
  %1853 = vmatprep.subr.mxu0 0.0
  %1854 = vmatpush2.msra.mxu0 0.0
  %1855 = vmatprep.subr.mxu0 0.0
  %1856 = vmatpush2.msra.mxu0 0.0
  %1857 = vmatprep.subr.mxu0 0.0
  %1858 = vmatpush2.msra.mxu0 0.0
  %1859 = vmatprep.subr.mxu0 0.0
  %1860 = vmatpush2.msra.mxu0 0.0
  %1861 = vmatprep.subr.mxu0 0.0
  %1862 = vmatpush2.msra.mxu0 0.0
  %1863 = vmatprep.subr.mxu0 0.0
  %1864 = vmatpush2.msra.mxu0 0.0
  %1865 = vmatprep.subr.mxu0 0.0
  %1866 = vmatpush2.msra.mxu0 0.0
  %1867 = vmatprep.subr.mxu0 0.0
  %1868 = vmatpush2.msra.mxu0 0.0
  %1869 = vmatprep.subr.mxu0 0.0
  %1870 = vmatpush2.msra.mxu0 0.0
  %1871 = vmatprep.subr.mxu0 0.0
  %1872 = vmatpush2.msra.mxu0 0.0
  %1873 = vmatprep.subr.mxu0 0.0
  %1874 = vmatpush2.msra.mxu0 0.0
  %1875 = vmatprep.subr.mxu0 0.0
  %1876 = vmatpush2.msra.mxu0 0.0
  %1877 = vmatprep.subr.mxu0 0.0
  %1878 = vmatpush2.msra.mxu0 0.0
  %1879 = vmatprep.subr.mxu0 0.0
  %1880 = vmatpush2.msra.mxu0 0.0
  %1881 = vmatprep.subr.mxu0 0.0
  %1882 = vmatpush2.msra.mxu0 0.0
  %1883 = vmatprep.mubr.f32.mxu0 0.0
  %1884 = vmatmul.mubr.f32.gmra.mxu0 %v1796
  %v1885 = vpop.f32.mrf.mxu0
  %v1886 = vadd.f32 0.0, %v1885
  %v1887 = vpop.f32.mrf.mxu0
  %1888 = vmatprep.mubr.f32.mxu0 0.0
  %1889 = vmatmul.mubr.f32.gmra.mxu0 %v1799
  %v1890 = vpop.f32.mrf.mxu0
  %v1891 = vadd.f32 0.0, %v1890
  %v1892 = vpop.f32.mrf.mxu0
  %1893 = vmatprep.mubr.f32.mxu0 0.0
  %1894 = vmatmul.mubr.f32.gmra.mxu0 %v1802
  %v1895 = vpop.f32.mrf.mxu0
  %v1896 = vadd.f32 0.0, %v1895
  %v1897 = vpop.f32.mrf.mxu0
  %1898 = vmatprep.mubr.f32.mxu0 0.0
  %1899 = vmatmul.mubr.f32.gmra.mxu0 %v1805
  %v1900 = vpop.f32.mrf.mxu0
  %v1901 = vadd.f32 0.0, %v1900
  %v1902 = vpop.f32.mrf.mxu0
  %1903 = vmatprep.mubr.f32.mxu0 0.0
  %1904 = vmatmul.mubr.f32.gmra.mxu0 %v1808
  %v1905 = vpop.f32.mrf.mxu0
  %v1906 = vadd.f32 0.0, %v1905
  %v1907 = vpop.f32.mrf.mxu0
  %1908 = vmatprep.mubr.f32.mxu0 0.0
  %1909 = vmatmul.mubr.f32.gmra.mxu0 %v1811
  %v1910 = vpop.f32.mrf.mxu0
  %v1911 = vadd.f32 0.0, %v1910
  %v1912 = vpop.f32.mrf.mxu0
  %1913 = vmatprep.mubr.f32.mxu0 0.0
  %1914 = vmatmul.mubr.f32.gmra.mxu0 %v1814
  %v1915 = vpop.f32.mrf.mxu0
  %v1916 = vadd.f32 0.0, %v1915
  %v1917 = vpop.f32.mrf.mxu0
  %1918 = vmatprep.mubr.f32.mxu0 0.0
  %1919 = vmatmul.mubr.f32.gmra.mxu0 %v1817
  %v1920 = vpop.f32.mrf.mxu0
  %v1921 = vadd.f32 0.0, %v1920
  %v1922 = vpop.f32.mrf.mxu0
  %1923 = vdwg.mxu0
  %1925 = vrot.lane.b32.xlu0 %v1891, 32
  %v1926 = vpop.permute.xlu0 %1925
  %1929 = vrot.lane.b32.xlu0 %v1896, 64
  %v1930 = vpop.permute.xlu0 %1929
  %1933 = vrot.lane.b32.xlu0 %v1901, 96
  %v1934 = vpop.permute.xlu0 %1933
  %1937 = vrot.lane.b32.xlu0 %v1911, 32
  %v1938 = vpop.permute.xlu0 %1937
  %1941 = vrot.lane.b32.xlu0 %v1916, 64
  %v1942 = vpop.permute.xlu0 %1941
  %1945 = vrot.lane.b32.xlu0 %v1921, 96
  %v1946 = vpop.permute.xlu0 %1945
  %v1948 = vsel %vm1568, %v1886, %v1926
  %v1949 = vsel %vm1706, %v1948, %v1930
  %vm1950 = vcmask 785408
  %v1951 = vsel %vm1950, %v1949, %v1934
  %v1952 = vsel %vm1568, %v1906, %v1938
  %v1953 = vsel %vm1706, %v1952, %v1942
  %v1954 = vsel %vm1950, %v1953, %v1946
  %1956 = vset.pattern.permute.xlu0 0
  %1957 = vperm.xlu0 %1956, %v35
  %v1958 = vpop.permute.xlu0 %1957
  %v1960 = vmul.f32 %v1951, %v1958
  %v1961 = vmul.f32 %v1954, %v1958
  %1962 = vmatprep.subr.mxu0 0.0
  %1963 = vmatpush1.msra.mxu0 0.0
  %1964 = vmatprep.subr.mxu0 0.0
  %1965 = vmatpush1.msra.mxu0 0.0
  %1966 = vmatprep.subr.mxu0 0.0
  %1967 = vmatpush1.msra.mxu0 0.0
  %1968 = vmatprep.subr.mxu0 0.0
  %1969 = vmatpush1.msra.mxu0 0.0
  %1970 = vmatprep.subr.mxu0 0.0
  %1971 = vmatpush1.msra.mxu0 0.0
  %1972 = vmatprep.subr.mxu0 0.0
  %1973 = vmatpush1.msra.mxu0 0.0
  %1974 = vmatprep.subr.mxu0 0.0
  %1975 = vmatpush1.msra.mxu0 0.0
  %1976 = vmatprep.subr.mxu0 0.0
  %1977 = vmatpush1.msra.mxu0 0.0
  %1978 = vmatprep.subr.mxu0 0.0
  %1979 = vmatpush1.msra.mxu0 0.0
  %1980 = vmatprep.subr.mxu0 0.0
  %1981 = vmatpush1.msra.mxu0 0.0
  %1982 = vmatprep.subr.mxu0 0.0
  %1983 = vmatpush1.msra.mxu0 0.0
  %1984 = vmatprep.subr.mxu0 0.0
  %1985 = vmatpush1.msra.mxu0 0.0
  %1986 = vmatprep.subr.mxu0 0.0
  %1987 = vmatpush1.msra.mxu0 0.0
  %1988 = vmatprep.subr.mxu0 0.0
  %1989 = vmatpush1.msra.mxu0 0.0
  %1990 = vmatprep.subr.mxu0 %v71
  %1991 = vmatpush1.msra.mxu0 %v70
  %1992 = vmatprep.subr.mxu0 %v61
  %1993 = vmatpush1.msra.mxu0 %v60
  %1994 = vmatprep.subr.mxu0 0.0
  %1995 = vmatpush2.msra.mxu0 0.0
  %1996 = vmatprep.subr.mxu0 0.0
  %1997 = vmatpush2.msra.mxu0 0.0
  %1998 = vmatprep.subr.mxu0 0.0
  %1999 = vmatpush2.msra.mxu0 0.0
  %2000 = vmatprep.subr.mxu0 0.0
  %2001 = vmatpush2.msra.mxu0 0.0
  %2002 = vmatprep.subr.mxu0 0.0
  %2003 = vmatpush2.msra.mxu0 0.0
  %2004 = vmatprep.subr.mxu0 0.0
  %2005 = vmatpush2.msra.mxu0 0.0
  %2006 = vmatprep.subr.mxu0 0.0
  %2007 = vmatpush2.msra.mxu0 0.0
  %2008 = vmatprep.subr.mxu0 0.0
  %2009 = vmatpush2.msra.mxu0 0.0
  %2010 = vmatprep.subr.mxu0 0.0
  %2011 = vmatpush2.msra.mxu0 0.0
  %2012 = vmatprep.subr.mxu0 0.0
  %2013 = vmatpush2.msra.mxu0 0.0
  %2014 = vmatprep.subr.mxu0 0.0
  %2015 = vmatpush2.msra.mxu0 0.0
  %2016 = vmatprep.subr.mxu0 0.0
  %2017 = vmatpush2.msra.mxu0 0.0
  %2018 = vmatprep.subr.mxu0 0.0
  %2019 = vmatpush2.msra.mxu0 0.0
  %2020 = vmatprep.subr.mxu0 0.0
  %2021 = vmatpush2.msra.mxu0 0.0
  %2022 = vmatprep.subr.mxu0 0.0
  %2023 = vmatpush2.msra.mxu0 0.0
  %2024 = vmatprep.subr.mxu0 0.0
  %2025 = vmatpush2.msra.mxu0 0.0
  %2026 = vmatprep.mubr.f32.mxu0 0.0
  %2027 = vmatmul.mubr.f32.gmra.mxu0 %v1204
  %v2028 = vpop.f32.mrf.mxu0
  %v2029 = vadd.f32 0.0, %v2028
  %v2030 = vpop.f32.mrf.mxu0
  %v2031 = vadd.f32 0.0, %v2030
  %2032 = vdwg.mxu0
  %v2033 = vadd.f32 %v1960, %v2029
  %v2034 = vadd.f32 %v1961, %v2031
  %v2035 = vlaneseq
  %v2036 = vshrl.u32 %v2035, 7
  %v2037 = vsub.s32 3, %v2036
  %v2038 = vrot.slane %v36, %v2037
  %v2039 = vlaneseq
  %v2040 = vshrl.u32 %v2039, 7
  %v2041 = vsub.s32 3, %v2040
  %v2042 = vrot.slane %v37, %v2041
  %v2043 = vadd.f32 %v2033, %v2038
  %v2044 = vadd.f32 %v2034, %v2042
  %v2045 = vadd.f32 %v2043, %v1273
  %v2046 = vadd.f32 %v2044, %v1275
  %v2047 = vadd.f32 %v2045, %v2046
  %2048 = vadd.xlane.f32.xlu0 %v2047
  %v2049 = vpop.xlane.xlu0 %2048
  %v2050 = vrcp.pop 256.0
  %v2051 = vmul.f32 %v2049, %v2050
  %v2052 = vsub.f32 %v2045, %v2051
  %v2053 = vsub.f32 %v2046, %v2051
  %v2054 = vmul.f32 %v2052, %v2052
  %v2055 = vmul.f32 %v2053, %v2053
  %v2056 = vadd.f32 %v2054, %v2055
  %2057 = vadd.xlane.f32.xlu0 %v2056
  %v2058 = vpop.xlane.xlu0 %2057
  %v2059 = vmul.f32 %v2058, %v2050
  %v2060 = vadd.f32 %v2059, 1e-05
  %v2061 = vrsqrt.pop %v2060
  %v2062 = vmul.f32 %v2052, %v2061
  %v2063 = vmul.f32 %v2053, %v2061
  %v2064 = vlaneseq
  %v2065 = vshrl.u32 %v2064, 7
  %v2066 = vsub.s32 5, %v2065
  %v2067 = vrot.slane %v36, %v2066
  %v2068 = vlaneseq
  %v2069 = vshrl.u32 %v2068, 7
  %v2070 = vsub.s32 5, %v2069
  %v2071 = vrot.slane %v37, %v2070
  %v2072 = vmul.f32 %v2062, %v2067
  %v2073 = vmul.f32 %v2063, %v2071
  %v2074 = vlaneseq
  %v2075 = vshrl.u32 %v2074, 7
  %v2076 = vsub.s32 6, %v2075
  %v2077 = vrot.slane %v36, %v2076
  %v2078 = vlaneseq
  %v2079 = vshrl.u32 %v2078, 7
  %v2080 = vsub.s32 6, %v2079
  %v2081 = vrot.slane %v37, %v2080
  %v2082 = vadd.f32 %v2072, %v2077
  %v2083 = vadd.f32 %v2073, %v2081
  %v2084 = vlaneseq
  %v2085 = vshrl.u32 %v2084, 7
  %v2086 = vsub.s32 7, %v2085
  %v2087 = vrot.slane %v36, %v2086
  %2088 = vmatprep.subr.mxu0 0.0
  %2089 = vmatpush1.msra.mxu0 %v760
  %2090 = vmatprep.subr.mxu0 0.0
  %2091 = vmatpush1.msra.mxu0 %v739
  %2092 = vmatprep.subr.mxu0 0.0
  %2093 = vmatpush1.msra.mxu0 %v718
  %2094 = vmatprep.subr.mxu0 0.0
  %2095 = vmatpush1.msra.mxu0 %v697
  %2096 = vmatprep.subr.mxu0 0.0
  %2097 = vmatpush1.msra.mxu0 %v676
  %2098 = vmatprep.subr.mxu0 0.0
  %2099 = vmatpush1.msra.mxu0 %v655
  %2100 = vmatprep.subr.mxu0 0.0
  %2101 = vmatpush1.msra.mxu0 %v634
  %2102 = vmatprep.subr.mxu0 0.0
  %2103 = vmatpush1.msra.mxu0 %v613
  %2104 = vmatprep.subr.mxu0 0.0
  %2105 = vmatpush1.msra.mxu0 %v592
  %2106 = vmatprep.subr.mxu0 0.0
  %2107 = vmatpush1.msra.mxu0 %v571
  %2108 = vmatprep.subr.mxu0 0.0
  %2109 = vmatpush1.msra.mxu0 %v550
  %2110 = vmatprep.subr.mxu0 0.0
  %2111 = vmatpush1.msra.mxu0 %v529
  %2112 = vmatprep.subr.mxu0 0.0
  %2113 = vmatpush1.msra.mxu0 %v508
  %2114 = vmatprep.subr.mxu0 0.0
  %2115 = vmatpush1.msra.mxu0 %v487
  %2116 = vmatprep.subr.mxu0 0.0
  %2117 = vmatpush1.msra.mxu0 %v466
  %2118 = vmatprep.subr.mxu0 0.0
  %2119 = vmatpush1.msra.mxu0 %v445
  %2120 = vmatprep.subr.mxu0 0.0
  %2121 = vmatpush2.msra.mxu0 %v1096
  %2122 = vmatprep.subr.mxu0 0.0
  %2123 = vmatpush2.msra.mxu0 %v1075
  %2124 = vmatprep.subr.mxu0 0.0
  %2125 = vmatpush2.msra.mxu0 %v1054
  %2126 = vmatprep.subr.mxu0 0.0
  %2127 = vmatpush2.msra.mxu0 %v1033
  %2128 = vmatprep.subr.mxu0 0.0
  %2129 = vmatpush2.msra.mxu0 %v1012
  %2130 = vmatprep.subr.mxu0 0.0
  %2131 = vmatpush2.msra.mxu0 %v991
  %2132 = vmatprep.subr.mxu0 0.0
  %2133 = vmatpush2.msra.mxu0 %v970
  %2134 = vmatprep.subr.mxu0 0.0
  %2135 = vmatpush2.msra.mxu0 %v949
  %2136 = vmatprep.subr.mxu0 0.0
  %2137 = vmatpush2.msra.mxu0 %v928
  %2138 = vmatprep.subr.mxu0 0.0
  %2139 = vmatpush2.msra.mxu0 %v907
  %2140 = vmatprep.subr.mxu0 0.0
  %2141 = vmatpush2.msra.mxu0 %v886
  %2142 = vmatprep.subr.mxu0 0.0
  %2143 = vmatpush2.msra.mxu0 %v865
  %2144 = vmatprep.subr.mxu0 0.0
  %2145 = vmatpush2.msra.mxu0 %v844
  %2146 = vmatprep.subr.mxu0 0.0
  %2147 = vmatpush2.msra.mxu0 %v823
  %2148 = vmatprep.subr.mxu0 0.0
  %2149 = vmatpush2.msra.mxu0 %v802
  %2150 = vmatprep.subr.mxu0 0.0
  %2151 = vmatpush2.msra.mxu0 %v781
  %2152 = vmatprep.mubr.f32.mxu0 %v2083
  %2153 = vmatmul.mubr.f32.gmra.mxu0 %v2082
  %v2154 = vpop.f32.mrf.mxu0
  %v2155 = vadd.f32 %v2087, %v2154
  %v2156 = vpop.f32.mrf.mxu0
  %2157 = vdwg.mxu0
  %v2158 = vmax.f32 %v2155, 0.0
  %v2159 = vlaneseq
  %v2160 = vshrl.u32 %v2159, 7
  %v2161 = vsub.s32 0, %v2160
  %v2162 = vrot.slane %v38, %v2161
  %v2163 = vlaneseq
  %v2164 = vshrl.u32 %v2163, 7
  %v2165 = vsub.s32 0, %v2164
  %v2166 = vrot.slane %v39, %v2165
  %2167 = vmatprep.subr.mxu0 %v1191
  %2168 = vmatpush1.msra.mxu0 %v1190
  %2169 = vmatprep.subr.mxu0 %v1187
  %2170 = vmatpush1.msra.mxu0 %v1186
  %2171 = vmatprep.subr.mxu0 %v1183
  %2172 = vmatpush1.msra.mxu0 %v1182
  %2173 = vmatprep.subr.mxu0 %v1179
  %2174 = vmatpush1.msra.mxu0 %v1178
  %2175 = vmatprep.subr.mxu0 %v1175
  %2176 = vmatpush1.msra.mxu0 %v1174
  %2177 = vmatprep.subr.mxu0 %v1171
  %2178 = vmatpush1.msra.mxu0 %v1170
  %2179 = vmatprep.subr.mxu0 %v1167
  %2180 = vmatpush1.msra.mxu0 %v1166
  %2181 = vmatprep.subr.mxu0 %v1163
  %2182 = vmatpush1.msra.mxu0 %v1162
  %2183 = vmatprep.subr.mxu0 %v1159
  %2184 = vmatpush1.msra.mxu0 %v1158
  %2185 = vmatprep.subr.mxu0 %v1155
  %2186 = vmatpush1.msra.mxu0 %v1154
  %2187 = vmatprep.subr.mxu0 %v1151
  %2188 = vmatpush1.msra.mxu0 %v1150
  %2189 = vmatprep.subr.mxu0 %v1147
  %2190 = vmatpush1.msra.mxu0 %v1146
  %2191 = vmatprep.subr.mxu0 %v1143
  %2192 = vmatpush1.msra.mxu0 %v1142
  %2193 = vmatprep.subr.mxu0 %v1139
  %2194 = vmatpush1.msra.mxu0 %v1138
  %2195 = vmatprep.subr.mxu0 %v1135
  %2196 = vmatpush1.msra.mxu0 %v1134
  %2197 = vmatprep.subr.mxu0 %v1131
  %2198 = vmatpush1.msra.mxu0 %v1130
  %2199 = vmatprep.subr.mxu0 0.0
  %2200 = vmatpush2.msra.mxu0 0.0
  %2201 = vmatprep.subr.mxu0 0.0
  %2202 = vmatpush2.msra.mxu0 0.0
  %2203 = vmatprep.subr.mxu0 0.0
  %2204 = vmatpush2.msra.mxu0 0.0
  %2205 = vmatprep.subr.mxu0 0.0
  %2206 = vmatpush2.msra.mxu0 0.0
  %2207 = vmatprep.subr.mxu0 0.0
  %2208 = vmatpush2.msra.mxu0 0.0
  %2209 = vmatprep.subr.mxu0 0.0
  %2210 = vmatpush2.msra.mxu0 0.0
  %2211 = vmatprep.subr.mxu0 0.0
  %2212 = vmatpush2.msra.mxu0 0.0
  %2213 = vmatprep.subr.mxu0 0.0
  %2214 = vmatpush2.msra.mxu0 0.0
  %2215 = vmatprep.subr.mxu0 0.0
  %2216 = vmatpush2.msra.mxu0 0.0
  %2217 = vmatprep.subr.mxu0 0.0
  %2218 = vmatpush2.msra.mxu0 0.0
  %2219 = vmatprep.subr.mxu0 0.0
  %2220 = vmatpush2.msra.mxu0 0.0
  %2221 = vmatprep.subr.mxu0 0.0
  %2222 = vmatpush2.msra.mxu0 0.0
  %2223 = vmatprep.subr.mxu0 0.0
  %2224 = vmatpush2.msra.mxu0 0.0
  %2225 = vmatprep.subr.mxu0 0.0
  %2226 = vmatpush2.msra.mxu0 0.0
  %2227 = vmatprep.subr.mxu0 0.0
  %2228 = vmatpush2.msra.mxu0 0.0
  %2229 = vmatprep.subr.mxu0 0.0
  %2230 = vmatpush2.msra.mxu0 0.0
  %2231 = vmatprep.mubr.f32.mxu0 0.0
  %2232 = vmatmul.mubr.f32.gmra.mxu0 %v2158
  %v2233 = vpop.f32.mrf.mxu0
  %v2234 = vadd.f32 %v2162, %v2233
  %v2235 = vpop.f32.mrf.mxu0
  %v2236 = vadd.f32 %v2166, %v2235
  %2237 = vdwg.mxu0
  %v2238 = vadd.f32 %v2234, %v2082
  %v2239 = vadd.f32 %v2236, %v2083
  %v2240 = vadd.f32 %v2238, %v2239
  %2241 = vadd.xlane.f32.xlu0 %v2240
  %v2242 = vpop.xlane.xlu0 %2241
  %v2243 = vmul.f32 %v2242, %v2050
  %v2244 = vsub.f32 %v2238, %v2243
  %v2245 = vsub.f32 %v2239, %v2243
  %v2246 = vmul.f32 %v2244, %v2244
  %v2247 = vmul.f32 %v2245, %v2245
  %v2248 = vadd.f32 %v2246, %v2247
  %2249 = vadd.xlane.f32.xlu0 %v2248
  %v2250 = vpop.xlane.xlu0 %2249
  %v2251 = vmul.f32 %v2250, %v2050
  %v2252 = vadd.f32 %v2251, 1e-05
  %v2253 = vrsqrt.pop %v2252
  %v2254 = vmul.f32 %v2244, %v2253
  %v2255 = vmul.f32 %v2245, %v2253
  %v2256 = vlaneseq
  %v2257 = vshrl.u32 %v2256, 7
  %v2258 = vsub.s32 1, %v2257
  %v2259 = vrot.slane %v38, %v2258
  %v2260 = vlaneseq
  %v2261 = vshrl.u32 %v2260, 7
  %v2262 = vsub.s32 1, %v2261
  %v2263 = vrot.slane %v39, %v2262
  %v2264 = vmul.f32 %v2254, %v2259
  %v2265 = vmul.f32 %v2255, %v2263
  %v2266 = vlaneseq
  %v2267 = vshrl.u32 %v2266, 7
  %v2268 = vsub.s32 2, %v2267
  %v2269 = vrot.slane %v38, %v2268
  %v2270 = vlaneseq
  %v2271 = vshrl.u32 %v2270, 7
  %v2272 = vsub.s32 2, %v2271
  %v2273 = vrot.slane %v39, %v2272
  %v2274 = vadd.f32 %v2264, %v2269
  %v2275 = vadd.f32 %v2265, %v2273
  %v2276 = vlaneseq
  %v2277 = vshrl.u32 %v2276, 7
  %v2278 = vsub.s32 7, %v2277
  %v2279 = vrot.slane %v38, %v2278
  %v2280 = vlaneseq
  %v2281 = vshrl.u32 %v2280, 7
  %v2282 = vsub.s32 7, %v2281
  %v2283 = vrot.slane %v39, %v2282
  %2284 = vmatprep.subr.mxu0 %v750
  %2285 = vmatpush1.msra.mxu0 %v749
  %2286 = vmatprep.subr.mxu0 %v729
  %2287 = vmatpush1.msra.mxu0 %v728
  %2288 = vmatprep.subr.mxu0 %v708
  %2289 = vmatpush1.msra.mxu0 %v707
  %2290 = vmatprep.subr.mxu0 %v687
  %2291 = vmatpush1.msra.mxu0 %v686
  %2292 = vmatprep.subr.mxu0 %v666
  %2293 = vmatpush1.msra.mxu0 %v665
  %2294 = vmatprep.subr.mxu0 %v645
  %2295 = vmatpush1.msra.mxu0 %v644
  %2296 = vmatprep.subr.mxu0 %v624
  %2297 = vmatpush1.msra.mxu0 %v623
  %2298 = vmatprep.subr.mxu0 %v603
  %2299 = vmatpush1.msra.mxu0 %v602
  %2300 = vmatprep.subr.mxu0 %v582
  %2301 = vmatpush1.msra.mxu0 %v581
  %2302 = vmatprep.subr.mxu0 %v561
  %2303 = vmatpush1.msra.mxu0 %v560
  %2304 = vmatprep.subr.mxu0 %v540
  %2305 = vmatpush1.msra.mxu0 %v539
  %2306 = vmatprep.subr.mxu0 %v519
  %2307 = vmatpush1.msra.mxu0 %v518
  %2308 = vmatprep.subr.mxu0 %v498
  %2309 = vmatpush1.msra.mxu0 %v497
  %2310 = vmatprep.subr.mxu0 %v477
  %2311 = vmatpush1.msra.mxu0 %v476
  %2312 = vmatprep.subr.mxu0 %v456
  %2313 = vmatpush1.msra.mxu0 %v455
  %2314 = vmatprep.subr.mxu0 %v435
  %2315 = vmatpush1.msra.mxu0 %v434
  %2316 = vmatprep.subr.mxu0 %v1086
  %2317 = vmatpush2.msra.mxu0 %v1085
  %2318 = vmatprep.subr.mxu0 %v1065
  %2319 = vmatpush2.msra.mxu0 %v1064
  %2320 = vmatprep.subr.mxu0 %v1044
  %2321 = vmatpush2.msra.mxu0 %v1043
  %2322 = vmatprep.subr.mxu0 %v1023
  %2323 = vmatpush2.msra.mxu0 %v1022
  %2324 = vmatprep.subr.mxu0 %v1002
  %2325 = vmatpush2.msra.mxu0 %v1001
  %2326 = vmatprep.subr.mxu0 %v981
  %2327 = vmatpush2.msra.mxu0 %v980
  %2328 = vmatprep.subr.mxu0 %v960
  %2329 = vmatpush2.msra.mxu0 %v959
  %2330 = vmatprep.subr.mxu0 %v939
  %2331 = vmatpush2.msra.mxu0 %v938
  %2332 = vmatprep.subr.mxu0 %v918
  %2333 = vmatpush2.msra.mxu0 %v917
  %2334 = vmatprep.subr.mxu0 %v897
  %2335 = vmatpush2.msra.mxu0 %v896
  %2336 = vmatprep.subr.mxu0 %v876
  %2337 = vmatpush2.msra.mxu0 %v875
  %2338 = vmatprep.subr.mxu0 %v855
  %2339 = vmatpush2.msra.mxu0 %v854
  %2340 = vmatprep.subr.mxu0 %v834
  %2341 = vmatpush2.msra.mxu0 %v833
  %2342 = vmatprep.subr.mxu0 %v813
  %2343 = vmatpush2.msra.mxu0 %v812
  %2344 = vmatprep.subr.mxu0 %v792
  %2345 = vmatpush2.msra.mxu0 %v791
  %2346 = vmatprep.subr.mxu0 %v771
  %2347 = vmatpush2.msra.mxu0 %v770
  %2348 = vmatprep.mubr.f32.mxu0 %v2275
  %2349 = vmatmul.mubr.f32.gmra.mxu0 %v2274
  %v2350 = vpop.f32.mrf.mxu0
  %v2351 = vadd.f32 %v2279, %v2350
  %v2352 = vpop.f32.mrf.mxu0
  %v2353 = vadd.f32 %v2283, %v2352
  %2354 = vdwg.mxu0
  %2355 = vmatprep.subr.mxu0 %v742
  %2356 = vmatpush1.msra.mxu0 %v741
  %2357 = vmatprep.subr.mxu0 %v721
  %2358 = vmatpush1.msra.mxu0 %v720
  %2359 = vmatprep.subr.mxu0 %v700
  %2360 = vmatpush1.msra.mxu0 %v699
  %2361 = vmatprep.subr.mxu0 %v679
  %2362 = vmatpush1.msra.mxu0 %v678
  %2363 = vmatprep.subr.mxu0 %v658
  %2364 = vmatpush1.msra.mxu0 %v657
  %2365 = vmatprep.subr.mxu0 %v637
  %2366 = vmatpush1.msra.mxu0 %v636
  %2367 = vmatprep.subr.mxu0 %v616
  %2368 = vmatpush1.msra.mxu0 %v615
  %2369 = vmatprep.subr.mxu0 %v595
  %2370 = vmatpush1.msra.mxu0 %v594
  %2371 = vmatprep.subr.mxu0 %v574
  %2372 = vmatpush1.msra.mxu0 %v573
  %2373 = vmatprep.subr.mxu0 %v553
  %2374 = vmatpush1.msra.mxu0 %v552
  %2375 = vmatprep.subr.mxu0 %v532
  %2376 = vmatpush1.msra.mxu0 %v531
  %2377 = vmatprep.subr.mxu0 %v511
  %2378 = vmatpush1.msra.mxu0 %v510
  %2379 = vmatprep.subr.mxu0 %v490
  %2380 = vmatpush1.msra.mxu0 %v489
  %2381 = vmatprep.subr.mxu0 %v469
  %2382 = vmatpush1.msra.mxu0 %v468
  %2383 = vmatprep.subr.mxu0 %v448
  %2384 = vmatpush1.msra.mxu0 %v447
  %2385 = vmatprep.subr.mxu0 %v427
  %2386 = vmatpush1.msra.mxu0 %v426
  %2387 = vmatprep.subr.mxu0 %v1078
  %2388 = vmatpush2.msra.mxu0 %v1077
  %2389 = vmatprep.subr.mxu0 %v1057
  %2390 = vmatpush2.msra.mxu0 %v1056
  %2391 = vmatprep.subr.mxu0 %v1036
  %2392 = vmatpush2.msra.mxu0 %v1035
  %2393 = vmatprep.subr.mxu0 %v1015
  %2394 = vmatpush2.msra.mxu0 %v1014
  %2395 = vmatprep.subr.mxu0 %v994
  %2396 = vmatpush2.msra.mxu0 %v993
  %2397 = vmatprep.subr.mxu0 %v973
  %2398 = vmatpush2.msra.mxu0 %v972
  %2399 = vmatprep.subr.mxu0 %v952
  %2400 = vmatpush2.msra.mxu0 %v951
  %2401 = vmatprep.subr.mxu0 %v931
  %2402 = vmatpush2.msra.mxu0 %v930
  %2403 = vmatprep.subr.mxu0 %v910
  %2404 = vmatpush2.msra.mxu0 %v909
  %2405 = vmatprep.subr.mxu0 %v889
  %2406 = vmatpush2.msra.mxu0 %v888
  %2407 = vmatprep.subr.mxu0 %v868
  %2408 = vmatpush2.msra.mxu0 %v867
  %2409 = vmatprep.subr.mxu0 %v847
  %2410 = vmatpush2.msra.mxu0 %v846
  %2411 = vmatprep.subr.mxu0 %v826
  %2412 = vmatpush2.msra.mxu0 %v825
  %2413 = vmatprep.subr.mxu0 %v805
  %2414 = vmatpush2.msra.mxu0 %v804
  %2415 = vmatprep.subr.mxu0 %v784
  %2416 = vmatpush2.msra.mxu0 %v783
  %2417 = vmatprep.subr.mxu0 %v763
  %2418 = vmatpush2.msra.mxu0 %v762
  %2419 = vmatprep.mubr.f32.mxu0 %v2275
  %2420 = vmatmul.mubr.f32.gmra.mxu0 %v2274
  %v2421 = vpop.f32.mrf.mxu0
  %v2422 = vadd.f32 0.0, %v2421
  %v2423 = vpop.f32.mrf.mxu0
  %v2424 = vadd.f32 0.0, %v2423
  %2425 = vdwg.mxu0
  %2426 = vmatprep.subr.mxu0 %v744
  %2427 = vmatpush1.msra.mxu0 %v743
  %2428 = vmatprep.subr.mxu0 %v723
  %2429 = vmatpush1.msra.mxu0 %v722
  %2430 = vmatprep.subr.mxu0 %v702
  %2431 = vmatpush1.msra.mxu0 %v701
  %2432 = vmatprep.subr.mxu0 %v681
  %2433 = vmatpush1.msra.mxu0 %v680
  %2434 = vmatprep.subr.mxu0 %v660
  %2435 = vmatpush1.msra.mxu0 %v659
  %2436 = vmatprep.subr.mxu0 %v639
  %2437 = vmatpush1.msra.mxu0 %v638
  %2438 = vmatprep.subr.mxu0 %v618
  %2439 = vmatpush1.msra.mxu0 %v617
  %2440 = vmatprep.subr.mxu0 %v597
  %2441 = vmatpush1.msra.mxu0 %v596
  %2442 = vmatprep.subr.mxu0 %v576
  %2443 = vmatpush1.msra.mxu0 %v575
  %2444 = vmatprep.subr.mxu0 %v555
  %2445 = vmatpush1.msra.mxu0 %v554
  %2446 = vmatprep.subr.mxu0 %v534
  %2447 = vmatpush1.msra.mxu0 %v533
  %2448 = vmatprep.subr.mxu0 %v513
  %2449 = vmatpush1.msra.mxu0 %v512
  %2450 = vmatprep.subr.mxu0 %v492
  %2451 = vmatpush1.msra.mxu0 %v491
  %2452 = vmatprep.subr.mxu0 %v471
  %2453 = vmatpush1.msra.mxu0 %v470
  %2454 = vmatprep.subr.mxu0 %v450
  %2455 = vmatpush1.msra.mxu0 %v449
  %2456 = vmatprep.subr.mxu0 %v429
  %2457 = vmatpush1.msra.mxu0 %v428
  %2458 = vmatprep.subr.mxu0 %v1080
  %2459 = vmatpush2.msra.mxu0 %v1079
  %2460 = vmatprep.subr.mxu0 %v1059
  %2461 = vmatpush2.msra.mxu0 %v1058
  %2462 = vmatprep.subr.mxu0 %v1038
  %2463 = vmatpush2.msra.mxu0 %v1037
  %2464 = vmatprep.subr.mxu0 %v1017
  %2465 = vmatpush2.msra.mxu0 %v1016
  %2466 = vmatprep.subr.mxu0 %v996
  %2467 = vmatpush2.msra.mxu0 %v995
  %2468 = vmatprep.subr.mxu0 %v975
  %2469 = vmatpush2.msra.mxu0 %v974
  %2470 = vmatprep.subr.mxu0 %v954
  %2471 = vmatpush2.msra.mxu0 %v953
  %2472 = vmatprep.subr.mxu0 %v933
  %2473 = vmatpush2.msra.mxu0 %v932
  %2474 = vmatprep.subr.mxu0 %v912
  %2475 = vmatpush2.msra.mxu0 %v911
  %2476 = vmatprep.subr.mxu0 %v891
  %2477 = vmatpush2.msra.mxu0 %v890
  %2478 = vmatprep.subr.mxu0 %v870
  %2479 = vmatpush2.msra.mxu0 %v869
  %2480 = vmatprep.subr.mxu0 %v849
  %2481 = vmatpush2.msra.mxu0 %v848
  %2482 = vmatprep.subr.mxu0 %v828
  %2483 = vmatpush2.msra.mxu0 %v827
  %2484 = vmatprep.subr.mxu0 %v807
  %2485 = vmatpush2.msra.mxu0 %v806
  %2486 = vmatprep.subr.mxu0 %v786
  %2487 = vmatpush2.msra.mxu0 %v785
  %2488 = vmatprep.subr.mxu0 %v765
  %2489 = vmatpush2.msra.mxu0 %v764
  %2490 = vmatprep.mubr.f32.mxu0 %v2275
  %2491 = vmatmul.mubr.f32.gmra.mxu0 %v2274
  %v2492 = vpop.f32.mrf.mxu0
  %v2493 = vadd.f32 0.0, %v2492
  %v2494 = vpop.f32.mrf.mxu0
  %v2495 = vadd.f32 0.0, %v2494
  %2496 = vdwg.mxu0
  %2497 = vmatprep.subr.mxu0 %v746
  %2498 = vmatpush1.msra.mxu0 %v745
  %2499 = vmatprep.subr.mxu0 %v725
  %2500 = vmatpush1.msra.mxu0 %v724
  %2501 = vmatprep.subr.mxu0 %v704
  %2502 = vmatpush1.msra.mxu0 %v703
  %2503 = vmatprep.subr.mxu0 %v683
  %2504 = vmatpush1.msra.mxu0 %v682
  %2505 = vmatprep.subr.mxu0 %v662
  %2506 = vmatpush1.msra.mxu0 %v661
  %2507 = vmatprep.subr.mxu0 %v641
  %2508 = vmatpush1.msra.mxu0 %v640
  %2509 = vmatprep.subr.mxu0 %v620
  %2510 = vmatpush1.msra.mxu0 %v619
  %2511 = vmatprep.subr.mxu0 %v599
  %2512 = vmatpush1.msra.mxu0 %v598
  %2513 = vmatprep.subr.mxu0 %v578
  %2514 = vmatpush1.msra.mxu0 %v577
  %2515 = vmatprep.subr.mxu0 %v557
  %2516 = vmatpush1.msra.mxu0 %v556
  %2517 = vmatprep.subr.mxu0 %v536
  %2518 = vmatpush1.msra.mxu0 %v535
  %2519 = vmatprep.subr.mxu0 %v515
  %2520 = vmatpush1.msra.mxu0 %v514
  %2521 = vmatprep.subr.mxu0 %v494
  %2522 = vmatpush1.msra.mxu0 %v493
  %2523 = vmatprep.subr.mxu0 %v473
  %2524 = vmatpush1.msra.mxu0 %v472
  %2525 = vmatprep.subr.mxu0 %v452
  %2526 = vmatpush1.msra.mxu0 %v451
  %2527 = vmatprep.subr.mxu0 %v431
  %2528 = vmatpush1.msra.mxu0 %v430
  %2529 = vmatprep.subr.mxu0 %v1082
  %2530 = vmatpush2.msra.mxu0 %v1081
  %2531 = vmatprep.subr.mxu0 %v1061
  %2532 = vmatpush2.msra.mxu0 %v1060
  %2533 = vmatprep.subr.mxu0 %v1040
  %2534 = vmatpush2.msra.mxu0 %v1039
  %2535 = vmatprep.subr.mxu0 %v1019
  %2536 = vmatpush2.msra.mxu0 %v1018
  %2537 = vmatprep.subr.mxu0 %v998
  %2538 = vmatpush2.msra.mxu0 %v997
  %2539 = vmatprep.subr.mxu0 %v977
  %2540 = vmatpush2.msra.mxu0 %v976
  %2541 = vmatprep.subr.mxu0 %v956
  %2542 = vmatpush2.msra.mxu0 %v955
  %2543 = vmatprep.subr.mxu0 %v935
  %2544 = vmatpush2.msra.mxu0 %v934
  %2545 = vmatprep.subr.mxu0 %v914
  %2546 = vmatpush2.msra.mxu0 %v913
  %2547 = vmatprep.subr.mxu0 %v893
  %2548 = vmatpush2.msra.mxu0 %v892
  %2549 = vmatprep.subr.mxu0 %v872
  %2550 = vmatpush2.msra.mxu0 %v871
  %2551 = vmatprep.subr.mxu0 %v851
  %2552 = vmatpush2.msra.mxu0 %v850
  %2553 = vmatprep.subr.mxu0 %v830
  %2554 = vmatpush2.msra.mxu0 %v829
  %2555 = vmatprep.subr.mxu0 %v809
  %2556 = vmatpush2.msra.mxu0 %v808
  %2557 = vmatprep.subr.mxu0 %v788
  %2558 = vmatpush2.msra.mxu0 %v787
  %2559 = vmatprep.subr.mxu0 %v767
  %2560 = vmatpush2.msra.mxu0 %v766
  %2561 = vmatprep.mubr.f32.mxu0 %v2275
  %2562 = vmatmul.mubr.f32.gmra.mxu0 %v2274
  %v2563 = vpop.f32.mrf.mxu0
  %v2564 = vadd.f32 0.0, %v2563
  %v2565 = vpop.f32.mrf.mxu0
  %v2566 = vadd.f32 0.0, %v2565
  %2567 = vdwg.mxu0
  %v2568 = vlaneseq
  %v2569 = vshrl.u32 %v2568, 7
  %v2570 = vsub.s32 3, %v2569
  %v2571 = vrot.slane %v38, %v2570
  %v2572 = vlaneseq
  %v2573 = vshrl.u32 %v2572, 7
  %v2574 = vsub.s32 3, %v2573
  %v2575 = vrot.slane %v39, %v2574
  %v2576 = vadd.f32 %v2422, %v2571
  %v2577 = vadd.f32 %v2424, %v2575
  %v2578 = vlaneseq
  %v2579 = vshrl.u32 %v2578, 7
  %v2580 = vsub.s32 4, %v2579
  %v2581 = vrot.slane %v38, %v2580
  %v2582 = vlaneseq
  %v2583 = vshrl.u32 %v2582, 7
  %v2584 = vsub.s32 4, %v2583
  %v2585 = vrot.slane %v39, %v2584
  %v2586 = vadd.f32 %v2493, %v2581
  %v2587 = vadd.f32 %v2495, %v2585
  %v2588 = vlaneseq
  %v2589 = vshrl.u32 %v2588, 7
  %v2590 = vsub.s32 5, %v2589
  %v2591 = vrot.slane %v38, %v2590
  %v2592 = vlaneseq
  %v2593 = vshrl.u32 %v2592, 7
  %v2594 = vsub.s32 5, %v2593
  %v2595 = vrot.slane %v39, %v2594
  %v2596 = vadd.f32 %v2564, %v2591
  %v2597 = vadd.f32 %v2566, %v2595
  %2599 = vrot.lane.b32.xlu0 %v2576, 96
  %v2600 = vpop.permute.xlu0 %2599
  %2601 = vrot.lane.b32.xlu0 %v2576, 64
  %v2602 = vpop.permute.xlu0 %2601
  %2603 = vrot.lane.b32.xlu0 %v2576, 32
  %v2604 = vpop.permute.xlu0 %2603
  %2606 = vrot.lane.b32.xlu0 %v2577, 96
  %v2607 = vpop.permute.xlu0 %2606
  %2608 = vrot.lane.b32.xlu0 %v2577, 64
  %v2609 = vpop.permute.xlu0 %2608
  %2610 = vrot.lane.b32.xlu0 %v2577, 32
  %v2611 = vpop.permute.xlu0 %2610
  %2613 = vrot.lane.b32.xlu0 %v2586, 96
  %v2614 = vpop.permute.xlu0 %2613
  %2615 = vrot.lane.b32.xlu0 %v2586, 64
  %v2616 = vpop.permute.xlu0 %2615
  %2617 = vrot.lane.b32.xlu0 %v2586, 32
  %v2618 = vpop.permute.xlu0 %2617
  %2620 = vrot.lane.b32.xlu0 %v2587, 96
  %v2621 = vpop.permute.xlu0 %2620
  %2622 = vrot.lane.b32.xlu0 %v2587, 64
  %v2623 = vpop.permute.xlu0 %2622
  %2624 = vrot.lane.b32.xlu0 %v2587, 32
  %v2625 = vpop.permute.xlu0 %2624
  %2627 = vrot.lane.b32.xlu0 %v2596, 96
  %v2628 = vpop.permute.xlu0 %2627
  %2630 = vrot.lane.b32.xlu0 %v2596, 64
  %v2631 = vpop.permute.xlu0 %2630
  %2633 = vrot.lane.b32.xlu0 %v2596, 32
  %v2634 = vpop.permute.xlu0 %2633
  %2637 = vrot.lane.b32.xlu0 %v2597, 96
  %v2638 = vpop.permute.xlu0 %2637
  %2640 = vrot.lane.b32.xlu0 %v2597, 64
  %v2641 = vpop.permute.xlu0 %2640
  %2643 = vrot.lane.b32.xlu0 %v2597, 32
  %v2644 = vpop.permute.xlu0 %2643
  %v2646 = vsel %vm1568, %v2576, 0
  %v2648 = vsel %vm1568, %v2600, 0
  %v2650 = vsel %vm1568, %v2602, 0
  %v2652 = vsel %vm1568, %v2604, 0
  %v2654 = vsel %vm1568, %v2577, 0
  %v2656 = vsel %vm1568, %v2607, 0
  %v2658 = vsel %vm1568, %v2609, 0
  %v2660 = vsel %vm1568, %v2611, 0
  %v2662 = vsel %vm1568, %v2586, 0
  %v2664 = vsel %vm1568, %v2614, 0
  %v2666 = vsel %vm1568, %v2616, 0
  %v2668 = vsel %vm1568, %v2618, 0
  %v2670 = vsel %vm1568, %v2587, 0
  %v2672 = vsel %vm1568, %v2621, 0
  %v2674 = vsel %vm1568, %v2623, 0
  %v2676 = vsel %vm1568, %v2625, 0
  %2678 = vmatprep.subr.mxu0 0.0
  %2679 = vmatpush1.xpose.msra.mxu0 0.0
  %2680 = vmatprep.subr.mxu0 0.0
  %2681 = vmatpush1.xpose.msra.mxu0 0.0
  %2682 = vmatprep.subr.mxu0 0.0
  %2683 = vmatpush1.xpose.msra.mxu0 0.0
  %2684 = vmatprep.subr.mxu0 0.0
  %2685 = vmatpush1.xpose.msra.mxu0 0.0
  %2686 = vmatprep.subr.mxu0 0.0
  %2687 = vmatpush1.xpose.msra.mxu0 0.0
  %2688 = vmatprep.subr.mxu0 0.0
  %2689 = vmatpush1.xpose.msra.mxu0 0.0
  %2690 = vmatprep.subr.mxu0 0.0
  %2691 = vmatpush1.xpose.msra.mxu0 0.0
  %2692 = vmatprep.subr.mxu0 0.0
  %2693 = vmatpush1.xpose.msra.mxu0 0.0
  %2694 = vmatprep.subr.mxu0 0.0
  %2695 = vmatpush1.xpose.msra.mxu0 %v2676
  %2696 = vmatprep.subr.mxu0 0.0
  %2697 = vmatpush1.xpose.msra.mxu0 %v2674
  %2698 = vmatprep.subr.mxu0 0.0
  %2699 = vmatpush1.xpose.msra.mxu0 %v2672
  %2700 = vmatprep.subr.mxu0 0.0
  %2701 = vmatpush1.xpose.msra.mxu0 %v2670
  %2702 = vmatprep.subr.mxu0 0.0
  %2703 = vmatpush1.xpose.msra.mxu0 %v2668
  %2704 = vmatprep.subr.mxu0 0.0
  %2705 = vmatpush1.xpose.msra.mxu0 %v2666
  %2706 = vmatprep.subr.mxu0 0.0
  %2707 = vmatpush1.xpose.msra.mxu0 %v2664
  %2708 = vmatprep.subr.mxu0 0.0
  %2709 = vmatpush1.xpose.msra.mxu0 %v2662
  %2710 = vmatprep.subr.mxu0 0.0
  %2711 = vmatpush2.xpose.msra.mxu0 0.0
  %2712 = vmatprep.subr.mxu0 0.0
  %2713 = vmatpush2.xpose.msra.mxu0 0.0
  %2714 = vmatprep.subr.mxu0 0.0
  %2715 = vmatpush2.xpose.msra.mxu0 0.0
  %2716 = vmatprep.subr.mxu0 0.0
  %2717 = vmatpush2.xpose.msra.mxu0 0.0
  %2718 = vmatprep.subr.mxu0 0.0
  %2719 = vmatpush2.xpose.msra.mxu0 0.0
  %2720 = vmatprep.subr.mxu0 0.0
  %2721 = vmatpush2.xpose.msra.mxu0 0.0
  %2722 = vmatprep.subr.mxu0 0.0
  %2723 = vmatpush2.xpose.msra.mxu0 0.0
  %2724 = vmatprep.subr.mxu0 0.0
  %2725 = vmatpush2.xpose.msra.mxu0 0.0
  %2726 = vmatprep.subr.mxu0 0.0
  %2727 = vmatpush2.xpose.msra.mxu0 0.0
  %2728 = vmatprep.subr.mxu0 0.0
  %2729 = vmatpush2.xpose.msra.mxu0 0.0
  %2730 = vmatprep.subr.mxu0 0.0
  %2731 = vmatpush2.xpose.msra.mxu0 0.0
  %2732 = vmatprep.subr.mxu0 0.0
  %2733 = vmatpush2.xpose.msra.mxu0 0.0
  %2734 = vmatprep.subr.mxu0 0.0
  %2735 = vmatpush2.xpose.msra.mxu0 0.0
  %2736 = vmatprep.subr.mxu0 0.0
  %2737 = vmatpush2.xpose.msra.mxu0 0.0
  %2738 = vmatprep.subr.mxu0 0.0
  %2739 = vmatpush2.xpose.msra.mxu0 0.0
  %2740 = vmatprep.subr.mxu0 0.0
  %2741 = vmatpush2.xpose.msra.mxu0 0.0
  %2742 = vmatprep.mubr.f32.mxu0 0.0
  %2743 = vmatmul.mubr.f32.gmra.mxu0 %v2646
  %v2744 = vpop.f32.mrf.mxu0
  %v2745 = vadd.f32 %v27, %v2744
  %v2746 = vpop.f32.mrf.mxu0
  %2747 = vmatprep.mubr.f32.mxu0 0.0
  %2748 = vmatmul.mubr.f32.gmra.mxu0 %v2648
  %v2749 = vpop.f32.mrf.mxu0
  %v2750 = vadd.f32 %v28, %v2749
  %v2751 = vpop.f32.mrf.mxu0
  %2752 = vmatprep.mubr.f32.mxu0 0.0
  %2753 = vmatmul.mubr.f32.gmra.mxu0 %v2650
  %v2754 = vpop.f32.mrf.mxu0
  %v2755 = vadd.f32 %v29, %v2754
  %v2756 = vpop.f32.mrf.mxu0
  %2757 = vmatprep.mubr.f32.mxu0 0.0
  %2758 = vmatmul.mubr.f32.gmra.mxu0 %v2652
  %v2759 = vpop.f32.mrf.mxu0
  %v2760 = vadd.f32 %v30, %v2759
  %v2761 = vpop.f32.mrf.mxu0
  %2762 = vmatprep.mubr.f32.mxu0 0.0
  %2763 = vmatmul.mubr.f32.gmra.mxu0 %v2654
  %v2764 = vpop.f32.mrf.mxu0
  %v2765 = vadd.f32 %v31, %v2764
  %v2766 = vpop.f32.mrf.mxu0
  %2767 = vmatprep.mubr.f32.mxu0 0.0
  %2768 = vmatmul.mubr.f32.gmra.mxu0 %v2656
  %v2769 = vpop.f32.mrf.mxu0
  %v2770 = vadd.f32 %v32, %v2769
  %v2771 = vpop.f32.mrf.mxu0
  %2772 = vmatprep.mubr.f32.mxu0 0.0
  %2773 = vmatmul.mubr.f32.gmra.mxu0 %v2658
  %v2774 = vpop.f32.mrf.mxu0
  %v2775 = vadd.f32 %v33, %v2774
  %v2776 = vpop.f32.mrf.mxu0
  %2777 = vmatprep.mubr.f32.mxu0 0.0
  %2778 = vmatmul.mubr.f32.gmra.mxu0 %v2660
  %v2779 = vpop.f32.mrf.mxu0
  %v2780 = vadd.f32 %v34, %v2779
  %v2781 = vpop.f32.mrf.mxu0
  %2782 = vdwg.mxu0
  %v2783 = vsel %vm1706, %v2745, -inf
  %2784 = vmax.xlane.f32.xlu0 %v2783
  %v2785 = vpop.xlane.xlu0 %2784
  %v2786 = vsel %vm1706, %v2750, -inf
  %2787 = vmax.xlane.f32.xlu0 %v2786
  %v2788 = vpop.xlane.xlu0 %2787
  %v2789 = vsel %vm1706, %v2755, -inf
  %2790 = vmax.xlane.f32.xlu0 %v2789
  %v2791 = vpop.xlane.xlu0 %2790
  %v2792 = vsel %vm1706, %v2760, -inf
  %2793 = vmax.xlane.f32.xlu0 %v2792
  %v2794 = vpop.xlane.xlu0 %2793
  %v2795 = vsel %vm1706, %v2765, -inf
  %2796 = vmax.xlane.f32.xlu0 %v2795
  %v2797 = vpop.xlane.xlu0 %2796
  %v2798 = vsel %vm1706, %v2770, -inf
  %2799 = vmax.xlane.f32.xlu0 %v2798
  %v2800 = vpop.xlane.xlu0 %2799
  %v2801 = vsel %vm1706, %v2775, -inf
  %2802 = vmax.xlane.f32.xlu0 %v2801
  %v2803 = vpop.xlane.xlu0 %2802
  %v2804 = vsel %vm1706, %v2780, -inf
  %2805 = vmax.xlane.f32.xlu0 %v2804
  %v2806 = vpop.xlane.xlu0 %2805
  %v2807 = vsub.f32 %v2745, %v2785
  %v2808 = vsub.f32 %v2750, %v2788
  %v2809 = vsub.f32 %v2755, %v2791
  %v2810 = vsub.f32 %v2760, %v2794
  %v2811 = vsub.f32 %v2765, %v2797
  %v2812 = vsub.f32 %v2770, %v2800
  %v2813 = vsub.f32 %v2775, %v2803
  %v2814 = vsub.f32 %v2780, %v2806
  %v2815 = vmul.f32 %v2807, 1.442695
  %v2816 = vpow.pop %v2815
  %v2817 = vmul.f32 %v2808, 1.442695
  %v2818 = vpow.pop %v2817
  %v2819 = vmul.f32 %v2809, 1.442695
  %v2820 = vpow.pop %v2819
  %v2821 = vmul.f32 %v2810, 1.442695
  %v2822 = vpow.pop %v2821
  %v2823 = vmul.f32 %v2811, 1.442695
  %v2824 = vpow.pop %v2823
  %v2825 = vmul.f32 %v2812, 1.442695
  %v2826 = vpow.pop %v2825
  %v2827 = vmul.f32 %v2813, 1.442695
  %v2828 = vpow.pop %v2827
  %v2829 = vmul.f32 %v2814, 1.442695
  %v2830 = vpow.pop %v2829
  %v2831 = vsel %vm1706, %v2816, 0.0
  %2832 = vadd.xlane.f32.xlu0 %v2831
  %v2833 = vpop.xlane.xlu0 %2832
  %v2834 = vsel %vm1706, %v2818, 0.0
  %2835 = vadd.xlane.f32.xlu0 %v2834
  %v2836 = vpop.xlane.xlu0 %2835
  %v2837 = vsel %vm1706, %v2820, 0.0
  %2838 = vadd.xlane.f32.xlu0 %v2837
  %v2839 = vpop.xlane.xlu0 %2838
  %v2840 = vsel %vm1706, %v2822, 0.0
  %2841 = vadd.xlane.f32.xlu0 %v2840
  %v2842 = vpop.xlane.xlu0 %2841
  %v2843 = vsel %vm1706, %v2824, 0.0
  %2844 = vadd.xlane.f32.xlu0 %v2843
  %v2845 = vpop.xlane.xlu0 %2844
  %v2846 = vsel %vm1706, %v2826, 0.0
  %2847 = vadd.xlane.f32.xlu0 %v2846
  %v2848 = vpop.xlane.xlu0 %2847
  %v2849 = vsel %vm1706, %v2828, 0.0
  %2850 = vadd.xlane.f32.xlu0 %v2849
  %v2851 = vpop.xlane.xlu0 %2850
  %v2852 = vsel %vm1706, %v2830, 0.0
  %2853 = vadd.xlane.f32.xlu0 %v2852
  %v2854 = vpop.xlane.xlu0 %2853
  %v2855 = vrcp.pop %v2833
  %v2856 = vrcp.pop %v2836
  %v2857 = vrcp.pop %v2839
  %v2858 = vrcp.pop %v2842
  %v2859 = vrcp.pop %v2845
  %v2860 = vrcp.pop %v2848
  %v2861 = vrcp.pop %v2851
  %v2862 = vrcp.pop %v2854
  %v2863 = vmul.f32 %v2816, %v2855
  %v2864 = vmul.f32 %v2818, %v2856
  %v2865 = vmul.f32 %v2820, %v2857
  %v2866 = vmul.f32 %v2822, %v2858
  %v2867 = vmul.f32 %v2824, %v2859
  %v2868 = vmul.f32 %v2826, %v2860
  %v2869 = vmul.f32 %v2828, %v2861
  %v2870 = vmul.f32 %v2830, %v2862
  %v2872 = vsel %vm1706, %v2863, 0
  %v2875 = vsel %vm1706, %v2864, 0
  %v2878 = vsel %vm1706, %v2865, 0
  %v2881 = vsel %vm1706, %v2866, 0
  %v2884 = vsel %vm1706, %v2867, 0
  %v2887 = vsel %vm1706, %v2868, 0
  %v2890 = vsel %vm1706, %v2869, 0
  %v2893 = vsel %vm1706, %v2870, 0
  %2895 = vmatprep.subr.mxu0 0.0
  %2896 = vmatpush1.msra.mxu0 0.0
  %2897 = vmatprep.subr.mxu0 0.0
  %2898 = vmatpush1.msra.mxu0 0.0
  %2899 = vmatprep.subr.mxu0 0.0
  %2900 = vmatpush1.msra.mxu0 0.0
  %2901 = vmatprep.subr.mxu0 0.0
  %2902 = vmatpush1.msra.mxu0 0.0
  %2903 = vmatprep.subr.mxu0 0.0
  %2904 = vmatpush1.msra.mxu0 0.0
  %2905 = vmatprep.subr.mxu0 0.0
  %2906 = vmatpush1.msra.mxu0 0.0
  %2907 = vmatprep.subr.mxu0 0.0
  %2908 = vmatpush1.msra.mxu0 0.0
  %2909 = vmatprep.subr.mxu0 0.0
  %2910 = vmatpush1.msra.mxu0 0.0
  %2911 = vmatprep.subr.mxu0 0.0
  %2912 = vmatpush1.msra.mxu0 %v2644
  %2913 = vmatprep.subr.mxu0 0.0
  %2914 = vmatpush1.msra.mxu0 %v2641
  %2915 = vmatprep.subr.mxu0 0.0
  %2916 = vmatpush1.msra.mxu0 %v2638
  %2917 = vmatprep.subr.mxu0 0.0
  %2918 = vmatpush1.msra.mxu0 %v2597
  %2919 = vmatprep.subr.mxu0 0.0
  %2920 = vmatpush1.msra.mxu0 %v2634
  %2921 = vmatprep.subr.mxu0 0.0
  %2922 = vmatpush1.msra.mxu0 %v2631
  %2923 = vmatprep.subr.mxu0 0.0
  %2924 = vmatpush1.msra.mxu0 %v2628
  %2925 = vmatprep.subr.mxu0 0.0
  %2926 = vmatpush1.msra.mxu0 %v2596
  %2927 = vmatprep.subr.mxu0 0.0
  %2928 = vmatpush2.msra.mxu0 0.0
  %2929 = vmatprep.subr.mxu0 0.0
  %2930 = vmatpush2.msra.mxu0 0.0
  %2931 = vmatprep.subr.mxu0 0.0
  %2932 = vmatpush2.msra.mxu0 0.0
  %2933 = vmatprep.subr.mxu0 0.0
  %2934 = vmatpush2.msra.mxu0 0.0
  %2935 = vmatprep.subr.mxu0 0.0
  %2936 = vmatpush2.msra.mxu0 0.0
  %2937 = vmatprep.subr.mxu0 0.0
  %2938 = vmatpush2.msra.mxu0 0.0
  %2939 = vmatprep.subr.mxu0 0.0
  %2940 = vmatpush2.msra.mxu0 0.0
  %2941 = vmatprep.subr.mxu0 0.0
  %2942 = vmatpush2.msra.mxu0 0.0
  %2943 = vmatprep.subr.mxu0 0.0
  %2944 = vmatpush2.msra.mxu0 0.0
  %2945 = vmatprep.subr.mxu0 0.0
  %2946 = vmatpush2.msra.mxu0 0.0
  %2947 = vmatprep.subr.mxu0 0.0
  %2948 = vmatpush2.msra.mxu0 0.0
  %2949 = vmatprep.subr.mxu0 0.0
  %2950 = vmatpush2.msra.mxu0 0.0
  %2951 = vmatprep.subr.mxu0 0.0
  %2952 = vmatpush2.msra.mxu0 0.0
  %2953 = vmatprep.subr.mxu0 0.0
  %2954 = vmatpush2.msra.mxu0 0.0
  %2955 = vmatprep.subr.mxu0 0.0
  %2956 = vmatpush2.msra.mxu0 0.0
  %2957 = vmatprep.subr.mxu0 0.0
  %2958 = vmatpush2.msra.mxu0 0.0
  %2959 = vmatprep.mubr.f32.mxu0 0.0
  %2960 = vmatmul.mubr.f32.gmra.mxu0 %v2872
  %v2961 = vpop.f32.mrf.mxu0
  %v2962 = vadd.f32 0.0, %v2961
  %v2963 = vpop.f32.mrf.mxu0
  %2964 = vmatprep.mubr.f32.mxu0 0.0
  %2965 = vmatmul.mubr.f32.gmra.mxu0 %v2875
  %v2966 = vpop.f32.mrf.mxu0
  %v2967 = vadd.f32 0.0, %v2966
  %v2968 = vpop.f32.mrf.mxu0
  %2969 = vmatprep.mubr.f32.mxu0 0.0
  %2970 = vmatmul.mubr.f32.gmra.mxu0 %v2878
  %v2971 = vpop.f32.mrf.mxu0
  %v2972 = vadd.f32 0.0, %v2971
  %v2973 = vpop.f32.mrf.mxu0
  %2974 = vmatprep.mubr.f32.mxu0 0.0
  %2975 = vmatmul.mubr.f32.gmra.mxu0 %v2881
  %v2976 = vpop.f32.mrf.mxu0
  %v2977 = vadd.f32 0.0, %v2976
  %v2978 = vpop.f32.mrf.mxu0
  %2979 = vmatprep.mubr.f32.mxu0 0.0
  %2980 = vmatmul.mubr.f32.gmra.mxu0 %v2884
  %v2981 = vpop.f32.mrf.mxu0
  %v2982 = vadd.f32 0.0, %v2981
  %v2983 = vpop.f32.mrf.mxu0
  %2984 = vmatprep.mubr.f32.mxu0 0.0
  %2985 = vmatmul.mubr.f32.gmra.mxu0 %v2887
  %v2986 = vpop.f32.mrf.mxu0
  %v2987 = vadd.f32 0.0, %v2986
  %v2988 = vpop.f32.mrf.mxu0
  %2989 = vmatprep.mubr.f32.mxu0 0.0
  %2990 = vmatmul.mubr.f32.gmra.mxu0 %v2890
  %v2991 = vpop.f32.mrf.mxu0
  %v2992 = vadd.f32 0.0, %v2991
  %v2993 = vpop.f32.mrf.mxu0
  %2994 = vmatprep.mubr.f32.mxu0 0.0
  %2995 = vmatmul.mubr.f32.gmra.mxu0 %v2893
  %v2996 = vpop.f32.mrf.mxu0
  %v2997 = vadd.f32 0.0, %v2996
  %v2998 = vpop.f32.mrf.mxu0
  %2999 = vdwg.mxu0
  %3001 = vrot.lane.b32.xlu0 %v2967, 32
  %v3002 = vpop.permute.xlu0 %3001
  %3005 = vrot.lane.b32.xlu0 %v2972, 64
  %v3006 = vpop.permute.xlu0 %3005
  %3009 = vrot.lane.b32.xlu0 %v2977, 96
  %v3010 = vpop.permute.xlu0 %3009
  %3013 = vrot.lane.b32.xlu0 %v2987, 32
  %v3014 = vpop.permute.xlu0 %3013
  %3017 = vrot.lane.b32.xlu0 %v2992, 64
  %v3018 = vpop.permute.xlu0 %3017
  %3021 = vrot.lane.b32.xlu0 %v2997, 96
  %v3022 = vpop.permute.xlu0 %3021
  %v3024 = vsel %vm1568, %v2962, %v3002
  %v3025 = vsel %vm1706, %v3024, %v3006
  %v3026 = vsel %vm1950, %v3025, %v3010
  %v3027 = vsel %vm1568, %v2982, %v3014
  %v3028 = vsel %vm1706, %v3027, %v3018
  %v3029 = vsel %vm1950, %v3028, %v3022
  %v3030 = vmul.f32 %v3026, %v1958
  %v3031 = vmul.f32 %v3029, %v1958
  %3032 = vmatprep.subr.mxu0 %v748
  %3033 = vmatpush1.msra.mxu0 %v747
  %3034 = vmatprep.subr.mxu0 %v727
  %3035 = vmatpush1.msra.mxu0 %v726
  %3036 = vmatprep.subr.mxu0 %v706
  %3037 = vmatpush1.msra.mxu0 %v705
  %3038 = vmatprep.subr.mxu0 %v685
  %3039 = vmatpush1.msra.mxu0 %v684
  %3040 = vmatprep.subr.mxu0 %v664
  %3041 = vmatpush1.msra.mxu0 %v663
  %3042 = vmatprep.subr.mxu0 %v643
  %3043 = vmatpush1.msra.mxu0 %v642
  %3044 = vmatprep.subr.mxu0 %v622
  %3045 = vmatpush1.msra.mxu0 %v621
  %3046 = vmatprep.subr.mxu0 %v601
  %3047 = vmatpush1.msra.mxu0 %v600
  %3048 = vmatprep.subr.mxu0 %v580
  %3049 = vmatpush1.msra.mxu0 %v579
  %3050 = vmatprep.subr.mxu0 %v559
  %3051 = vmatpush1.msra.mxu0 %v558
  %3052 = vmatprep.subr.mxu0 %v538
  %3053 = vmatpush1.msra.mxu0 %v537
  %3054 = vmatprep.subr.mxu0 %v517
  %3055 = vmatpush1.msra.mxu0 %v516
  %3056 = vmatprep.subr.mxu0 %v496
  %3057 = vmatpush1.msra.mxu0 %v495
  %3058 = vmatprep.subr.mxu0 %v475
  %3059 = vmatpush1.msra.mxu0 %v474
  %3060 = vmatprep.subr.mxu0 %v454
  %3061 = vmatpush1.msra.mxu0 %v453
  %3062 = vmatprep.subr.mxu0 %v433
  %3063 = vmatpush1.msra.mxu0 %v432
  %3064 = vmatprep.subr.mxu0 %v1084
  %3065 = vmatpush2.msra.mxu0 %v1083
  %3066 = vmatprep.subr.mxu0 %v1063
  %3067 = vmatpush2.msra.mxu0 %v1062
  %3068 = vmatprep.subr.mxu0 %v1042
  %3069 = vmatpush2.msra.mxu0 %v1041
  %3070 = vmatprep.subr.mxu0 %v1021
  %3071 = vmatpush2.msra.mxu0 %v1020
  %3072 = vmatprep.subr.mxu0 %v1000
  %3073 = vmatpush2.msra.mxu0 %v999
  %3074 = vmatprep.subr.mxu0 %v979
  %3075 = vmatpush2.msra.mxu0 %v978
  %3076 = vmatprep.subr.mxu0 %v958
  %3077 = vmatpush2.msra.mxu0 %v957
  %3078 = vmatprep.subr.mxu0 %v937
  %3079 = vmatpush2.msra.mxu0 %v936
  %3080 = vmatprep.subr.mxu0 %v916
  %3081 = vmatpush2.msra.mxu0 %v915
  %3082 = vmatprep.subr.mxu0 %v895
  %3083 = vmatpush2.msra.mxu0 %v894
  %3084 = vmatprep.subr.mxu0 %v874
  %3085 = vmatpush2.msra.mxu0 %v873
  %3086 = vmatprep.subr.mxu0 %v853
  %3087 = vmatpush2.msra.mxu0 %v852
  %3088 = vmatprep.subr.mxu0 %v832
  %3089 = vmatpush2.msra.mxu0 %v831
  %3090 = vmatprep.subr.mxu0 %v811
  %3091 = vmatpush2.msra.mxu0 %v810
  %3092 = vmatprep.subr.mxu0 %v790
  %3093 = vmatpush2.msra.mxu0 %v789
  %3094 = vmatprep.subr.mxu0 %v769
  %3095 = vmatpush2.msra.mxu0 %v768
  %3096 = vmatprep.mubr.f32.mxu0 %v2275
  %3097 = vmatmul.mubr.f32.gmra.mxu0 %v2274
  %v3098 = vpop.f32.mrf.mxu0
  %v3099 = vadd.f32 0.0, %v3098
  %v3100 = vpop.f32.mrf.mxu0
  %v3101 = vadd.f32 0.0, %v3100
  %3102 = vdwg.mxu0
  %v3103 = vadd.f32 %v3030, %v3099
  %v3104 = vadd.f32 %v3031, %v3101
  %v3105 = vlaneseq
  %v3106 = vshrl.u32 %v3105, 7
  %v3107 = vsub.s32 6, %v3106
  %v3108 = vrot.slane %v38, %v3107
  %v3109 = vlaneseq
  %v3110 = vshrl.u32 %v3109, 7
  %v3111 = vsub.s32 6, %v3110
  %v3112 = vrot.slane %v39, %v3111
  %v3113 = vadd.f32 %v3103, %v3108
  %v3114 = vadd.f32 %v3104, %v3112
  %v3115 = vadd.f32 %v3113, %v2351
  %v3116 = vadd.f32 %v3114, %v2353
  %v3117 = vadd.f32 %v3115, %v3116
  %3118 = vadd.xlane.f32.xlu0 %v3117
  %v3119 = vpop.xlane.xlu0 %3118
  %v3120 = vmul.f32 %v3119, %v2050
  %v3121 = vsub.f32 %v3115, %v3120
  %v3122 = vsub.f32 %v3116, %v3120
  %v3123 = vmul.f32 %v3121, %v3121
  %v3124 = vmul.f32 %v3122, %v3122
  %v3125 = vadd.f32 %v3123, %v3124
  %3126 = vadd.xlane.f32.xlu0 %v3125
  %v3127 = vpop.xlane.xlu0 %3126
  %v3128 = vmul.f32 %v3127, %v2050
  %v3129 = vadd.f32 %v3128, 1e-05
  %v3130 = vrsqrt.pop %v3129
  %v3131 = vmul.f32 %v3121, %v3130
  %v3132 = vmul.f32 %v3122, %v3130
  %v3133 = vlaneseq
  %v3134 = vshrl.u32 %v3133, 7
  %v3135 = vsub.s32 0, %v3134
  %v3136 = vrot.slane %v40, %v3135
  %v3137 = vlaneseq
  %v3138 = vshrl.u32 %v3137, 7
  %v3139 = vsub.s32 0, %v3138
  %v3140 = vrot.slane %v41, %v3139
  %v3141 = vmul.f32 %v3131, %v3136
  %v3142 = vmul.f32 %v3132, %v3140
  %v3143 = vlaneseq
  %v3144 = vshrl.u32 %v3143, 7
  %v3145 = vsub.s32 1, %v3144
  %v3146 = vrot.slane %v40, %v3145
  %v3147 = vlaneseq
  %v3148 = vshrl.u32 %v3147, 7
  %v3149 = vsub.s32 1, %v3148
  %v3150 = vrot.slane %v41, %v3149
  %v3151 = vadd.f32 %v3141, %v3146
  %v3152 = vadd.f32 %v3142, %v3150
  %v3153 = vlaneseq
  %v3154 = vshrl.u32 %v3153, 7
  %v3155 = vsub.s32 2, %v3154
  %v3156 = vrot.slane %v40, %v3155
  %3157 = vmatprep.subr.mxu0 0.0
  %3158 = vmatpush1.msra.mxu0 %v761
  %3159 = vmatprep.subr.mxu0 0.0
  %3160 = vmatpush1.msra.mxu0 %v740
  %3161 = vmatprep.subr.mxu0 0.0
  %3162 = vmatpush1.msra.mxu0 %v719
  %3163 = vmatprep.subr.mxu0 0.0
  %3164 = vmatpush1.msra.mxu0 %v698
  %3165 = vmatprep.subr.mxu0 0.0
  %3166 = vmatpush1.msra.mxu0 %v677
  %3167 = vmatprep.subr.mxu0 0.0
  %3168 = vmatpush1.msra.mxu0 %v656
  %3169 = vmatprep.subr.mxu0 0.0
  %3170 = vmatpush1.msra.mxu0 %v635
  %3171 = vmatprep.subr.mxu0 0.0
  %3172 = vmatpush1.msra.mxu0 %v614
  %3173 = vmatprep.subr.mxu0 0.0
  %3174 = vmatpush1.msra.mxu0 %v593
  %3175 = vmatprep.subr.mxu0 0.0
  %3176 = vmatpush1.msra.mxu0 %v572
  %3177 = vmatprep.subr.mxu0 0.0
  %3178 = vmatpush1.msra.mxu0 %v551
  %3179 = vmatprep.subr.mxu0 0.0
  %3180 = vmatpush1.msra.mxu0 %v530
  %3181 = vmatprep.subr.mxu0 0.0
  %3182 = vmatpush1.msra.mxu0 %v509
  %3183 = vmatprep.subr.mxu0 0.0
  %3184 = vmatpush1.msra.mxu0 %v488
  %3185 = vmatprep.subr.mxu0 0.0
  %3186 = vmatpush1.msra.mxu0 %v467
  %3187 = vmatprep.subr.mxu0 0.0
  %3188 = vmatpush1.msra.mxu0 %v446
  %3189 = vmatprep.subr.mxu0 0.0
  %3190 = vmatpush2.msra.mxu0 %v1097
  %3191 = vmatprep.subr.mxu0 0.0
  %3192 = vmatpush2.msra.mxu0 %v1076
  %3193 = vmatprep.subr.mxu0 0.0
  %3194 = vmatpush2.msra.mxu0 %v1055
  %3195 = vmatprep.subr.mxu0 0.0
  %3196 = vmatpush2.msra.mxu0 %v1034
  %3197 = vmatprep.subr.mxu0 0.0
  %3198 = vmatpush2.msra.mxu0 %v1013
  %3199 = vmatprep.subr.mxu0 0.0
  %3200 = vmatpush2.msra.mxu0 %v992
  %3201 = vmatprep.subr.mxu0 0.0
  %3202 = vmatpush2.msra.mxu0 %v971
  %3203 = vmatprep.subr.mxu0 0.0
  %3204 = vmatpush2.msra.mxu0 %v950
  %3205 = vmatprep.subr.mxu0 0.0
  %3206 = vmatpush2.msra.mxu0 %v929
  %3207 = vmatprep.subr.mxu0 0.0
  %3208 = vmatpush2.msra.mxu0 %v908
  %3209 = vmatprep.subr.mxu0 0.0
  %3210 = vmatpush2.msra.mxu0 %v887
  %3211 = vmatprep.subr.mxu0 0.0
  %3212 = vmatpush2.msra.mxu0 %v866
  %3213 = vmatprep.subr.mxu0 0.0
  %3214 = vmatpush2.msra.mxu0 %v845
  %3215 = vmatprep.subr.mxu0 0.0
  %3216 = vmatpush2.msra.mxu0 %v824
  %3217 = vmatprep.subr.mxu0 0.0
  %3218 = vmatpush2.msra.mxu0 %v803
  %3219 = vmatprep.subr.mxu0 0.0
  %3220 = vmatpush2.msra.mxu0 %v782
  %3221 = vmatprep.mubr.f32.mxu0 %v3152
  %3222 = vmatmul.mubr.f32.gmra.mxu0 %v3151
  %v3223 = vpop.f32.mrf.mxu0
  %v3224 = vadd.f32 %v3156, %v3223
  %v3225 = vpop.f32.mrf.mxu0
  %3226 = vdwg.mxu0
  %v3227 = vmax.f32 %v3224, 0.0
  %v3228 = vlaneseq
  %v3229 = vshrl.u32 %v3228, 7
  %v3230 = vsub.s32 3, %v3229
  %v3231 = vrot.slane %v40, %v3230
  %v3232 = vlaneseq
  %v3233 = vshrl.u32 %v3232, 7
  %v3234 = vsub.s32 3, %v3233
  %v3235 = vrot.slane %v41, %v3234
  %3236 = vmatprep.subr.mxu0 %v1193
  %3237 = vmatpush1.msra.mxu0 %v1192
  %3238 = vmatprep.subr.mxu0 %v1189
  %3239 = vmatpush1.msra.mxu0 %v1188
  %3240 = vmatprep.subr.mxu0 %v1185
  %3241 = vmatpush1.msra.mxu0 %v1184
  %3242 = vmatprep.subr.mxu0 %v1181
  %3243 = vmatpush1.msra.mxu0 %v1180
  %3244 = vmatprep.subr.mxu0 %v1177
  %3245 = vmatpush1.msra.mxu0 %v1176
  %3246 = vmatprep.subr.mxu0 %v1173
  %3247 = vmatpush1.msra.mxu0 %v1172
  %3248 = vmatprep.subr.mxu0 %v1169
  %3249 = vmatpush1.msra.mxu0 %v1168
  %3250 = vmatprep.subr.mxu0 %v1165
  %3251 = vmatpush1.msra.mxu0 %v1164
  %3252 = vmatprep.subr.mxu0 %v1161
  %3253 = vmatpush1.msra.mxu0 %v1160
  %3254 = vmatprep.subr.mxu0 %v1157
  %3255 = vmatpush1.msra.mxu0 %v1156
  %3256 = vmatprep.subr.mxu0 %v1153
  %3257 = vmatpush1.msra.mxu0 %v1152
  %3258 = vmatprep.subr.mxu0 %v1149
  %3259 = vmatpush1.msra.mxu0 %v1148
  %3260 = vmatprep.subr.mxu0 %v1145
  %3261 = vmatpush1.msra.mxu0 %v1144
  %3262 = vmatprep.subr.mxu0 %v1141
  %3263 = vmatpush1.msra.mxu0 %v1140
  %3264 = vmatprep.subr.mxu0 %v1137
  %3265 = vmatpush1.msra.mxu0 %v1136
  %3266 = vmatprep.subr.mxu0 %v1133
  %3267 = vmatpush1.msra.mxu0 %v1132
  %3268 = vmatprep.subr.mxu0 0.0
  %3269 = vmatpush2.msra.mxu0 0.0
  %3270 = vmatprep.subr.mxu0 0.0
  %3271 = vmatpush2.msra.mxu0 0.0
  %3272 = vmatprep.subr.mxu0 0.0
  %3273 = vmatpush2.msra.mxu0 0.0
  %3274 = vmatprep.subr.mxu0 0.0
  %3275 = vmatpush2.msra.mxu0 0.0
  %3276 = vmatprep.subr.mxu0 0.0
  %3277 = vmatpush2.msra.mxu0 0.0
  %3278 = vmatprep.subr.mxu0 0.0
  %3279 = vmatpush2.msra.mxu0 0.0
  %3280 = vmatprep.subr.mxu0 0.0
  %3281 = vmatpush2.msra.mxu0 0.0
  %3282 = vmatprep.subr.mxu0 0.0
  %3283 = vmatpush2.msra.mxu0 0.0
  %3284 = vmatprep.subr.mxu0 0.0
  %3285 = vmatpush2.msra.mxu0 0.0
  %3286 = vmatprep.subr.mxu0 0.0
  %3287 = vmatpush2.msra.mxu0 0.0
  %3288 = vmatprep.subr.mxu0 0.0
  %3289 = vmatpush2.msra.mxu0 0.0
  %3290 = vmatprep.subr.mxu0 0.0
  %3291 = vmatpush2.msra.mxu0 0.0
  %3292 = vmatprep.subr.mxu0 0.0
  %3293 = vmatpush2.msra.mxu0 0.0
  %3294 = vmatprep.subr.mxu0 0.0
  %3295 = vmatpush2.msra.mxu0 0.0
  %3296 = vmatprep.subr.mxu0 0.0
  %3297 = vmatpush2.msra.mxu0 0.0
  %3298 = vmatprep.subr.mxu0 0.0
  %3299 = vmatpush2.msra.mxu0 0.0
  %3300 = vmatprep.mubr.f32.mxu0 0.0
  %3301 = vmatmul.mubr.f32.gmra.mxu0 %v3227
  %v3302 = vpop.f32.mrf.mxu0
  %v3303 = vadd.f32 %v3231, %v3302
  %v3304 = vpop.f32.mrf.mxu0
  %v3305 = vadd.f32 %v3235, %v3304
  %3306 = vdwg.mxu0
  %v3307 = vadd.f32 %v3303, %v3151
  %v3308 = vadd.f32 %v3305, %v3152
  %v3309 = vadd.f32 %v3307, %v3308
  %3310 = vadd.xlane.f32.xlu0 %v3309
  %v3311 = vpop.xlane.xlu0 %3310
  %v3312 = vmul.f32 %v3311, %v2050
  %v3313 = vsub.f32 %v3307, %v3312
  %v3314 = vsub.f32 %v3308, %v3312
  %v3315 = vmul.f32 %v3313, %v3313
  %v3316 = vmul.f32 %v3314, %v3314
  %v3317 = vadd.f32 %v3315, %v3316
  %3318 = vadd.xlane.f32.xlu0 %v3317
  %v3319 = vpop.xlane.xlu0 %3318
  %v3320 = vmul.f32 %v3319, %v2050
  %v3321 = vadd.f32 %v3320, 1e-05
  %v3322 = vrsqrt.pop %v3321
  %v3323 = vmul.f32 %v3313, %v3322
  %v3324 = vmul.f32 %v3314, %v3322
  %v3325 = vlaneseq
  %v3326 = vshrl.u32 %v3325, 7
  %v3327 = vsub.s32 4, %v3326
  %v3328 = vrot.slane %v40, %v3327
  %v3329 = vlaneseq
  %v3330 = vshrl.u32 %v3329, 7
  %v3331 = vsub.s32 4, %v3330
  %v3332 = vrot.slane %v41, %v3331
  %v3333 = vmul.f32 %v3323, %v3328
  %v3334 = vmul.f32 %v3324, %v3332
  %v3335 = vlaneseq
  %v3336 = vshrl.u32 %v3335, 7
  %v3337 = vsub.s32 5, %v3336
  %v3338 = vrot.slane %v40, %v3337
  %v3339 = vlaneseq
  %v3340 = vshrl.u32 %v3339, 7
  %v3341 = vsub.s32 5, %v3340
  %v3342 = vrot.slane %v41, %v3341
  %v3343 = vadd.f32 %v3333, %v3338
  %v3344 = vadd.f32 %v3334, %v3342
  %3345 = vmatprep.subr.mxu0 %v752
  %3346 = vmatpush1.msra.mxu0 %v751
  %3347 = vmatprep.subr.mxu0 %v731
  %3348 = vmatpush1.msra.mxu0 %v730
  %3349 = vmatprep.subr.mxu0 %v710
  %3350 = vmatpush1.msra.mxu0 %v709
  %3351 = vmatprep.subr.mxu0 %v689
  %3352 = vmatpush1.msra.mxu0 %v688
  %3353 = vmatprep.subr.mxu0 %v668
  %3354 = vmatpush1.msra.mxu0 %v667
  %3355 = vmatprep.subr.mxu0 %v647
  %3356 = vmatpush1.msra.mxu0 %v646
  %3357 = vmatprep.subr.mxu0 %v626
  %3358 = vmatpush1.msra.mxu0 %v625
  %3359 = vmatprep.subr.mxu0 %v605
  %3360 = vmatpush1.msra.mxu0 %v604
  %3361 = vmatprep.subr.mxu0 %v584
  %3362 = vmatpush1.msra.mxu0 %v583
  %3363 = vmatprep.subr.mxu0 %v563
  %3364 = vmatpush1.msra.mxu0 %v562
  %3365 = vmatprep.subr.mxu0 %v542
  %3366 = vmatpush1.msra.mxu0 %v541
  %3367 = vmatprep.subr.mxu0 %v521
  %3368 = vmatpush1.msra.mxu0 %v520
  %3369 = vmatprep.subr.mxu0 %v500
  %3370 = vmatpush1.msra.mxu0 %v499
  %3371 = vmatprep.subr.mxu0 %v479
  %3372 = vmatpush1.msra.mxu0 %v478
  %3373 = vmatprep.subr.mxu0 %v458
  %3374 = vmatpush1.msra.mxu0 %v457
  %3375 = vmatprep.subr.mxu0 %v437
  %3376 = vmatpush1.msra.mxu0 %v436
  %3377 = vmatprep.subr.mxu0 %v1088
  %3378 = vmatpush2.msra.mxu0 %v1087
  %3379 = vmatprep.subr.mxu0 %v1067
  %3380 = vmatpush2.msra.mxu0 %v1066
  %3381 = vmatprep.subr.mxu0 %v1046
  %3382 = vmatpush2.msra.mxu0 %v1045
  %3383 = vmatprep.subr.mxu0 %v1025
  %3384 = vmatpush2.msra.mxu0 %v1024
  %3385 = vmatprep.subr.mxu0 %v1004
  %3386 = vmatpush2.msra.mxu0 %v1003
  %3387 = vmatprep.subr.mxu0 %v983
  %3388 = vmatpush2.msra.mxu0 %v982
  %3389 = vmatprep.subr.mxu0 %v962
  %3390 = vmatpush2.msra.mxu0 %v961
  %3391 = vmatprep.subr.mxu0 %v941
  %3392 = vmatpush2.msra.mxu0 %v940
  %3393 = vmatprep.subr.mxu0 %v920
  %3394 = vmatpush2.msra.mxu0 %v919
  %3395 = vmatprep.subr.mxu0 %v899
  %3396 = vmatpush2.msra.mxu0 %v898
  %3397 = vmatprep.subr.mxu0 %v878
  %3398 = vmatpush2.msra.mxu0 %v877
  %3399 = vmatprep.subr.mxu0 %v857
  %3400 = vmatpush2.msra.mxu0 %v856
  %3401 = vmatprep.subr.mxu0 %v836
  %3402 = vmatpush2.msra.mxu0 %v835
  %3403 = vmatprep.subr.mxu0 %v815
  %3404 = vmatpush2.msra.mxu0 %v814
  %3405 = vmatprep.subr.mxu0 %v794
  %3406 = vmatpush2.msra.mxu0 %v793
  %3407 = vmatprep.subr.mxu0 %v773
  %3408 = vmatpush2.msra.mxu0 %v772
  %3409 = vmatprep.mubr.f32.mxu0 %v3344
  %3410 = vmatmul.mubr.f32.gmra.mxu0 %v3343
  %v3411 = vpop.f32.mrf.mxu0
  %v3412 = vadd.f32 0.0, %v3411
  %v3413 = vpop.f32.mrf.mxu0
  %v3414 = vadd.f32 0.0, %v3413
  %3415 = vdwg.mxu0
  %3416 = vmatprep.subr.mxu0 %v754
  %3417 = vmatpush1.msra.mxu0 %v753
  %3418 = vmatprep.subr.mxu0 %v733
  %3419 = vmatpush1.msra.mxu0 %v732
  %3420 = vmatprep.subr.mxu0 %v712
  %3421 = vmatpush1.msra.mxu0 %v711
  %3422 = vmatprep.subr.mxu0 %v691
  %3423 = vmatpush1.msra.mxu0 %v690
  %3424 = vmatprep.subr.mxu0 %v670
  %3425 = vmatpush1.msra.mxu0 %v669
  %3426 = vmatprep.subr.mxu0 %v649
  %3427 = vmatpush1.msra.mxu0 %v648
  %3428 = vmatprep.subr.mxu0 %v628
  %3429 = vmatpush1.msra.mxu0 %v627
  %3430 = vmatprep.subr.mxu0 %v607
  %3431 = vmatpush1.msra.mxu0 %v606
  %3432 = vmatprep.subr.mxu0 %v586
  %3433 = vmatpush1.msra.mxu0 %v585
  %3434 = vmatprep.subr.mxu0 %v565
  %3435 = vmatpush1.msra.mxu0 %v564
  %3436 = vmatprep.subr.mxu0 %v544
  %3437 = vmatpush1.msra.mxu0 %v543
  %3438 = vmatprep.subr.mxu0 %v523
  %3439 = vmatpush1.msra.mxu0 %v522
  %3440 = vmatprep.subr.mxu0 %v502
  %3441 = vmatpush1.msra.mxu0 %v501
  %3442 = vmatprep.subr.mxu0 %v481
  %3443 = vmatpush1.msra.mxu0 %v480
  %3444 = vmatprep.subr.mxu0 %v460
  %3445 = vmatpush1.msra.mxu0 %v459
  %3446 = vmatprep.subr.mxu0 %v439
  %3447 = vmatpush1.msra.mxu0 %v438
  %3448 = vmatprep.subr.mxu0 %v1090
  %3449 = vmatpush2.msra.mxu0 %v1089
  %3450 = vmatprep.subr.mxu0 %v1069
  %3451 = vmatpush2.msra.mxu0 %v1068
  %3452 = vmatprep.subr.mxu0 %v1048
  %3453 = vmatpush2.msra.mxu0 %v1047
  %3454 = vmatprep.subr.mxu0 %v1027
  %3455 = vmatpush2.msra.mxu0 %v1026
  %3456 = vmatprep.subr.mxu0 %v1006
  %3457 = vmatpush2.msra.mxu0 %v1005
  %3458 = vmatprep.subr.mxu0 %v985
  %3459 = vmatpush2.msra.mxu0 %v984
  %3460 = vmatprep.subr.mxu0 %v964
  %3461 = vmatpush2.msra.mxu0 %v963
  %3462 = vmatprep.subr.mxu0 %v943
  %3463 = vmatpush2.msra.mxu0 %v942
  %3464 = vmatprep.subr.mxu0 %v922
  %3465 = vmatpush2.msra.mxu0 %v921
  %3466 = vmatprep.subr.mxu0 %v901
  %3467 = vmatpush2.msra.mxu0 %v900
  %3468 = vmatprep.subr.mxu0 %v880
  %3469 = vmatpush2.msra.mxu0 %v879
  %3470 = vmatprep.subr.mxu0 %v859
  %3471 = vmatpush2.msra.mxu0 %v858
  %3472 = vmatprep.subr.mxu0 %v838
  %3473 = vmatpush2.msra.mxu0 %v837
  %3474 = vmatprep.subr.mxu0 %v817
  %3475 = vmatpush2.msra.mxu0 %v816
  %3476 = vmatprep.subr.mxu0 %v796
  %3477 = vmatpush2.msra.mxu0 %v795
  %3478 = vmatprep.subr.mxu0 %v775
  %3479 = vmatpush2.msra.mxu0 %v774
  %3480 = vmatprep.mubr.f32.mxu0 %v3344
  %3481 = vmatmul.mubr.f32.gmra.mxu0 %v3343
  %v3482 = vpop.f32.mrf.mxu0
  %v3483 = vadd.f32 0.0, %v3482
  %v3484 = vpop.f32.mrf.mxu0
  %v3485 = vadd.f32 0.0, %v3484
  %3486 = vdwg.mxu0
  %3487 = vmatprep.subr.mxu0 %v756
  %3488 = vmatpush1.msra.mxu0 %v755
  %3489 = vmatprep.subr.mxu0 %v735
  %3490 = vmatpush1.msra.mxu0 %v734
  %3491 = vmatprep.subr.mxu0 %v714
  %3492 = vmatpush1.msra.mxu0 %v713
  %3493 = vmatprep.subr.mxu0 %v693
  %3494 = vmatpush1.msra.mxu0 %v692
  %3495 = vmatprep.subr.mxu0 %v672
  %3496 = vmatpush1.msra.mxu0 %v671
  %3497 = vmatprep.subr.mxu0 %v651
  %3498 = vmatpush1.msra.mxu0 %v650
  %3499 = vmatprep.subr.mxu0 %v630
  %3500 = vmatpush1.msra.mxu0 %v629
  %3501 = vmatprep.subr.mxu0 %v609
  %3502 = vmatpush1.msra.mxu0 %v608
  %3503 = vmatprep.subr.mxu0 %v588
  %3504 = vmatpush1.msra.mxu0 %v587
  %3505 = vmatprep.subr.mxu0 %v567
  %3506 = vmatpush1.msra.mxu0 %v566
  %3507 = vmatprep.subr.mxu0 %v546
  %3508 = vmatpush1.msra.mxu0 %v545
  %3509 = vmatprep.subr.mxu0 %v525
  %3510 = vmatpush1.msra.mxu0 %v524
  %3511 = vmatprep.subr.mxu0 %v504
  %3512 = vmatpush1.msra.mxu0 %v503
  %3513 = vmatprep.subr.mxu0 %v483
  %3514 = vmatpush1.msra.mxu0 %v482
  %3515 = vmatprep.subr.mxu0 %v462
  %3516 = vmatpush1.msra.mxu0 %v461
  %3517 = vmatprep.subr.mxu0 %v441
  %3518 = vmatpush1.msra.mxu0 %v440
  %3519 = vmatprep.subr.mxu0 %v1092
  %3520 = vmatpush2.msra.mxu0 %v1091
  %3521 = vmatprep.subr.mxu0 %v1071
  %3522 = vmatpush2.msra.mxu0 %v1070
  %3523 = vmatprep.subr.mxu0 %v1050
  %3524 = vmatpush2.msra.mxu0 %v1049
  %3525 = vmatprep.subr.mxu0 %v1029
  %3526 = vmatpush2.msra.mxu0 %v1028
  %3527 = vmatprep.subr.mxu0 %v1008
  %3528 = vmatpush2.msra.mxu0 %v1007
  %3529 = vmatprep.subr.mxu0 %v987
  %3530 = vmatpush2.msra.mxu0 %v986
  %3531 = vmatprep.subr.mxu0 %v966
  %3532 = vmatpush2.msra.mxu0 %v965
  %3533 = vmatprep.subr.mxu0 %v945
  %3534 = vmatpush2.msra.mxu0 %v944
  %3535 = vmatprep.subr.mxu0 %v924
  %3536 = vmatpush2.msra.mxu0 %v923
  %3537 = vmatprep.subr.mxu0 %v903
  %3538 = vmatpush2.msra.mxu0 %v902
  %3539 = vmatprep.subr.mxu0 %v882
  %3540 = vmatpush2.msra.mxu0 %v881
  %3541 = vmatprep.subr.mxu0 %v861
  %3542 = vmatpush2.msra.mxu0 %v860
  %3543 = vmatprep.subr.mxu0 %v840
  %3544 = vmatpush2.msra.mxu0 %v839
  %3545 = vmatprep.subr.mxu0 %v819
  %3546 = vmatpush2.msra.mxu0 %v818
  %3547 = vmatprep.subr.mxu0 %v798
  %3548 = vmatpush2.msra.mxu0 %v797
  %3549 = vmatprep.subr.mxu0 %v777
  %3550 = vmatpush2.msra.mxu0 %v776
  %3551 = vmatprep.mubr.f32.mxu0 %v3344
  %3552 = vmatmul.mubr.f32.gmra.mxu0 %v3343
  %v3553 = vpop.f32.mrf.mxu0
  %v3554 = vadd.f32 0.0, %v3553
  %v3555 = vpop.f32.mrf.mxu0
  %v3556 = vadd.f32 0.0, %v3555
  %3557 = vdwg.mxu0
  %v3558 = vlaneseq
  %v3559 = vshrl.u32 %v3558, 7
  %v3560 = vsub.s32 6, %v3559
  %v3561 = vrot.slane %v40, %v3560
  %v3562 = vlaneseq
  %v3563 = vshrl.u32 %v3562, 7
  %v3564 = vsub.s32 6, %v3563
  %v3565 = vrot.slane %v41, %v3564
  %v3566 = vadd.f32 %v3412, %v3561
  %v3567 = vadd.f32 %v3414, %v3565
  %v3568 = vlaneseq
  %v3569 = vshrl.u32 %v3568, 7
  %v3570 = vsub.s32 7, %v3569
  %v3571 = vrot.slane %v40, %v3570
  %v3572 = vlaneseq
  %v3573 = vshrl.u32 %v3572, 7
  %v3574 = vsub.s32 7, %v3573
  %v3575 = vrot.slane %v41, %v3574
  %v3576 = vadd.f32 %v3483, %v3571
  %v3577 = vadd.f32 %v3485, %v3575
  %v3578 = vlaneseq
  %v3579 = vshrl.u32 %v3578, 7
  %v3580 = vsub.s32 0, %v3579
  %v3581 = vrot.slane %v42, %v3580
  %v3582 = vlaneseq
  %v3583 = vshrl.u32 %v3582, 7
  %v3584 = vsub.s32 0, %v3583
  %v3585 = vrot.slane %v43, %v3584
  %v3586 = vadd.f32 %v3554, %v3581
  %v3587 = vadd.f32 %v3556, %v3585
  %3589 = vrot.lane.b32.xlu0 %v3566, 96
  %v3590 = vpop.permute.xlu0 %3589
  %3591 = vrot.lane.b32.xlu0 %v3566, 64
  %v3592 = vpop.permute.xlu0 %3591
  %3593 = vrot.lane.b32.xlu0 %v3566, 32
  %v3594 = vpop.permute.xlu0 %3593
  %3596 = vrot.lane.b32.xlu0 %v3567, 96
  %v3597 = vpop.permute.xlu0 %3596
  %3598 = vrot.lane.b32.xlu0 %v3567, 64
  %v3599 = vpop.permute.xlu0 %3598
  %3600 = vrot.lane.b32.xlu0 %v3567, 32
  %v3601 = vpop.permute.xlu0 %3600
  %3603 = vrot.lane.b32.xlu0 %v3576, 96
  %v3604 = vpop.permute.xlu0 %3603
  %3605 = vrot.lane.b32.xlu0 %v3576, 64
  %v3606 = vpop.permute.xlu0 %3605
  %3607 = vrot.lane.b32.xlu0 %v3576, 32
  %v3608 = vpop.permute.xlu0 %3607
  %3610 = vrot.lane.b32.xlu0 %v3577, 96
  %v3611 = vpop.permute.xlu0 %3610
  %3612 = vrot.lane.b32.xlu0 %v3577, 64
  %v3613 = vpop.permute.xlu0 %3612
  %3614 = vrot.lane.b32.xlu0 %v3577, 32
  %v3615 = vpop.permute.xlu0 %3614
  %3617 = vrot.lane.b32.xlu0 %v3586, 96
  %v3618 = vpop.permute.xlu0 %3617
  %3620 = vrot.lane.b32.xlu0 %v3586, 64
  %v3621 = vpop.permute.xlu0 %3620
  %3623 = vrot.lane.b32.xlu0 %v3586, 32
  %v3624 = vpop.permute.xlu0 %3623
  %3627 = vrot.lane.b32.xlu0 %v3587, 96
  %v3628 = vpop.permute.xlu0 %3627
  %3630 = vrot.lane.b32.xlu0 %v3587, 64
  %v3631 = vpop.permute.xlu0 %3630
  %3633 = vrot.lane.b32.xlu0 %v3587, 32
  %v3634 = vpop.permute.xlu0 %3633
  %v3636 = vsel %vm1568, %v3566, 0
  %v3638 = vsel %vm1568, %v3590, 0
  %v3640 = vsel %vm1568, %v3592, 0
  %v3642 = vsel %vm1568, %v3594, 0
  %v3644 = vsel %vm1568, %v3567, 0
  %v3646 = vsel %vm1568, %v3597, 0
  %v3648 = vsel %vm1568, %v3599, 0
  %v3650 = vsel %vm1568, %v3601, 0
  %v3652 = vsel %vm1568, %v3576, 0
  %v3654 = vsel %vm1568, %v3604, 0
  %v3656 = vsel %vm1568, %v3606, 0
  %v3658 = vsel %vm1568, %v3608, 0
  %v3660 = vsel %vm1568, %v3577, 0
  %v3662 = vsel %vm1568, %v3611, 0
  %v3664 = vsel %vm1568, %v3613, 0
  %v3666 = vsel %vm1568, %v3615, 0
  %3668 = vmatprep.subr.mxu0 0.0
  %3669 = vmatpush1.xpose.msra.mxu0 0.0
  %3670 = vmatprep.subr.mxu0 0.0
  %3671 = vmatpush1.xpose.msra.mxu0 0.0
  %3672 = vmatprep.subr.mxu0 0.0
  %3673 = vmatpush1.xpose.msra.mxu0 0.0
  %3674 = vmatprep.subr.mxu0 0.0
  %3675 = vmatpush1.xpose.msra.mxu0 0.0
  %3676 = vmatprep.subr.mxu0 0.0
  %3677 = vmatpush1.xpose.msra.mxu0 0.0
  %3678 = vmatprep.subr.mxu0 0.0
  %3679 = vmatpush1.xpose.msra.mxu0 0.0
  %3680 = vmatprep.subr.mxu0 0.0
  %3681 = vmatpush1.xpose.msra.mxu0 0.0
  %3682 = vmatprep.subr.mxu0 0.0
  %3683 = vmatpush1.xpose.msra.mxu0 0.0
  %3684 = vmatprep.subr.mxu0 0.0
  %3685 = vmatpush1.xpose.msra.mxu0 %v3666
  %3686 = vmatprep.subr.mxu0 0.0
  %3687 = vmatpush1.xpose.msra.mxu0 %v3664
  %3688 = vmatprep.subr.mxu0 0.0
  %3689 = vmatpush1.xpose.msra.mxu0 %v3662
  %3690 = vmatprep.subr.mxu0 0.0
  %3691 = vmatpush1.xpose.msra.mxu0 %v3660
  %3692 = vmatprep.subr.mxu0 0.0
  %3693 = vmatpush1.xpose.msra.mxu0 %v3658
  %3694 = vmatprep.subr.mxu0 0.0
  %3695 = vmatpush1.xpose.msra.mxu0 %v3656
  %3696 = vmatprep.subr.mxu0 0.0
  %3697 = vmatpush1.xpose.msra.mxu0 %v3654
  %3698 = vmatprep.subr.mxu0 0.0
  %3699 = vmatpush1.xpose.msra.mxu0 %v3652
  %3700 = vmatprep.subr.mxu0 0.0
  %3701 = vmatpush2.xpose.msra.mxu0 0.0
  %3702 = vmatprep.subr.mxu0 0.0
  %3703 = vmatpush2.xpose.msra.mxu0 0.0
  %3704 = vmatprep.subr.mxu0 0.0
  %3705 = vmatpush2.xpose.msra.mxu0 0.0
  %3706 = vmatprep.subr.mxu0 0.0
  %3707 = vmatpush2.xpose.msra.mxu0 0.0
  %3708 = vmatprep.subr.mxu0 0.0
  %3709 = vmatpush2.xpose.msra.mxu0 0.0
  %3710 = vmatprep.subr.mxu0 0.0
  %3711 = vmatpush2.xpose.msra.mxu0 0.0
  %3712 = vmatprep.subr.mxu0 0.0
  %3713 = vmatpush2.xpose.msra.mxu0 0.0
  %3714 = vmatprep.subr.mxu0 0.0
  %3715 = vmatpush2.xpose.msra.mxu0 0.0
  %3716 = vmatprep.subr.mxu0 0.0
  %3717 = vmatpush2.xpose.msra.mxu0 0.0
  %3718 = vmatprep.subr.mxu0 0.0
  %3719 = vmatpush2.xpose.msra.mxu0 0.0
  %3720 = vmatprep.subr.mxu0 0.0
  %3721 = vmatpush2.xpose.msra.mxu0 0.0
  %3722 = vmatprep.subr.mxu0 0.0
  %3723 = vmatpush2.xpose.msra.mxu0 0.0
  %3724 = vmatprep.subr.mxu0 0.0
  %3725 = vmatpush2.xpose.msra.mxu0 0.0
  %3726 = vmatprep.subr.mxu0 0.0
  %3727 = vmatpush2.xpose.msra.mxu0 0.0
  %3728 = vmatprep.subr.mxu0 0.0
  %3729 = vmatpush2.xpose.msra.mxu0 0.0
  %3730 = vmatprep.subr.mxu0 0.0
  %3731 = vmatpush2.xpose.msra.mxu0 0.0
  %3732 = vmatprep.mubr.f32.mxu0 0.0
  %3733 = vmatmul.mubr.f32.gmra.mxu0 %v3636
  %v3734 = vpop.f32.mrf.mxu0
  %v3735 = vadd.f32 %v27, %v3734
  %v3736 = vpop.f32.mrf.mxu0
  %3737 = vmatprep.mubr.f32.mxu0 0.0
  %3738 = vmatmul.mubr.f32.gmra.mxu0 %v3638
  %v3739 = vpop.f32.mrf.mxu0
  %v3740 = vadd.f32 %v28, %v3739
  %v3741 = vpop.f32.mrf.mxu0
  %3742 = vmatprep.mubr.f32.mxu0 0.0
  %3743 = vmatmul.mubr.f32.gmra.mxu0 %v3640
  %v3744 = vpop.f32.mrf.mxu0
  %v3745 = vadd.f32 %v29, %v3744
  %v3746 = vpop.f32.mrf.mxu0
  %3747 = vmatprep.mubr.f32.mxu0 0.0
  %3748 = vmatmul.mubr.f32.gmra.mxu0 %v3642
  %v3749 = vpop.f32.mrf.mxu0
  %v3750 = vadd.f32 %v30, %v3749
  %v3751 = vpop.f32.mrf.mxu0
  %3752 = vmatprep.mubr.f32.mxu0 0.0
  %3753 = vmatmul.mubr.f32.gmra.mxu0 %v3644
  %v3754 = vpop.f32.mrf.mxu0
  %v3755 = vadd.f32 %v31, %v3754
  %v3756 = vpop.f32.mrf.mxu0
  %3757 = vmatprep.mubr.f32.mxu0 0.0
  %3758 = vmatmul.mubr.f32.gmra.mxu0 %v3646
  %v3759 = vpop.f32.mrf.mxu0
  %v3760 = vadd.f32 %v32, %v3759
  %v3761 = vpop.f32.mrf.mxu0
  %3762 = vmatprep.mubr.f32.mxu0 0.0
  %3763 = vmatmul.mubr.f32.gmra.mxu0 %v3648
  %v3764 = vpop.f32.mrf.mxu0
  %v3765 = vadd.f32 %v33, %v3764
  %v3766 = vpop.f32.mrf.mxu0
  %3767 = vmatprep.mubr.f32.mxu0 0.0
  %3768 = vmatmul.mubr.f32.gmra.mxu0 %v3650
  %v3769 = vpop.f32.mrf.mxu0
  %v3770 = vadd.f32 %v34, %v3769
  %v3771 = vpop.f32.mrf.mxu0
  %3772 = vdwg.mxu0
  %v3773 = vsel %vm1706, %v3735, -inf
  %3774 = vmax.xlane.f32.xlu0 %v3773
  %v3775 = vpop.xlane.xlu0 %3774
  %v3776 = vsel %vm1706, %v3740, -inf
  %3777 = vmax.xlane.f32.xlu0 %v3776
  %v3778 = vpop.xlane.xlu0 %3777
  %v3779 = vsel %vm1706, %v3745, -inf
  %3780 = vmax.xlane.f32.xlu0 %v3779
  %v3781 = vpop.xlane.xlu0 %3780
  %v3782 = vsel %vm1706, %v3750, -inf
  %3783 = vmax.xlane.f32.xlu0 %v3782
  %v3784 = vpop.xlane.xlu0 %3783
  %v3785 = vsel %vm1706, %v3755, -inf
  %3786 = vmax.xlane.f32.xlu0 %v3785
  %v3787 = vpop.xlane.xlu0 %3786
  %v3788 = vsel %vm1706, %v3760, -inf
  %3789 = vmax.xlane.f32.xlu0 %v3788
  %v3790 = vpop.xlane.xlu0 %3789
  %v3791 = vsel %vm1706, %v3765, -inf
  %3792 = vmax.xlane.f32.xlu0 %v3791
  %v3793 = vpop.xlane.xlu0 %3792
  %v3794 = vsel %vm1706, %v3770, -inf
  %3795 = vmax.xlane.f32.xlu0 %v3794
  %v3796 = vpop.xlane.xlu0 %3795
  %v3797 = vsub.f32 %v3735, %v3775
  %v3798 = vsub.f32 %v3740, %v3778
  %v3799 = vsub.f32 %v3745, %v3781
  %v3800 = vsub.f32 %v3750, %v3784
  %v3801 = vsub.f32 %v3755, %v3787
  %v3802 = vsub.f32 %v3760, %v3790
  %v3803 = vsub.f32 %v3765, %v3793
  %v3804 = vsub.f32 %v3770, %v3796
  %v3805 = vmul.f32 %v3797, 1.442695
  %v3806 = vpow.pop %v3805
  %v3807 = vmul.f32 %v3798, 1.442695
  %v3808 = vpow.pop %v3807
  %v3809 = vmul.f32 %v3799, 1.442695
  %v3810 = vpow.pop %v3809
  %v3811 = vmul.f32 %v3800, 1.442695
  %v3812 = vpow.pop %v3811
  %v3813 = vmul.f32 %v3801, 1.442695
  %v3814 = vpow.pop %v3813
  %v3815 = vmul.f32 %v3802, 1.442695
  %v3816 = vpow.pop %v3815
  %v3817 = vmul.f32 %v3803, 1.442695
  %v3818 = vpow.pop %v3817
  %v3819 = vmul.f32 %v3804, 1.442695
  %v3820 = vpow.pop %v3819
  %v3821 = vsel %vm1706, %v3806, 0.0
  %3822 = vadd.xlane.f32.xlu0 %v3821
  %v3823 = vpop.xlane.xlu0 %3822
  %v3824 = vsel %vm1706, %v3808, 0.0
  %3825 = vadd.xlane.f32.xlu0 %v3824
  %v3826 = vpop.xlane.xlu0 %3825
  %v3827 = vsel %vm1706, %v3810, 0.0
  %3828 = vadd.xlane.f32.xlu0 %v3827
  %v3829 = vpop.xlane.xlu0 %3828
  %v3830 = vsel %vm1706, %v3812, 0.0
  %3831 = vadd.xlane.f32.xlu0 %v3830
  %v3832 = vpop.xlane.xlu0 %3831
  %v3833 = vsel %vm1706, %v3814, 0.0
  %3834 = vadd.xlane.f32.xlu0 %v3833
  %v3835 = vpop.xlane.xlu0 %3834
  %v3836 = vsel %vm1706, %v3816, 0.0
  %3837 = vadd.xlane.f32.xlu0 %v3836
  %v3838 = vpop.xlane.xlu0 %3837
  %v3839 = vsel %vm1706, %v3818, 0.0
  %3840 = vadd.xlane.f32.xlu0 %v3839
  %v3841 = vpop.xlane.xlu0 %3840
  %v3842 = vsel %vm1706, %v3820, 0.0
  %3843 = vadd.xlane.f32.xlu0 %v3842
  %v3844 = vpop.xlane.xlu0 %3843
  %v3845 = vrcp.pop %v3823
  %v3846 = vrcp.pop %v3826
  %v3847 = vrcp.pop %v3829
  %v3848 = vrcp.pop %v3832
  %v3849 = vrcp.pop %v3835
  %v3850 = vrcp.pop %v3838
  %v3851 = vrcp.pop %v3841
  %v3852 = vrcp.pop %v3844
  %v3853 = vmul.f32 %v3806, %v3845
  %v3854 = vmul.f32 %v3808, %v3846
  %v3855 = vmul.f32 %v3810, %v3847
  %v3856 = vmul.f32 %v3812, %v3848
  %v3857 = vmul.f32 %v3814, %v3849
  %v3858 = vmul.f32 %v3816, %v3850
  %v3859 = vmul.f32 %v3818, %v3851
  %v3860 = vmul.f32 %v3820, %v3852
  %v3862 = vsel %vm1706, %v3853, 0
  %v3865 = vsel %vm1706, %v3854, 0
  %v3868 = vsel %vm1706, %v3855, 0
  %v3871 = vsel %vm1706, %v3856, 0
  %v3874 = vsel %vm1706, %v3857, 0
  %v3877 = vsel %vm1706, %v3858, 0
  %v3880 = vsel %vm1706, %v3859, 0
  %v3883 = vsel %vm1706, %v3860, 0
  %3885 = vmatprep.subr.mxu0 0.0
  %3886 = vmatpush1.msra.mxu0 0.0
  %3887 = vmatprep.subr.mxu0 0.0
  %3888 = vmatpush1.msra.mxu0 0.0
  %3889 = vmatprep.subr.mxu0 0.0
  %3890 = vmatpush1.msra.mxu0 0.0
  %3891 = vmatprep.subr.mxu0 0.0
  %3892 = vmatpush1.msra.mxu0 0.0
  %3893 = vmatprep.subr.mxu0 0.0
  %3894 = vmatpush1.msra.mxu0 0.0
  %3895 = vmatprep.subr.mxu0 0.0
  %3896 = vmatpush1.msra.mxu0 0.0
  %3897 = vmatprep.subr.mxu0 0.0
  %3898 = vmatpush1.msra.mxu0 0.0
  %3899 = vmatprep.subr.mxu0 0.0
  %3900 = vmatpush1.msra.mxu0 0.0
  %3901 = vmatprep.subr.mxu0 0.0
  %3902 = vmatpush1.msra.mxu0 %v3634
  %3903 = vmatprep.subr.mxu0 0.0
  %3904 = vmatpush1.msra.mxu0 %v3631
  %3905 = vmatprep.subr.mxu0 0.0
  %3906 = vmatpush1.msra.mxu0 %v3628
  %3907 = vmatprep.subr.mxu0 0.0
  %3908 = vmatpush1.msra.mxu0 %v3587
  %3909 = vmatprep.subr.mxu0 0.0
  %3910 = vmatpush1.msra.mxu0 %v3624
  %3911 = vmatprep.subr.mxu0 0.0
  %3912 = vmatpush1.msra.mxu0 %v3621
  %3913 = vmatprep.subr.mxu0 0.0
  %3914 = vmatpush1.msra.mxu0 %v3618
  %3915 = vmatprep.subr.mxu0 0.0
  %3916 = vmatpush1.msra.mxu0 %v3586
  %3917 = vmatprep.subr.mxu0 0.0
  %3918 = vmatpush2.msra.mxu0 0.0
  %3919 = vmatprep.subr.mxu0 0.0
  %3920 = vmatpush2.msra.mxu0 0.0
  %3921 = vmatprep.subr.mxu0 0.0
  %3922 = vmatpush2.msra.mxu0 0.0
  %3923 = vmatprep.subr.mxu0 0.0
  %3924 = vmatpush2.msra.mxu0 0.0
  %3925 = vmatprep.subr.mxu0 0.0
  %3926 = vmatpush2.msra.mxu0 0.0
  %3927 = vmatprep.subr.mxu0 0.0
  %3928 = vmatpush2.msra.mxu0 0.0
  %3929 = vmatprep.subr.mxu0 0.0
  %3930 = vmatpush2.msra.mxu0 0.0
  %3931 = vmatprep.subr.mxu0 0.0
  %3932 = vmatpush2.msra.mxu0 0.0
  %3933 = vmatprep.subr.mxu0 0.0
  %3934 = vmatpush2.msra.mxu0 0.0
  %3935 = vmatprep.subr.mxu0 0.0
  %3936 = vmatpush2.msra.mxu0 0.0
  %3937 = vmatprep.subr.mxu0 0.0
  %3938 = vmatpush2.msra.mxu0 0.0
  %3939 = vmatprep.subr.mxu0 0.0
  %3940 = vmatpush2.msra.mxu0 0.0
  %3941 = vmatprep.subr.mxu0 0.0
  %3942 = vmatpush2.msra.mxu0 0.0
  %3943 = vmatprep.subr.mxu0 0.0
  %3944 = vmatpush2.msra.mxu0 0.0
  %3945 = vmatprep.subr.mxu0 0.0
  %3946 = vmatpush2.msra.mxu0 0.0
  %3947 = vmatprep.subr.mxu0 0.0
  %3948 = vmatpush2.msra.mxu0 0.0
  %3949 = vmatprep.mubr.f32.mxu0 0.0
  %3950 = vmatmul.mubr.f32.gmra.mxu0 %v3862
  %v3951 = vpop.f32.mrf.mxu0
  %v3952 = vadd.f32 0.0, %v3951
  %v3953 = vpop.f32.mrf.mxu0
  %3954 = vmatprep.mubr.f32.mxu0 0.0
  %3955 = vmatmul.mubr.f32.gmra.mxu0 %v3865
  %v3956 = vpop.f32.mrf.mxu0
  %v3957 = vadd.f32 0.0, %v3956
  %v3958 = vpop.f32.mrf.mxu0
  %3959 = vmatprep.mubr.f32.mxu0 0.0
  %3960 = vmatmul.mubr.f32.gmra.mxu0 %v3868
  %v3961 = vpop.f32.mrf.mxu0
  %v3962 = vadd.f32 0.0, %v3961
  %v3963 = vpop.f32.mrf.mxu0
  %3964 = vmatprep.mubr.f32.mxu0 0.0
  %3965 = vmatmul.mubr.f32.gmra.mxu0 %v3871
  %v3966 = vpop.f32.mrf.mxu0
  %v3967 = vadd.f32 0.0, %v3966
  %v3968 = vpop.f32.mrf.mxu0
  %3969 = vmatprep.mubr.f32.mxu0 0.0
  %3970 = vmatmul.mubr.f32.gmra.mxu0 %v3874
  %v3971 = vpop.f32.mrf.mxu0
  %v3972 = vadd.f32 0.0, %v3971
  %v3973 = vpop.f32.mrf.mxu0
  %3974 = vmatprep.mubr.f32.mxu0 0.0
  %3975 = vmatmul.mubr.f32.gmra.mxu0 %v3877
  %v3976 = vpop.f32.mrf.mxu0
  %v3977 = vadd.f32 0.0, %v3976
  %v3978 = vpop.f32.mrf.mxu0
  %3979 = vmatprep.mubr.f32.mxu0 0.0
  %3980 = vmatmul.mubr.f32.gmra.mxu0 %v3880
  %v3981 = vpop.f32.mrf.mxu0
  %v3982 = vadd.f32 0.0, %v3981
  %v3983 = vpop.f32.mrf.mxu0
  %3984 = vmatprep.mubr.f32.mxu0 0.0
  %3985 = vmatmul.mubr.f32.gmra.mxu0 %v3883
  %v3986 = vpop.f32.mrf.mxu0
  %v3987 = vadd.f32 0.0, %v3986
  %v3988 = vpop.f32.mrf.mxu0
  %3989 = vdwg.mxu0
  %3991 = vrot.lane.b32.xlu0 %v3957, 32
  %v3992 = vpop.permute.xlu0 %3991
  %3995 = vrot.lane.b32.xlu0 %v3962, 64
  %v3996 = vpop.permute.xlu0 %3995
  %3999 = vrot.lane.b32.xlu0 %v3967, 96
  %v4000 = vpop.permute.xlu0 %3999
  %4003 = vrot.lane.b32.xlu0 %v3977, 32
  %v4004 = vpop.permute.xlu0 %4003
  %4007 = vrot.lane.b32.xlu0 %v3982, 64
  %v4008 = vpop.permute.xlu0 %4007
  %4011 = vrot.lane.b32.xlu0 %v3987, 96
  %v4012 = vpop.permute.xlu0 %4011
  %v4014 = vsel %vm1568, %v3952, %v3992
  %v4015 = vsel %vm1706, %v4014, %v3996
  %v4016 = vsel %vm1950, %v4015, %v4000
  %v4017 = vsel %vm1568, %v3972, %v4004
  %v4018 = vsel %vm1706, %v4017, %v4008
  %v4019 = vsel %vm1950, %v4018, %v4012
  %v4020 = vmul.f32 %v4016, %v1958
  %v4021 = vmul.f32 %v4019, %v1958
  %4022 = vmatprep.subr.mxu0 %v758
  %4023 = vmatpush1.msra.mxu0 %v757
  %4024 = vmatprep.subr.mxu0 %v737
  %4025 = vmatpush1.msra.mxu0 %v736
  %4026 = vmatprep.subr.mxu0 %v716
  %4027 = vmatpush1.msra.mxu0 %v715
  %4028 = vmatprep.subr.mxu0 %v695
  %4029 = vmatpush1.msra.mxu0 %v694
  %4030 = vmatprep.subr.mxu0 %v674
  %4031 = vmatpush1.msra.mxu0 %v673
  %4032 = vmatprep.subr.mxu0 %v653
  %4033 = vmatpush1.msra.mxu0 %v652
  %4034 = vmatprep.subr.mxu0 %v632
  %4035 = vmatpush1.msra.mxu0 %v631
  %4036 = vmatprep.subr.mxu0 %v611
  %4037 = vmatpush1.msra.mxu0 %v610
  %4038 = vmatprep.subr.mxu0 %v590
  %4039 = vmatpush1.msra.mxu0 %v589
  %4040 = vmatprep.subr.mxu0 %v569
  %4041 = vmatpush1.msra.mxu0 %v568
  %4042 = vmatprep.subr.mxu0 %v548
  %4043 = vmatpush1.msra.mxu0 %v547
  %4044 = vmatprep.subr.mxu0 %v527
  %4045 = vmatpush1.msra.mxu0 %v526
  %4046 = vmatprep.subr.mxu0 %v506
  %4047 = vmatpush1.msra.mxu0 %v505
  %4048 = vmatprep.subr.mxu0 %v485
  %4049 = vmatpush1.msra.mxu0 %v484
  %4050 = vmatprep.subr.mxu0 %v464
  %4051 = vmatpush1.msra.mxu0 %v463
  %4052 = vmatprep.subr.mxu0 %v443
  %4053 = vmatpush1.msra.mxu0 %v442
  %4054 = vmatprep.subr.mxu0 %v1094
  %4055 = vmatpush2.msra.mxu0 %v1093
  %4056 = vmatprep.subr.mxu0 %v1073
  %4057 = vmatpush2.msra.mxu0 %v1072
  %4058 = vmatprep.subr.mxu0 %v1052
  %4059 = vmatpush2.msra.mxu0 %v1051
  %4060 = vmatprep.subr.mxu0 %v1031
  %4061 = vmatpush2.msra.mxu0 %v1030
  %4062 = vmatprep.subr.mxu0 %v1010
  %4063 = vmatpush2.msra.mxu0 %v1009
  %4064 = vmatprep.subr.mxu0 %v989
  %4065 = vmatpush2.msra.mxu0 %v988
  %4066 = vmatprep.subr.mxu0 %v968
  %4067 = vmatpush2.msra.mxu0 %v967
  %4068 = vmatprep.subr.mxu0 %v947
  %4069 = vmatpush2.msra.mxu0 %v946
  %4070 = vmatprep.subr.mxu0 %v926
  %4071 = vmatpush2.msra.mxu0 %v925
  %4072 = vmatprep.subr.mxu0 %v905
  %4073 = vmatpush2.msra.mxu0 %v904
  %4074 = vmatprep.subr.mxu0 %v884
  %4075 = vmatpush2.msra.mxu0 %v883
  %4076 = vmatprep.subr.mxu0 %v863
  %4077 = vmatpush2.msra.mxu0 %v862
  %4078 = vmatprep.subr.mxu0 %v842
  %4079 = vmatpush2.msra.mxu0 %v841
  %4080 = vmatprep.subr.mxu0 %v821
  %4081 = vmatpush2.msra.mxu0 %v820
  %4082 = vmatprep.subr.mxu0 %v800
  %4083 = vmatpush2.msra.mxu0 %v799
  %4084 = vmatprep.subr.mxu0 %v779
  %4085 = vmatpush2.msra.mxu0 %v778
  %4086 = vmatprep.mubr.f32.mxu0 %v3344
  %4087 = vmatmul.mubr.f32.gmra.mxu0 %v3343
  %v4088 = vpop.f32.mrf.mxu0
  %v4089 = vadd.f32 0.0, %v4088
  %v4090 = vpop.f32.mrf.mxu0
  %v4091 = vadd.f32 0.0, %v4090
  %4092 = vdwg.mxu0
  %v4093 = vadd.f32 %v4020, %v4089
  %v4094 = vadd.f32 %v4021, %v4091
  %v4095 = vlaneseq
  %v4096 = vshrl.u32 %v4095, 7
  %v4097 = vsub.s32 1, %v4096
  %v4098 = vrot.slane %v42, %v4097
  %v4099 = vlaneseq
  %v4100 = vshrl.u32 %v4099, 7
  %v4101 = vsub.s32 1, %v4100
  %v4102 = vrot.slane %v43, %v4101
  %v4103 = vadd.f32 %v4093, %v4098
  %v4104 = vadd.f32 %v4094, %v4102
  %v4105 = vadd.f32 %v4103, %v4104
  %4106 = vadd.xlane.f32.xlu0 %v4105
  %v4107 = vpop.xlane.xlu0 %4106
  %v4108 = vmul.f32 %v4107, %v2050
  %v4109 = vsub.f32 %v4103, %v4108
  %v4110 = vsub.f32 %v4104, %v4108
  %v4111 = vmul.f32 %v4109, %v4109
  %v4112 = vmul.f32 %v4110, %v4110
  %v4113 = vadd.f32 %v4111, %v4112
  %4114 = vadd.xlane.f32.xlu0 %v4113
  %v4115 = vpop.xlane.xlu0 %4114
  %v4116 = vmul.f32 %v4115, %v2050
  %v4117 = vadd.f32 %v4116, 1e-05
  %v4118 = vrsqrt.pop %v4117
  %v4119 = vmul.f32 %v4109, %v4118
  %v4120 = vmul.f32 %v4110, %v4118
  %v4121 = vlaneseq
  %v4122 = vshrl.u32 %v4121, 7
  %v4123 = vsub.s32 2, %v4122
  %v4124 = vrot.slane %v42, %v4123
  %v4125 = vlaneseq
  %v4126 = vshrl.u32 %v4125, 7
  %v4127 = vsub.s32 2, %v4126
  %v4128 = vrot.slane %v43, %v4127
  %v4129 = vmul.f32 %v4119, %v4124
  %v4130 = vmul.f32 %v4120, %v4128
  %v4131 = vlaneseq
  %v4132 = vshrl.u32 %v4131, 7
  %v4133 = vsub.s32 3, %v4132
  %v4134 = vrot.slane %v42, %v4133
  %v4135 = vlaneseq
  %v4136 = vshrl.u32 %v4135, 7
  %v4137 = vsub.s32 3, %v4136
  %v4138 = vrot.slane %v43, %v4137
  %v4139 = vadd.f32 %v4129, %v4134
  %v4140 = vadd.f32 %v4130, %v4138
  %v4141 = vmax.f32 %v4139, 0.0
  %v4142 = vmax.f32 %v4140, 0.0
  %v4143 = vlaneseq
  %v4144 = vshrl.u32 %v4143, 7
  %v4145 = vsub.s32 4, %v4144
  %v4146 = vrot.slane %v42, %v4145
  %4147 = vmatprep.subr.mxu0 0.0
  %4148 = vmatpush1.msra.mxu0 %v759
  %4149 = vmatprep.subr.mxu0 0.0
  %4150 = vmatpush1.msra.mxu0 %v738
  %4151 = vmatprep.subr.mxu0 0.0
  %4152 = vmatpush1.msra.mxu0 %v717
  %4153 = vmatprep.subr.mxu0 0.0
  %4154 = vmatpush1.msra.mxu0 %v696
  %4155 = vmatprep.subr.mxu0 0.0
  %4156 = vmatpush1.msra.mxu0 %v675
  %4157 = vmatprep.subr.mxu0 0.0
  %4158 = vmatpush1.msra.mxu0 %v654
  %4159 = vmatprep.subr.mxu0 0.0
  %4160 = vmatpush1.msra.mxu0 %v633
  %4161 = vmatprep.subr.mxu0 0.0
  %4162 = vmatpush1.msra.mxu0 %v612
  %4163 = vmatprep.subr.mxu0 0.0
  %4164 = vmatpush1.msra.mxu0 %v591
  %4165 = vmatprep.subr.mxu0 0.0
  %4166 = vmatpush1.msra.mxu0 %v570
  %4167 = vmatprep.subr.mxu0 0.0
  %4168 = vmatpush1.msra.mxu0 %v549
  %4169 = vmatprep.subr.mxu0 0.0
  %4170 = vmatpush1.msra.mxu0 %v528
  %4171 = vmatprep.subr.mxu0 0.0
  %4172 = vmatpush1.msra.mxu0 %v507
  %4173 = vmatprep.subr.mxu0 0.0
  %4174 = vmatpush1.msra.mxu0 %v486
  %4175 = vmatprep.subr.mxu0 0.0
  %4176 = vmatpush1.msra.mxu0 %v465
  %4177 = vmatprep.subr.mxu0 0.0
  %4178 = vmatpush1.msra.mxu0 %v444
  %4179 = vmatprep.subr.mxu0 0.0
  %4180 = vmatpush2.msra.mxu0 %v1095
  %4181 = vmatprep.subr.mxu0 0.0
  %4182 = vmatpush2.msra.mxu0 %v1074
  %4183 = vmatprep.subr.mxu0 0.0
  %4184 = vmatpush2.msra.mxu0 %v1053
  %4185 = vmatprep.subr.mxu0 0.0
  %4186 = vmatpush2.msra.mxu0 %v1032
  %4187 = vmatprep.subr.mxu0 0.0
  %4188 = vmatpush2.msra.mxu0 %v1011
  %4189 = vmatprep.subr.mxu0 0.0
  %4190 = vmatpush2.msra.mxu0 %v990
  %4191 = vmatprep.subr.mxu0 0.0
  %4192 = vmatpush2.msra.mxu0 %v969
  %4193 = vmatprep.subr.mxu0 0.0
  %4194 = vmatpush2.msra.mxu0 %v948
  %4195 = vmatprep.subr.mxu0 0.0
  %4196 = vmatpush2.msra.mxu0 %v927
  %4197 = vmatprep.subr.mxu0 0.0
  %4198 = vmatpush2.msra.mxu0 %v906
  %4199 = vmatprep.subr.mxu0 0.0
  %4200 = vmatpush2.msra.mxu0 %v885
  %4201 = vmatprep.subr.mxu0 0.0
  %4202 = vmatpush2.msra.mxu0 %v864
  %4203 = vmatprep.subr.mxu0 0.0
  %4204 = vmatpush2.msra.mxu0 %v843
  %4205 = vmatprep.subr.mxu0 0.0
  %4206 = vmatpush2.msra.mxu0 %v822
  %4207 = vmatprep.subr.mxu0 0.0
  %4208 = vmatpush2.msra.mxu0 %v801
  %4209 = vmatprep.subr.mxu0 0.0
  %4210 = vmatpush2.msra.mxu0 %v780
  %4211 = vmatprep.mubr.f32.mxu0 %v4142
  %4212 = vmatmul.mubr.f32.gmra.mxu0 %v4141
  %v4213 = vpop.f32.mrf.mxu0
  %v4214 = vadd.f32 %v4146, %v4213
  %v4215 = vpop.f32.mrf.mxu0
  %4216 = vdwg.mxu0
  %4217 = vst [vmem:[%s7] sm:$0xff] %v4214
  // Predicated region
  $region30: #{transformer_gnn_forward.1} parent=0 // pred_check
    _
  $region31: #{transformer_gnn_forward.1} parent=0 // pred_check_branch
    %4219 = sbr.rel (0) target = $region33
  $region32: #{transformer_gnn_forward.1} parent=0 // pred_region
    _
  $region33: #{transformer_gnn_forward.1} parent=0 // pred_fallthru
    _
  // Predicated region
  $region34: #{transformer_gnn_forward.1} parent=0 // pred_check
    _
  $region35: #{transformer_gnn_forward.1} parent=0 // pred_check_branch
    %4221 = sbr.rel (0) target = $region37
  $region36: #{transformer_gnn_forward.1} parent=0 // pred_region
    _
  $region37: #{transformer_gnn_forward.1} parent=0 // pred_fallthru
    _

</llo_original>
